<compile_context>
chip_gen: v5e
topology: v5e:2x2
jax: 0.10.0
libtpu: 0.0.40
codegen_flags: <defaults>
</compile_context>

<pallas_src>
import math

import numpy as np
import jax
import jax.numpy as jnp
from jax.experimental import pallas as pl
from jax.experimental.pallas import tpu as pltpu

# ----------------------------- model config (small, consistent with module) --
D_INPUT = [16, 8, 8, 4]          # sum = 36 input feature channels
SEQ_LEN = 80                     # large enough for the fixed [5,5,2] final pools
HID = 32                         # hid_dim
K_CNN = [2, 3, 4]
K_SIZE = 2
D_OUT = 14
DEPTH = 2                        # number of MBlocks
ATTN_DIM = 64
HEADS = 4                        # hard-coded 4 heads in TranCNN.__init__
MLP_RATIO = 2.0                  # hard-coded 2.0 in TranCNN.__init__
BATCH = 2
ESM_LAYERS = 2 + DEPTH           # forward indexes esm_feat[:, 2 + i, ...]
ESM_LEN = 16

C_IN = sum(D_INPUT)                         # 36
DM = int(ATTN_DIM * MLP_RATIO)              # 128
DH = ATTN_DIM // HEADS                      # 16

# merged convs_all geometry: all branches share one zero-padded 4-tap window
PAD_L = max(k // 2 for k in K_CNN)                       # 2
WIN = max(k - k // 2 for k in K_CNN) + PAD_L             # 4
L_CONV = SEQ_LEN                                         # conv output rows actually used
L_POOL = SEQ_LEN // K_SIZE                               # 40 == transformer seq len
assert K_SIZE == 2 and SEQ_LEN % 2 == 0
assert WIN - 1 <= 2 * PAD_L
assert len(K_CNN) == 3                                   # concat + MaxPool1d(3) fusion below
assert all((SEQ_LEN + 2 * (k // 2) - k + 1) // K_SIZE == L_POOL for k in K_CNN)

# final conv/pool stack geometry: (pad, pool_k, L_in, L_conv_out, L_pooled)
FINAL_POOLS = (5, 5, 2)
TAIL_SPECS = []
_l = L_POOL
for _pk in FINAL_POOLS:
    _pad = _pk // 2
    _lout = _l + 2 * _pad - 3 + 1
    TAIL_SPECS.append((_pad, _pk, _l, _lout, _lout // _pk))
    _l = _lout // _pk
assert _l >= 1
TAIL_MAXPAD = max(s[2] + 2 * s[0] for s in TAIL_SPECS)   # 44 rows of padded scratch

_CPARAMS = pltpu.CompilerParams(
    dimension_semantics=("parallel",),      # v7x: shard the batch over both TensorCores
    vmem_limit_bytes=32 * 1024 * 1024,      # documents headroom; footprint is <1 MiB
)


# ----------------------------- in-kernel math helpers ------------------------
_SQRT_HALF = 0.7071067811865476


def _erf_approx(x):
    # Abramowitz & Stegun 7.1.26 rational approximation, |err| <= 1.5e-7.
    a1, a2, a3, a4, a5 = (0.254829592, -0.284496736, 1.421413741,
                          -1.453152027, 1.061405429)
    p = 0.3275911
    sign = jnp.where(x >= 0.0, 1.0, -1.0)
    ax = jnp.abs(x)
    t = 1.0 / (1.0 + p * ax)
    poly = ((((a5 * t + a4) * t + a3) * t + a2) * t + a1) * t
    return sign * (1.0 - poly * jnp.exp(-ax * ax))


def _gelu_exact(x):
    # TODO(synk): exact-erf GELU (nn.GELU default) via a 1.5e-7-accurate erf
    # polynomial so we do not rely on a lax.erf lowering inside Mosaic.
    return 0.5 * x * (1.0 + _erf_approx(x * _SQRT_HALF))


def _layernorm(x, g, b, eps=1e-5):
    mu = jnp.mean(x, axis=-1, keepdims=True)
    var = jnp.mean(jnp.square(x - mu), axis=-1, keepdims=True)
    return (x - mu) * jax.lax.rsqrt(var + eps) * g + b


def _full_spec(shape):
    zeros = (0,) * len(shape)
    return pl.BlockSpec(shape, lambda b, _z=zeros: _z)


# ----------------------------- Pallas kernels --------------------------------
def _front_kernel(xp_ref, wtap_ref, bcv_ref, p2_ref, q3_ref,
                  wemb_ref, bemb_ref, pos_ref, o_ref):
    """Merged convs_all (3 branches, BN folded, ReLU) + MaxPool1d(2) per branch
    + length-concat + MaxPool1d(3) + conv_embed(1x1) + positional add."""
    # merged conv: 4 shifted-window matmuls, (L_CONV, C_IN) @ (C_IN, 3*HID)
    acc = jnp.zeros((L_CONV, 3 * HID), jnp.float32)
    for j in range(WIN):
        acc = acc + jnp.dot(xp_ref[0, j:j + L_CONV, :], wtap_ref[j],
                            preferred_element_type=jnp.float32)
    y = jnp.maximum(acc + bcv_ref[...], 0.0)                      # BN folded + ReLU

    # per-branch MaxPool1d(2) on all 96 channels at once (gather matmuls + max)
    pooled = jnp.dot(p2_ref[0], y, preferred_element_type=jnp.float32)
    pooled = jnp.maximum(
        pooled, jnp.dot(p2_ref[1], y, preferred_element_type=jnp.float32))

    # length-concat of the 3 branches + MaxPool1d(3), as 9 gather matmuls + max
    terms = []
    for r in range(3):
        t = jnp.zeros((L_POOL, HID), jnp.float32)
        for br in range(3):
            t = t + jnp.dot(q3_ref[r, br], pooled[:, br * HID:(br + 1) * HID],
                            preferred_element_type=jnp.float32)
        terms.append(t)
    x2 = jnp.maximum(jnp.maximum(terms[0], terms[1]), terms[2])   # (L_POOL, HID)

    # conv_embed (1x1) + sinusoid positional embedding
    xe = jnp.dot(x2, wemb_ref[...], preferred_element_type=jnp.float32) + bemb_ref[...]
    o_ref[0] = (xe + pos_ref[...]).astype(o_ref.dtype)


def _mblock_kernel(x_ref, ctx_ref, pos_ref, wq_ref, bq_ref, wkv_ref, bkv_ref,
                   wo_ref, bo_ref, g1_ref, be1_ref, w1_ref, bm1_ref,
                   w2_ref, bm2_ref, g2_ref, be2_ref, o_ref):
    """One full MBlock: cross-attention + residual/LN + MLP + residual/LN."""
    scale = 1.0 / math.sqrt(DH)
    x = x_ref[0]                      # (Lq, D)
    ctx = ctx_ref[0]                  # (Lk, D)

    # TODO(synk): MultiheadCrossAttention source not provided; canonical
    # q/k/v/out-proj cross-attention with pos_embed added to the query stream.
    q = jnp.dot(x + pos_ref[...], wq_ref[...],
                preferred_element_type=jnp.float32) + bq_ref[...]       # (Lq, D)
    kv = jnp.dot(ctx, wkv_ref[...],
                 preferred_element_type=jnp.float32) + bkv_ref[...]     # (Lk, 2D)

    # all heads in one kernel; out-projection accumulated per head (no concat)
    attn = jnp.zeros(x.shape, jnp.float32) + bo_ref[...]
    for hd in range(HEADS):
        qh = q[:, hd * DH:(hd + 1) * DH]
        kh = kv[:, hd * DH:(hd + 1) * DH]
        vh = kv[:, ATTN_DIM + hd * DH:ATTN_DIM + (hd + 1) * DH]
        s = jax.lax.dot_general(qh, kh, (((1,), (1,)), ((), ())),
                                preferred_element_type=jnp.float32) * scale
        s = s - jnp.max(s, axis=-1, keepdims=True)
        p = jnp.exp(s)
        p = p * pl.reciprocal(jnp.sum(p, axis=-1, keepdims=True), approx=True)
        oh = jnp.dot(p, vh, preferred_element_type=jnp.float32)
        attn = attn + jnp.dot(oh, wo_ref[hd * DH:(hd + 1) * DH, :],
                              preferred_element_type=jnp.float32)

    x = _layernorm(x + attn, g1_ref[...], be1_ref[...])

    h1 = jnp.dot(x, w1_ref[...], preferred_element_type=jnp.float32) + bm1_ref[...]
    h1 = _gelu_exact(h1)
    h2 = jnp.dot(h1, w2_ref[...], preferred_element_type=jnp.float32) + bm2_ref[...]

    x = _layernorm(x + h2, g2_ref[...], be2_ref[...])
    o_ref[0] = x.astype(o_ref.dtype)


def _tail_kernel(x_ref, wback_ref, bback_ref, wt_ref, bt_ref,
                 p5a_ref, p5b_ref, p2c_ref, wfc_ref, bfc_ref, o_ref, pad_ref):
    """conv_back (1x1) + 3x(conv3+BN+ReLU+MaxPool) + mean + fc + sigmoid."""
    x = x_ref[0]                                                        # (L_POOL, D)
    y = jnp.dot(x, wback_ref[...],
                preferred_element_type=jnp.float32) + bback_ref[...]    # (L_POOL, HID)

    pool_refs = (p5a_ref, p5b_ref, p2c_ref)   # p2c unused under current geometry
    for s, (pad, pk, lin, lout, lpool) in enumerate(TAIL_SPECS):
        # zero-padded kernel-3 conv via a VMEM scratch buffer
        pad_ref[0:lin + 2 * pad, :] = jnp.zeros((lin + 2 * pad, HID), jnp.float32)
        pad_ref[pad:pad + lin, :] = y
        acc = jnp.zeros((lout, HID), jnp.float32)
        for j in range(3):
            acc = acc + jnp.dot(pad_ref[j:j + lout, :], wt_ref[s, j],
                                preferred_element_type=jnp.float32)
        acc = jnp.maximum(acc + bt_ref[s], 0.0)                         # BN folded + ReLU
        # MaxPool1d(pk)
        if pk == lout:
            y = jnp.max(acc, axis=0, keepdims=True)                     # (1, HID)
        else:
            pr = pool_refs[s]
            y = jnp.dot(pr[0], acc, preferred_element_type=jnp.float32)
            for j in range(1, pk):
                y = jnp.maximum(
                    y, jnp.dot(pr[j], acc, preferred_element_type=jnp.float32))

    feat = jnp.mean(y, axis=0, keepdims=True)                           # (1, HID)
    logits = jnp.dot(feat, wfc_ref[...],
                     preferred_element_type=jnp.float32) + bfc_ref[...]
    o_ref[0] = jax.nn.sigmoid(logits).astype(o_ref.dtype)


# ----------------------------- pallas_call wrappers --------------------------
def front_stage(xp, prep):
    B = xp.shape[0]
    return pl.pallas_call(
        _front_kernel,
        out_shape=jax.ShapeDtypeStruct((B, L_POOL, ATTN_DIM), jnp.float32),
        grid=(B,),
        in_specs=[
            pl.BlockSpec((1, SEQ_LEN + 2 * PAD_L, C_IN), lambda b: (b, 0, 0)),
            _full_spec((WIN, C_IN, 3 * HID)),
            _full_spec((1, 3 * HID)),
            _full_spec((2, L_POOL, L_CONV)),
            _full_spec((3, 3, L_POOL, L_POOL)),
            _full_spec((HID, ATTN_DIM)),
            _full_spec((1, ATTN_DIM)),
            _full_spec((L_POOL, ATTN_DIM)),
        ],
        out_specs=pl.BlockSpec((1, L_POOL, ATTN_DIM), lambda b: (b, 0, 0)),
        compiler_params=_CPARAMS,
    )(xp, prep["w_tap"], prep["b_conv"], prep["p2"], prep["q3"],
      prep["w_embed"], prep["b_embed"], prep["pos"])


def mblock_stage(x, ctx, p, pos):
    B, Lq, D = x.shape
    Lk = ctx.shape[1]
    return pl.pallas_call(
        _mblock_kernel,
        out_shape=jax.ShapeDtypeStruct((B, Lq, D), jnp.float32),
        grid=(B,),
        in_specs=[
            pl.BlockSpec((1, Lq, D), lambda b: (b, 0, 0)),
            pl.BlockSpec((1, Lk, D), lambda b: (b, 0, 0)),
            _full_spec((Lq, D)),
            _full_spec((D, D)), _full_spec((1, D)),          # wq, bq
            _full_spec((D, 2 * D)), _full_spec((1, 2 * D)),  # wkv, bkv
            _full_spec((D, D)), _full_spec((1, D)),          # wo, bo
            _full_spec((1, D)), _full_spec((1, D)),          # ln1
            _full_spec((D, DM)), _full_spec((1, DM)),        # w1, b1
            _full_spec((DM, D)), _full_spec((1, D)),         # w2, b2
            _full_spec((1, D)), _full_spec((1, D)),          # ln2
        ],
        out_specs=pl.BlockSpec((1, Lq, D), lambda b: (b, 0, 0)),
        compiler_params=_CPARAMS,
    )(x, ctx, pos, p["wq"], p["bq"], p["wkv"], p["bkv"], p["wo"], p["bo"],
      p["ln1_g"], p["ln1_b"], p["w1"], p["b1"], p["w2"], p["b2"],
      p["ln2_g"], p["ln2_b"])


def tail_stage(x, prep):
    B = x.shape[0]
    out = pl.pallas_call(
        _tail_kernel,
        out_shape=jax.ShapeDtypeStruct((B, 1, D_OUT), jnp.float32),
        grid=(B,),
        in_specs=[
            pl.BlockSpec((1, L_POOL, ATTN_DIM), lambda b: (b, 0, 0)),
            _full_spec((ATTN_DIM, HID)), _full_spec((1, HID)),
            _full_spec((3, 3, HID, HID)), _full_spec((3, 1, HID)),
            _full_spec(prep["p5a"].shape),
            _full_spec(prep["p5b"].shape),
            _full_spec(prep["p2c"].shape),
            _full_spec((HID, D_OUT)), _full_spec((1, D_OUT)),
        ],
        out_specs=pl.BlockSpec((1, 1, D_OUT), lambda b: (b, 0, 0)),
        scratch_shapes=[pltpu.VMEM((TAIL_MAXPAD, HID), jnp.float32)],
        compiler_params=_CPARAMS,
    )(x, prep["w_back"], prep["b_back"], prep["w_tail"], prep["b_tail"],
      prep["p5a"], prep["p5b"], prep["p2c"], prep["w_fc"], prep["b_fc"])
    return out.reshape(B, D_OUT)


# ----------------------------- parameter preparation (one-time, host/XLA) ----
def sinusoid_table(n_position, d_hid):
    pos = np.arange(n_position, dtype=np.float64)[:, None]
    i = np.arange(d_hid, dtype=np.float64)[None, :]
    angle = pos / np.power(10000.0, 2.0 * (i // 2) / d_hid)
    table = np.zeros((n_position, d_hid), dtype=np.float64)
    table[:, 0::2] = np.sin(angle[:, 0::2])
    table[:, 1::2] = np.cos(angle[:, 1::2])
    return jnp.asarray(table, dtype=jnp.float32)


def _fold_bn(w, b, gamma, beta, mean, var, eps=1e-5):
    """Fold eval-mode BatchNorm1d into the preceding conv's weight & bias."""
    scale = gamma / jnp.sqrt(var + eps)
    return w * scale[:, None, None], (b - mean) * scale + beta


def _pool_select(k, lout, lin):
    """Selection matrices P[j] with P[j][i, k*i+j] = 1 (MaxPool as gather-matmul)."""
    sel = np.zeros((k, lout, lin), np.float32)
    rows = np.arange(lout)
    for j in range(k):
        sel[j, rows, k * rows + j] = 1.0
    return jnp.asarray(sel)


def _concat_pool3_select(n):
    """Q[r, branch] implementing length-concat of 3 branches + MaxPool1d(3)."""
    q = np.zeros((3, 3, n, n), np.float32)
    for g in range(n):
        for r in range(3):
            br, row = divmod(3 * g + r, n)
            q[r, br, g, row] = 1.0
    return jnp.asarray(q)


def prepare_params(params):
    """Repack PyTorch-layout parameters into kernel-ready arrays (BN folded,
    weights transposed to (in, out), conv branches merged, k/v merged)."""
    # merged convs_all: zero-pad the k=2/3/4 kernels onto one 4-tap window
    w_tap = jnp.zeros((WIN, C_IN, 3 * HID), jnp.float32)
    b_conv = []
    for bi, (k, p) in enumerate(zip(K_CNN, params["convs_all"])):
        wf, bf = _fold_bn(p["w"], p["b"], p["gamma"], p["beta"], p["mean"], p["var"])
        for j in range(k):
            wpos = j - (k // 2) + PAD_L      # tap j touches x[t + j - k//2]
            w_tap = w_tap.at[wpos, :, bi * HID:(bi + 1) * HID].set(wf[:, :, j].T)
        b_conv.append(bf)
    b_conv = jnp.concatenate(b_conv).reshape(1, 3 * HID)

    w_embed = params["conv_embed"]["w"][:, :, 0].T
    b_embed = params["conv_embed"]["b"].reshape(1, ATTN_DIM)
    w_back = params["conv_back"]["w"][:, :, 0].T
    b_back = params["conv_back"]["b"].reshape(1, HID)
    w_fc = params["fc"]["w"].T
    b_fc = params["fc"]["b"].reshape(1, D_OUT)

    w_tail, b_tail = [], []
    for p in params["final"]:
        wf, bf = _fold_bn(p["w"], p["b"], p["gamma"], p["beta"], p["mean"], p["var"])
        w_tail.append(jnp.transpose(wf, (2, 1, 0)))       # (tap, Cin, Cout)
        b_tail.append(bf.reshape(1, HID))
    w_tail = jnp.stack(w_tail)                            # (3, 3, HID, HID)
    b_tail = jnp.stack(b_tail)                            # (3, 1, HID)

    middle = []
    for p in params["middle"]:
        middle.append({
            "wq": p["wq"].T, "bq": p["bq"].reshape(1, -1),
            "wkv": jnp.concatenate([p["wk"].T, p["wv"].T], axis=1),
            "bkv": jnp.concatenate([p["bk"], p["bv"]]).reshape(1, -1),
            "wo": p["wo"].T, "bo": p["bo"].reshape(1, -1),
            "ln1_g": p["ln1_g"].reshape(1, -1), "ln1_b": p["ln1_b"].reshape(1, -1),
            "w1": p["w1"].T, "b1": p["b1"].reshape(1, -1),
            "w2": p["w2"].T, "b2": p["b2"].reshape(1, -1),
            "ln2_g": p["ln2_g"].reshape(1, -1), "ln2_b": p["ln2_b"].reshape(1, -1),
        })

    return {
        "w_tap": w_tap, "b_conv": b_conv,
        "w_embed": w_embed, "b_embed": b_embed,
        "w_back": w_back, "b_back": b_back,
        "w_tail": w_tail, "b_tail": b_tail,
        "w_fc": w_fc, "b_fc": b_fc,
        "middle": middle,
        "p2": _pool_select(2, L_POOL, L_CONV),
        "q3": _concat_pool3_select(L_POOL),
        "p5a": _pool_select(TAIL_SPECS[0][1], TAIL_SPECS[0][4], TAIL_SPECS[0][3]),
        "p5b": _pool_select(TAIL_SPECS[1][1], TAIL_SPECS[1][4], TAIL_SPECS[1][3]),
        "p2c": _pool_select(TAIL_SPECS[2][1], TAIL_SPECS[2][4], TAIL_SPECS[2][3]),
        "pos": sinusoid_table(L_POOL, ATTN_DIM),
    }


# ----------------------------- model forward ---------------------------------
def trancnn_forward(prep, aai, onehot, blosum, paac, esm):
    # channel concat + merged-conv window padding (tiny XLA glue, fused by XLA)
    x = jnp.concatenate([aai, onehot, blosum, paac], axis=2)     # (B, L, C_IN)
    xp = jnp.pad(x, ((0, 0), (PAD_L, PAD_L), (0, 0)))
    x = front_stage(xp, prep)                                    # (B, L_POOL, ATTN_DIM)
    for i, blk in enumerate(prep["middle"]):
        x = mblock_stage(x, esm[:, 2 + i], blk, prep["pos"])
    return tail_stage(x, prep)                                   # (B, D_OUT)


# ----------------------------- deterministic parameter init ------------------
class ParamGen:
    def __init__(self, key):
        self.key = key

    def __call__(self, shape, scale=0.05):
        self.key, sub = jax.random.split(self.key)
        return scale * jax.random.normal(sub, shape, dtype=jnp.float32)


def init_params(key):
    gen = ParamGen(key)
    D = ATTN_DIM
    params = {
        "convs_all": [
            {
                "w": gen((HID, C_IN, k)), "b": gen((HID,)),
                "gamma": 1.0 + gen((HID,)), "beta": gen((HID,)),
                "mean": jnp.zeros((HID,), jnp.float32), "var": jnp.ones((HID,), jnp.float32),
            }
            for k in K_CNN
        ],
        "conv_embed": {"w": gen((ATTN_DIM, HID, 1)), "b": gen((ATTN_DIM,))},
        "middle": [
            {
                "wq": gen((D, D)), "bq": gen((D,)),
                "wk": gen((D, D)), "bk": gen((D,)),
                "wv": gen((D, D)), "bv": gen((D,)),
                "wo": gen((D, D)), "bo": gen((D,)),
                "ln1_g": jnp.ones((D,), jnp.float32), "ln1_b": jnp.zeros((D,), jnp.float32),
                "w1": gen((DM, D)), "b1": gen((DM,)),
                "w2": gen((D, DM)), "b2": gen((D,)),
                "ln2_g": jnp.ones((D,), jnp.float32), "ln2_b": jnp.zeros((D,), jnp.float32),
            }
            for _ in range(DEPTH)
        ],
        "conv_back": {"w": gen((HID, ATTN_DIM, 1)), "b": gen((HID,))},
        "final": [
            {
                "w": gen((HID, HID, 3)), "b": gen((HID,)),
                "gamma": 1.0 + gen((HID,)), "beta": gen((HID,)),
                "mean": jnp.zeros((HID,), jnp.float32), "var": jnp.ones((HID,), jnp.float32),
            }
            for _ in FINAL_POOLS
        ],
        "fc": {"w": gen((D_OUT, HID)), "b": gen((D_OUT,))},
    }
    return params


# ----------------------------- main -------------------------------------------
if __name__ == "__main__":
    root = jax.random.PRNGKey(0)
    pkey, dkey = jax.random.split(root)
    params = init_params(pkey)
    prep = prepare_params(params)          # one-time repack, outside the jitted fwd

    ks = jax.random.split(dkey, 5)
    aai = jax.random.normal(ks[0], (BATCH, SEQ_LEN, D_INPUT[0]), jnp.float32)
    onehot = jax.random.normal(ks[1], (BATCH, SEQ_LEN, D_INPUT[1]), jnp.float32)
    blosum = jax.random.normal(ks[2], (BATCH, SEQ_LEN, D_INPUT[2]), jnp.float32)
    paac = jax.random.normal(ks[3], (BATCH, SEQ_LEN, D_INPUT[3]), jnp.float32)
    esm = jax.random.normal(ks[4], (BATCH, ESM_LAYERS, ESM_LEN, ATTN_DIM), jnp.float32)

    fwd = jax.jit(trancnn_forward)
    out = fwd(prep, aai, onehot, blosum, paac, esm)
    out = jax.block_until_ready(out)

    assert out.shape == (BATCH, D_OUT), out.shape
    assert bool(jnp.all(jnp.isfinite(out)))
    assert bool(jnp.all((out >= 0.0) & (out <= 1.0)))
    print("KERNEL_OK")
</pallas_src>

<mosaic_0001>
module attributes {stable_mosaic.version = 11 : i64} {
  func.func @_front_kernel(%arg0: i32, %arg1: memref<1x84x36xf32, #tpu.memory_space<vmem>>, %arg2: memref<4x36x96xf32, #tpu.memory_space<vmem>>, %arg3: memref<1x96xf32, #tpu.memory_space<vmem>>, %arg4: memref<2x40x80xf32, #tpu.memory_space<vmem>>, %arg5: memref<3x3x40x40xf32, #tpu.memory_space<vmem>>, %arg6: memref<32x64xf32, #tpu.memory_space<vmem>>, %arg7: memref<1x64xf32, #tpu.memory_space<vmem>>, %arg8: memref<40x64xf32, #tpu.memory_space<vmem>>, %arg9: memref<1x40x64xf32, #tpu.memory_space<vmem>>) attributes {dimension_semantics = [#tpu.dimension_semantics<parallel>], iteration_bounds = array<i64: 2>, scalar_prefetch = 0 : i64, scratch_operands = 0 : i64, tpu.core_type = #tpu.core_type<tc>, window_params = [{transform_indices = @transform_0, window_bounds = array<i64: 1, 84, 36>}, {pipeline_mode = #tpu.pipeline_mode<synchronous>, transform_indices = @transform_1, window_bounds = array<i64: 4, 36, 96>}, {pipeline_mode = #tpu.pipeline_mode<synchronous>, transform_indices = @transform_2, window_bounds = array<i64: 1, 96>}, {pipeline_mode = #tpu.pipeline_mode<synchronous>, transform_indices = @transform_3, window_bounds = array<i64: 2, 40, 80>}, {pipeline_mode = #tpu.pipeline_mode<synchronous>, transform_indices = @transform_4, window_bounds = array<i64: 3, 3, 40, 40>}, {pipeline_mode = #tpu.pipeline_mode<synchronous>, transform_indices = @transform_5, window_bounds = array<i64: 32, 64>}, {pipeline_mode = #tpu.pipeline_mode<synchronous>, transform_indices = @transform_6, window_bounds = array<i64: 1, 64>}, {pipeline_mode = #tpu.pipeline_mode<synchronous>, transform_indices = @transform_7, window_bounds = array<i64: 40, 64>}, {transform_indices = @transform_8, window_bounds = array<i64: 1, 40, 64>}]} {
    %cst = arith.constant 0.000000e+00 : f32
    %0 = vector.broadcast %cst : f32 to vector<80x96xf32>
    %c0 = arith.constant 0 : index
    %c0_0 = arith.constant 0 : index
    %c0_1 = arith.constant 0 : index
    %1 = vector.load %arg1[%c0, %c0_0, %c0_1] : memref<1x84x36xf32, #tpu.memory_space<vmem>>, vector<1x80x36xf32>
    %2 = vector.shape_cast %1 : vector<1x80x36xf32> to vector<80x36xf32>
    %c0_2 = arith.constant 0 : index
    %c0_3 = arith.constant 0 : index
    %c0_4 = arith.constant 0 : index
    %3 = vector.load %arg2[%c0_2, %c0_3, %c0_4] : memref<4x36x96xf32, #tpu.memory_space<vmem>>, vector<1x36x96xf32>
    %4 = vector.shape_cast %3 : vector<1x36x96xf32> to vector<36x96xf32>
    %cst_5 = arith.constant dense<0.000000e+00> : vector<80x96xf32>
    %5 = tpu.matmul %2, %4, %cst_5 {dimension_numbers = #tpu.dot_dimension_numbers<[1], [0], [0], [1], [0, 0, 1, 1], [], []>} : vector<80x36xf32>, vector<36x96xf32>, vector<80x96xf32> -> vector<80x96xf32>
    %6 = arith.addf %0, %5 : vector<80x96xf32>
    %c0_6 = arith.constant 0 : index
    %c1 = arith.constant 1 : index
    %c0_7 = arith.constant 0 : index
    %7 = vector.load %arg1[%c0_6, %c1, %c0_7] : memref<1x84x36xf32, #tpu.memory_space<vmem>>, vector<1x80x36xf32>
    %8 = vector.shape_cast %7 : vector<1x80x36xf32> to vector<80x36xf32>
    %c1_8 = arith.constant 1 : index
    %c0_9 = arith.constant 0 : index
    %c0_10 = arith.constant 0 : index
    %9 = vector.load %arg2[%c1_8, %c0_9, %c0_10] : memref<4x36x96xf32, #tpu.memory_space<vmem>>, vector<1x36x96xf32>
    %10 = vector.shape_cast %9 : vector<1x36x96xf32> to vector<36x96xf32>
    %cst_11 = arith.constant dense<0.000000e+00> : vector<80x96xf32>
    %11 = tpu.matmul %8, %10, %cst_11 {dimension_numbers = #tpu.dot_dimension_numbers<[1], [0], [0], [1], [0, 0, 1, 1], [], []>} : vector<80x36xf32>, vector<36x96xf32>, vector<80x96xf32> -> vector<80x96xf32>
    %12 = arith.addf %6, %11 : vector<80x96xf32>
    %c0_12 = arith.constant 0 : index
    %c2 = arith.constant 2 : index
    %c0_13 = arith.constant 0 : index
    %13 = vector.load %arg1[%c0_12, %c2, %c0_13] : memref<1x84x36xf32, #tpu.memory_space<vmem>>, vector<1x80x36xf32>
    %14 = vector.shape_cast %13 : vector<1x80x36xf32> to vector<80x36xf32>
    %c2_14 = arith.constant 2 : index
    %c0_15 = arith.constant 0 : index
    %c0_16 = arith.constant 0 : index
    %15 = vector.load %arg2[%c2_14, %c0_15, %c0_16] : memref<4x36x96xf32, #tpu.memory_space<vmem>>, vector<1x36x96xf32>
    %16 = vector.shape_cast %15 : vector<1x36x96xf32> to vector<36x96xf32>
    %cst_17 = arith.constant dense<0.000000e+00> : vector<80x96xf32>
    %17 = tpu.matmul %14, %16, %cst_17 {dimension_numbers = #tpu.dot_dimension_numbers<[1], [0], [0], [1], [0, 0, 1, 1], [], []>} : vector<80x36xf32>, vector<36x96xf32>, vector<80x96xf32> -> vector<80x96xf32>
    %18 = arith.addf %12, %17 : vector<80x96xf32>
    %c0_18 = arith.constant 0 : index
    %c3 = arith.constant 3 : index
    %c0_19 = arith.constant 0 : index
    %19 = vector.load %arg1[%c0_18, %c3, %c0_19] : memref<1x84x36xf32, #tpu.memory_space<vmem>>, vector<1x80x36xf32>
    %20 = vector.shape_cast %19 : vector<1x80x36xf32> to vector<80x36xf32>
    %c3_20 = arith.constant 3 : index
    %c0_21 = arith.constant 0 : index
    %c0_22 = arith.constant 0 : index
    %21 = vector.load %arg2[%c3_20, %c0_21, %c0_22] : memref<4x36x96xf32, #tpu.memory_space<vmem>>, vector<1x36x96xf32>
    %22 = vector.shape_cast %21 : vector<1x36x96xf32> to vector<36x96xf32>
    %cst_23 = arith.constant dense<0.000000e+00> : vector<80x96xf32>
    %23 = tpu.matmul %20, %22, %cst_23 {dimension_numbers = #tpu.dot_dimension_numbers<[1], [0], [0], [1], [0, 0, 1, 1], [], []>} : vector<80x36xf32>, vector<36x96xf32>, vector<80x96xf32> -> vector<80x96xf32>
    %24 = arith.addf %18, %23 : vector<80x96xf32>
    %c0_24 = arith.constant 0 : index
    %c0_25 = arith.constant 0 : index
    %25 = vector.load %arg3[%c0_24, %c0_25] : memref<1x96xf32, #tpu.memory_space<vmem>>, vector<1x96xf32>
    %26 = vector.broadcast %25 : vector<1x96xf32> to vector<80x96xf32>
    %27 = arith.addf %24, %26 : vector<80x96xf32>
    %cst_26 = arith.constant 0.000000e+00 : f32
    %28 = vector.broadcast %cst_26 : f32 to vector<80x96xf32>
    %29 = arith.maximumf %27, %28 : vector<80x96xf32>
    %c0_27 = arith.constant 0 : index
    %c0_28 = arith.constant 0 : index
    %c0_29 = arith.constant 0 : index
    %30 = vector.load %arg4[%c0_27, %c0_28, %c0_29] : memref<2x40x80xf32, #tpu.memory_space<vmem>>, vector<1x40x80xf32>
    %31 = vector.shape_cast %30 : vector<1x40x80xf32> to vector<40x80xf32>
    %cst_30 = arith.constant dense<0.000000e+00> : vector<40x96xf32>
    %32 = tpu.matmul %31, %29, %cst_30 {dimension_numbers = #tpu.dot_dimension_numbers<[1], [0], [0], [1], [0, 0, 1, 1], [], []>} : vector<40x80xf32>, vector<80x96xf32>, vector<40x96xf32> -> vector<40x96xf32>
    %c1_31 = arith.constant 1 : index
    %c0_32 = arith.constant 0 : index
    %c0_33 = arith.constant 0 : index
    %33 = vector.load %arg4[%c1_31, %c0_32, %c0_33] : memref<2x40x80xf32, #tpu.memory_space<vmem>>, vector<1x40x80xf32>
    %34 = vector.shape_cast %33 : vector<1x40x80xf32> to vector<40x80xf32>
    %cst_34 = arith.constant dense<0.000000e+00> : vector<40x96xf32>
    %35 = tpu.matmul %34, %29, %cst_34 {dimension_numbers = #tpu.dot_dimension_numbers<[1], [0], [0], [1], [0, 0, 1, 1], [], []>} : vector<40x80xf32>, vector<80x96xf32>, vector<40x96xf32> -> vector<40x96xf32>
    %36 = arith.maximumf %32, %35 : vector<40x96xf32>
    %cst_35 = arith.constant 0.000000e+00 : f32
    %37 = vector.broadcast %cst_35 : f32 to vector<40x32xf32>
    %c0_36 = arith.constant 0 : index
    %c0_37 = arith.constant 0 : index
    %c0_38 = arith.constant 0 : index
    %c0_39 = arith.constant 0 : index
    %38 = vector.load %arg5[%c0_36, %c0_37, %c0_38, %c0_39] : memref<3x3x40x40xf32, #tpu.memory_space<vmem>>, vector<1x1x40x40xf32>
    %39 = vector.shape_cast %38 : vector<1x1x40x40xf32> to vector<40x40xf32>
    %40 = vector.extract_strided_slice %36 {offsets = [0, 0], sizes = [40, 32], strides = [1, 1]} : vector<40x96xf32> to vector<40x32xf32>
    %cst_40 = arith.constant dense<0.000000e+00> : vector<40x32xf32>
    %41 = tpu.matmul %39, %40, %cst_40 {dimension_numbers = #tpu.dot_dimension_numbers<[1], [0], [0], [1], [0, 0, 1, 1], [], []>} : vector<40x40xf32>, vector<40x32xf32>, vector<40x32xf32> -> vector<40x32xf32>
    %42 = arith.addf %37, %41 : vector<40x32xf32>
    %c0_41 = arith.constant 0 : index
    %c1_42 = arith.constant 1 : index
    %c0_43 = arith.constant 0 : index
    %c0_44 = arith.constant 0 : index
    %43 = vector.load %arg5[%c0_41, %c1_42, %c0_43, %c0_44] : memref<3x3x40x40xf32, #tpu.memory_space<vmem>>, vector<1x1x40x40xf32>
    %44 = vector.shape_cast %43 : vector<1x1x40x40xf32> to vector<40x40xf32>
    %45 = vector.extract_strided_slice %36 {offsets = [0, 32], sizes = [40, 32], strides = [1, 1]} : vector<40x96xf32> to vector<40x32xf32>
    %cst_45 = arith.constant dense<0.000000e+00> : vector<40x32xf32>
    %46 = tpu.matmul %44, %45, %cst_45 {dimension_numbers = #tpu.dot_dimension_numbers<[1], [0], [0], [1], [0, 0, 1, 1], [], []>} : vector<40x40xf32>, vector<40x32xf32>, vector<40x32xf32> -> vector<40x32xf32>
    %47 = arith.addf %42, %46 : vector<40x32xf32>
    %c0_46 = arith.constant 0 : index
    %c2_47 = arith.constant 2 : index
    %c0_48 = arith.constant 0 : index
    %c0_49 = arith.constant 0 : index
    %48 = vector.load %arg5[%c0_46, %c2_47, %c0_48, %c0_49] : memref<3x3x40x40xf32, #tpu.memory_space<vmem>>, vector<1x1x40x40xf32>
    %49 = vector.shape_cast %48 : vector<1x1x40x40xf32> to vector<40x40xf32>
    %50 = vector.extract_strided_slice %36 {offsets = [0, 64], sizes = [40, 32], strides = [1, 1]} : vector<40x96xf32> to vector<40x32xf32>
    %cst_50 = arith.constant dense<0.000000e+00> : vector<40x32xf32>
    %51 = tpu.matmul %49, %50, %cst_50 {dimension_numbers = #tpu.dot_dimension_numbers<[1], [0], [0], [1], [0, 0, 1, 1], [], []>} : vector<40x40xf32>, vector<40x32xf32>, vector<40x32xf32> -> vector<40x32xf32>
    %52 = arith.addf %47, %51 : vector<40x32xf32>
    %cst_51 = arith.constant 0.000000e+00 : f32
    %53 = vector.broadcast %cst_51 : f32 to vector<40x32xf32>
    %c1_52 = arith.constant 1 : index
    %c0_53 = arith.constant 0 : index
    %c0_54 = arith.constant 0 : index
    %c0_55 = arith.constant 0 : index
    %54 = vector.load %arg5[%c1_52, %c0_53, %c0_54, %c0_55] : memref<3x3x40x40xf32, #tpu.memory_space<vmem>>, vector<1x1x40x40xf32>
    %55 = vector.shape_cast %54 : vector<1x1x40x40xf32> to vector<40x40xf32>
    %56 = vector.extract_strided_slice %36 {offsets = [0, 0], sizes = [40, 32], strides = [1, 1]} : vector<40x96xf32> to vector<40x32xf32>
    %cst_56 = arith.constant dense<0.000000e+00> : vector<40x32xf32>
    %57 = tpu.matmul %55, %56, %cst_56 {dimension_numbers = #tpu.dot_dimension_numbers<[1], [0], [0], [1], [0, 0, 1, 1], [], []>} : vector<40x40xf32>, vector<40x32xf32>, vector<40x32xf32> -> vector<40x32xf32>
    %58 = arith.addf %53, %57 : vector<40x32xf32>
    %c1_57 = arith.constant 1 : index
    %c1_58 = arith.constant 1 : index
    %c0_59 = arith.constant 0 : index
    %c0_60 = arith.constant 0 : index
    %59 = vector.load %arg5[%c1_57, %c1_58, %c0_59, %c0_60] : memref<3x3x40x40xf32, #tpu.memory_space<vmem>>, vector<1x1x40x40xf32>
    %60 = vector.shape_cast %59 : vector<1x1x40x40xf32> to vector<40x40xf32>
    %61 = vector.extract_strided_slice %36 {offsets = [0, 32], sizes = [40, 32], strides = [1, 1]} : vector<40x96xf32> to vector<40x32xf32>
    %cst_61 = arith.constant dense<0.000000e+00> : vector<40x32xf32>
    %62 = tpu.matmul %60, %61, %cst_61 {dimension_numbers = #tpu.dot_dimension_numbers<[1], [0], [0], [1], [0, 0, 1, 1], [], []>} : vector<40x40xf32>, vector<40x32xf32>, vector<40x32xf32> -> vector<40x32xf32>
    %63 = arith.addf %58, %62 : vector<40x32xf32>
    %c1_62 = arith.constant 1 : index
    %c2_63 = arith.constant 2 : index
    %c0_64 = arith.constant 0 : index
    %c0_65 = arith.constant 0 : index
    %64 = vector.load %arg5[%c1_62, %c2_63, %c0_64, %c0_65] : memref<3x3x40x40xf32, #tpu.memory_space<vmem>>, vector<1x1x40x40xf32>
    %65 = vector.shape_cast %64 : vector<1x1x40x40xf32> to vector<40x40xf32>
    %66 = vector.extract_strided_slice %36 {offsets = [0, 64], sizes = [40, 32], strides = [1, 1]} : vector<40x96xf32> to vector<40x32xf32>
    %cst_66 = arith.constant dense<0.000000e+00> : vector<40x32xf32>
    %67 = tpu.matmul %65, %66, %cst_66 {dimension_numbers = #tpu.dot_dimension_numbers<[1], [0], [0], [1], [0, 0, 1, 1], [], []>} : vector<40x40xf32>, vector<40x32xf32>, vector<40x32xf32> -> vector<40x32xf32>
    %68 = arith.addf %63, %67 : vector<40x32xf32>
    %cst_67 = arith.constant 0.000000e+00 : f32
    %69 = vector.broadcast %cst_67 : f32 to vector<40x32xf32>
    %c2_68 = arith.constant 2 : index
    %c0_69 = arith.constant 0 : index
    %c0_70 = arith.constant 0 : index
    %c0_71 = arith.constant 0 : index
    %70 = vector.load %arg5[%c2_68, %c0_69, %c0_70, %c0_71] : memref<3x3x40x40xf32, #tpu.memory_space<vmem>>, vector<1x1x40x40xf32>
    %71 = vector.shape_cast %70 : vector<1x1x40x40xf32> to vector<40x40xf32>
    %72 = vector.extract_strided_slice %36 {offsets = [0, 0], sizes = [40, 32], strides = [1, 1]} : vector<40x96xf32> to vector<40x32xf32>
    %cst_72 = arith.constant dense<0.000000e+00> : vector<40x32xf32>
    %73 = tpu.matmul %71, %72, %cst_72 {dimension_numbers = #tpu.dot_dimension_numbers<[1], [0], [0], [1], [0, 0, 1, 1], [], []>} : vector<40x40xf32>, vector<40x32xf32>, vector<40x32xf32> -> vector<40x32xf32>
    %74 = arith.addf %69, %73 : vector<40x32xf32>
    %c2_73 = arith.constant 2 : index
    %c1_74 = arith.constant 1 : index
    %c0_75 = arith.constant 0 : index
    %c0_76 = arith.constant 0 : index
    %75 = vector.load %arg5[%c2_73, %c1_74, %c0_75, %c0_76] : memref<3x3x40x40xf32, #tpu.memory_space<vmem>>, vector<1x1x40x40xf32>
    %76 = vector.shape_cast %75 : vector<1x1x40x40xf32> to vector<40x40xf32>
    %77 = vector.extract_strided_slice %36 {offsets = [0, 32], sizes = [40, 32], strides = [1, 1]} : vector<40x96xf32> to vector<40x32xf32>
    %cst_77 = arith.constant dense<0.000000e+00> : vector<40x32xf32>
    %78 = tpu.matmul %76, %77, %cst_77 {dimension_numbers = #tpu.dot_dimension_numbers<[1], [0], [0], [1], [0, 0, 1, 1], [], []>} : vector<40x40xf32>, vector<40x32xf32>, vector<40x32xf32> -> vector<40x32xf32>
    %79 = arith.addf %74, %78 : vector<40x32xf32>
    %c2_78 = arith.constant 2 : index
    %c2_79 = arith.constant 2 : index
    %c0_80 = arith.constant 0 : index
    %c0_81 = arith.constant 0 : index
    %80 = vector.load %arg5[%c2_78, %c2_79, %c0_80, %c0_81] : memref<3x3x40x40xf32, #tpu.memory_space<vmem>>, vector<1x1x40x40xf32>
    %81 = vector.shape_cast %80 : vector<1x1x40x40xf32> to vector<40x40xf32>
    %82 = vector.extract_strided_slice %36 {offsets = [0, 64], sizes = [40, 32], strides = [1, 1]} : vector<40x96xf32> to vector<40x32xf32>
    %cst_82 = arith.constant dense<0.000000e+00> : vector<40x32xf32>
    %83 = tpu.matmul %81, %82, %cst_82 {dimension_numbers = #tpu.dot_dimension_numbers<[1], [0], [0], [1], [0, 0, 1, 1], [], []>} : vector<40x40xf32>, vector<40x32xf32>, vector<40x32xf32> -> vector<40x32xf32>
    %84 = arith.addf %79, %83 : vector<40x32xf32>
    %85 = arith.maximumf %52, %68 : vector<40x32xf32>
    %86 = arith.maximumf %85, %84 : vector<40x32xf32>
    %c0_83 = arith.constant 0 : index
    %c0_84 = arith.constant 0 : index
    %87 = vector.load %arg6[%c0_83, %c0_84] : memref<32x64xf32, #tpu.memory_space<vmem>>, vector<32x64xf32>
    %cst_85 = arith.constant dense<0.000000e+00> : vector<40x64xf32>
    %88 = tpu.matmul %86, %87, %cst_85 {dimension_numbers = #tpu.dot_dimension_numbers<[1], [0], [0], [1], [0, 0, 1, 1], [], []>} : vector<40x32xf32>, vector<32x64xf32>, vector<40x64xf32> -> vector<40x64xf32>
    %c0_86 = arith.constant 0 : index
    %c0_87 = arith.constant 0 : index
    %89 = vector.load %arg7[%c0_86, %c0_87] : memref<1x64xf32, #tpu.memory_space<vmem>>, vector<1x64xf32>
    %90 = vector.broadcast %89 : vector<1x64xf32> to vector<40x64xf32>
    %91 = arith.addf %88, %90 : vector<40x64xf32>
    %c0_88 = arith.constant 0 : index
    %c0_89 = arith.constant 0 : index
    %92 = vector.load %arg8[%c0_88, %c0_89] : memref<40x64xf32, #tpu.memory_space<vmem>>, vector<40x64xf32>
    %93 = arith.addf %91, %92 : vector<40x64xf32>
    %c0_90 = arith.constant 0 : index
    %c0_91 = arith.constant 0 : index
    %c0_92 = arith.constant 0 : index
    %94 = vector.load %arg9[%c0_90, %c0_91, %c0_92] : memref<1x40x64xf32, #tpu.memory_space<vmem>>, vector<1x40x64xf32>
    %95 = vector.shape_cast %94 : vector<1x40x64xf32> to vector<40x64xf32>
    %96 = vector.shape_cast %93 : vector<40x64xf32> to vector<1x40x64xf32>
    tpu.vector_store %arg9[%c0_90, %c0_91, %c0_92], %96 {strides = array<i32>} : memref<1x40x64xf32, #tpu.memory_space<vmem>>, vector<1x40x64xf32>,
    return
  }
  func.func @transform_0(%arg0: i32) -> (i32, i32, i32) {
    %c0_i32 = arith.constant 0 : i32
    %c0_i32_0 = arith.constant 0 : i32
    %c0_i32_1 = arith.constant 0 : i32
    return %arg0, %c0_i32, %c0_i32_0 : i32, i32, i32
  }
  func.func @transform_1(%arg0: i32) -> (i32, i32, i32) {
    %c0_i32 = arith.constant 0 : i32
    %c0_i32_0 = arith.constant 0 : i32
    %c0_i32_1 = arith.constant 0 : i32
    %c0_i32_2 = arith.constant 0 : i32
    return %c0_i32, %c0_i32_0, %c0_i32_1 : i32, i32, i32
  }
  func.func @transform_2(%arg0: i32) -> (i32, i32) {
    %c0_i32 = arith.constant 0 : i32
    %c0_i32_0 = arith.constant 0 : i32
    %c0_i32_1 = arith.constant 0 : i32
    return %c0_i32, %c0_i32_0 : i32, i32
  }
  func.func @transform_3(%arg0: i32) -> (i32, i32, i32) {
    %c0_i32 = arith.constant 0 : i32
    %c0_i32_0 = arith.constant 0 : i32
    %c0_i32_1 = arith.constant 0 : i32
    %c0_i32_2 = arith.constant 0 : i32
    return %c0_i32, %c0_i32_0, %c0_i32_1 : i32, i32, i32
  }
  func.func @transform_4(%arg0: i32) -> (i32, i32, i32, i32) {
    %c0_i32 = arith.constant 0 : i32
    %c0_i32_0 = arith.constant 0 : i32
    %c0_i32_1 = arith.constant 0 : i32
    %c0_i32_2 = arith.constant 0 : i32
    %c0_i32_3 = arith.constant 0 : i32
    return %c0_i32, %c0_i32_0, %c0_i32_1, %c0_i32_2 : i32, i32, i32, i32
  }
  func.func @transform_5(%arg0: i32) -> (i32, i32) {
    %c0_i32 = arith.constant 0 : i32
    %c0_i32_0 = arith.constant 0 : i32
    %c0_i32_1 = arith.constant 0 : i32
    return %c0_i32, %c0_i32_0 : i32, i32
  }
  func.func @transform_6(%arg0: i32) -> (i32, i32) {
    %c0_i32 = arith.constant 0 : i32
    %c0_i32_0 = arith.constant 0 : i32
    %c0_i32_1 = arith.constant 0 : i32
    return %c0_i32, %c0_i32_0 : i32, i32
  }
  func.func @transform_7(%arg0: i32) -> (i32, i32) {
    %c0_i32 = arith.constant 0 : i32
    %c0_i32_0 = arith.constant 0 : i32
    %c0_i32_1 = arith.constant 0 : i32
    return %c0_i32, %c0_i32_0 : i32, i32
  }
  func.func @transform_8(%arg0: i32) -> (i32, i32, i32) {
    %c0_i32 = arith.constant 0 : i32
    %c0_i32_0 = arith.constant 0 : i32
    %c0_i32_1 = arith.constant 0 : i32
    return %arg0, %c0_i32, %c0_i32_0 : i32, i32, i32
  }
}

module attributes {stable_mosaic.version = 11 : i64} {
  func.func @_mblock_kernel(%arg0: i32, %arg1: memref<1x40x64xf32, #tpu.memory_space<vmem>>, %arg2: memref<1x16x64xf32, #tpu.memory_space<vmem>>, %arg3: memref<40x64xf32, #tpu.memory_space<vmem>>, %arg4: memref<64x64xf32, #tpu.memory_space<vmem>>, %arg5: memref<1x64xf32, #tpu.memory_space<vmem>>, %arg6: memref<64x128xf32, #tpu.memory_space<vmem>>, %arg7: memref<1x128xf32, #tpu.memory_space<vmem>>, %arg8: memref<64x64xf32, #tpu.memory_space<vmem>>, %arg9: memref<1x64xf32, #tpu.memory_space<vmem>>, %arg10: memref<1x64xf32, #tpu.memory_space<vmem>>, %arg11: memref<1x64xf32, #tpu.memory_space<vmem>>, %arg12: memref<64x128xf32, #tpu.memory_space<vmem>>, %arg13: memref<1x128xf32, #tpu.memory_space<vmem>>, %arg14: memref<128x64xf32, #tpu.memory_space<vmem>>, %arg15: memref<1x64xf32, #tpu.memory_space<vmem>>, %arg16: memref<1x64xf32, #tpu.memory_space<vmem>>, %arg17: memref<1x64xf32, #tpu.memory_space<vmem>>, %arg18: memref<1x40x64xf32, #tpu.memory_space<vmem>>) attributes {dimension_semantics = [#tpu.dimension_semantics<parallel>], iteration_bounds = array<i64: 2>, scalar_prefetch = 0 : i64, scratch_operands = 0 : i64, tpu.core_type = #tpu.core_type<tc>, window_params = [{transform_indices = @transform_0, window_bounds = array<i64: 1, 40, 64>}, {transform_indices = @transform_1, window_bounds = array<i64: 1, 16, 64>}, {pipeline_mode = #tpu.pipeline_mode<synchronous>, transform_indices = @transform_2, window_bounds = array<i64: 40, 64>}, {pipeline_mode = #tpu.pipeline_mode<synchronous>, transform_indices = @transform_3, window_bounds = array<i64: 64, 64>}, {pipeline_mode = #tpu.pipeline_mode<synchronous>, transform_indices = @transform_4, window_bounds = array<i64: 1, 64>}, {pipeline_mode = #tpu.pipeline_mode<synchronous>, transform_indices = @transform_5, window_bounds = array<i64: 64, 128>}, {pipeline_mode = #tpu.pipeline_mode<synchronous>, transform_indices = @transform_6, window_bounds = array<i64: 1, 128>}, {pipeline_mode = #tpu.pipeline_mode<synchronous>, transform_indices = @transform_7, window_bounds = array<i64: 64, 64>}, {pipeline_mode = #tpu.pipeline_mode<synchronous>, transform_indices = @transform_8, window_bounds = array<i64: 1, 64>}, {pipeline_mode = #tpu.pipeline_mode<synchronous>, transform_indices = @transform_9, window_bounds = array<i64: 1, 64>}, {pipeline_mode = #tpu.pipeline_mode<synchronous>, transform_indices = @transform_10, window_bounds = array<i64: 1, 64>}, {pipeline_mode = #tpu.pipeline_mode<synchronous>, transform_indices = @transform_11, window_bounds = array<i64: 64, 128>}, {pipeline_mode = #tpu.pipeline_mode<synchronous>, transform_indices = @transform_12, window_bounds = array<i64: 1, 128>}, {pipeline_mode = #tpu.pipeline_mode<synchronous>, transform_indices = @transform_13, window_bounds = array<i64: 128, 64>}, {pipeline_mode = #tpu.pipeline_mode<synchronous>, transform_indices = @transform_14, window_bounds = array<i64: 1, 64>}, {pipeline_mode = #tpu.pipeline_mode<synchronous>, transform_indices = @transform_15, window_bounds = array<i64: 1, 64>}, {pipeline_mode = #tpu.pipeline_mode<synchronous>, transform_indices = @transform_16, window_bounds = array<i64: 1, 64>}, {transform_indices = @transform_17, window_bounds = array<i64: 1, 40, 64>}]} {
    %c0 = arith.constant 0 : index
    %c0_0 = arith.constant 0 : index
    %c0_1 = arith.constant 0 : index
    %0 = vector.load %arg1[%c0, %c0_0, %c0_1] : memref<1x40x64xf32, #tpu.memory_space<vmem>>, vector<1x40x64xf32>
    %1 = vector.shape_cast %0 : vector<1x40x64xf32> to vector<40x64xf32>
    %c0_2 = arith.constant 0 : index
    %c0_3 = arith.constant 0 : index
    %c0_4 = arith.constant 0 : index
    %2 = vector.load %arg2[%c0_2, %c0_3, %c0_4] : memref<1x16x64xf32, #tpu.memory_space<vmem>>, vector<1x16x64xf32>
    %3 = vector.shape_cast %2 : vector<1x16x64xf32> to vector<16x64xf32>
    %c0_5 = arith.constant 0 : index
    %c0_6 = arith.constant 0 : index
    %4 = vector.load %arg3[%c0_5, %c0_6] : memref<40x64xf32, #tpu.memory_space<vmem>>, vector<40x64xf32>
    %5 = arith.addf %1, %4 : vector<40x64xf32>
    %c0_7 = arith.constant 0 : index
    %c0_8 = arith.constant 0 : index
    %6 = vector.load %arg4[%c0_7, %c0_8] : memref<64x64xf32, #tpu.memory_space<vmem>>, vector<64x64xf32>
    %cst = arith.constant dense<0.000000e+00> : vector<40x64xf32>
    %7 = tpu.matmul %5, %6, %cst {dimension_numbers = #tpu.dot_dimension_numbers<[1], [0], [0], [1], [0, 0, 1, 1], [], []>} : vector<40x64xf32>, vector<64x64xf32>, vector<40x64xf32> -> vector<40x64xf32>
    %c0_9 = arith.constant 0 : index
    %c0_10 = arith.constant 0 : index
    %8 = vector.load %arg5[%c0_9, %c0_10] : memref<1x64xf32, #tpu.memory_space<vmem>>, vector<1x64xf32>
    %9 = vector.broadcast %8 : vector<1x64xf32> to vector<40x64xf32>
    %10 = arith.addf %7, %9 : vector<40x64xf32>
    %c0_11 = arith.constant 0 : index
    %c0_12 = arith.constant 0 : index
    %11 = vector.load %arg6[%c0_11, %c0_12] : memref<64x128xf32, #tpu.memory_space<vmem>>, vector<64x128xf32>
    %cst_13 = arith.constant dense<0.000000e+00> : vector<16x128xf32>
    %12 = tpu.matmul %3, %11, %cst_13 {dimension_numbers = #tpu.dot_dimension_numbers<[1], [0], [0], [1], [0, 0, 1, 1], [], []>} : vector<16x64xf32>, vector<64x128xf32>, vector<16x128xf32> -> vector<16x128xf32>
    %c0_14 = arith.constant 0 : index
    %c0_15 = arith.constant 0 : index
    %13 = vector.load %arg7[%c0_14, %c0_15] : memref<1x128xf32, #tpu.memory_space<vmem>>, vector<1x128xf32>
    %14 = vector.broadcast %13 : vector<1x128xf32> to vector<16x128xf32>
    %15 = arith.addf %12, %14 : vector<16x128xf32>
    %cst_16 = arith.constant 0.000000e+00 : f32
    %16 = vector.broadcast %cst_16 : f32 to vector<40x64xf32>
    %c0_17 = arith.constant 0 : index
    %c0_18 = arith.constant 0 : index
    %17 = vector.load %arg9[%c0_17, %c0_18] : memref<1x64xf32, #tpu.memory_space<vmem>>, vector<1x64xf32>
    %18 = vector.broadcast %17 : vector<1x64xf32> to vector<40x64xf32>
    %19 = arith.addf %16, %18 : vector<40x64xf32>
    %20 = vector.extract_strided_slice %10 {offsets = [0, 0], sizes = [40, 16], strides = [1, 1]} : vector<40x64xf32> to vector<40x16xf32>
    %21 = vector.extract_strided_slice %15 {offsets = [0, 0], sizes = [16, 16], strides = [1, 1]} : vector<16x128xf32> to vector<16x16xf32>
    %22 = vector.extract_strided_slice %15 {offsets = [0, 64], sizes = [16, 16], strides = [1, 1]} : vector<16x128xf32> to vector<16x16xf32>
    %cst_19 = arith.constant dense<0.000000e+00> : vector<40x16xf32>
    %23 = tpu.matmul %20, %21, %cst_19 {dimension_numbers = #tpu.dot_dimension_numbers<[1], [1], [0], [0], [0, 0, 1, 0], [], []>} : vector<40x16xf32>, vector<16x16xf32>, vector<40x16xf32> -> vector<40x16xf32>
    %cst_20 = arith.constant 2.500000e-01 : f32
    %24 = vector.broadcast %cst_20 : f32 to vector<40x16xf32>
    %25 = arith.mulf %23, %24 : vector<40x16xf32>
    %cst_21 = arith.constant dense<0xFF800000> : vector<40xf32>
    %26 = vector.multi_reduction <maximumf>, %25, %cst_21 [1] : vector<40x16xf32> to vector<40xf32>
    %27 = vector.shape_cast %26 : vector<40xf32> to vector<40x1xf32>
    %28 = vector.broadcast %27 : vector<40x1xf32> to vector<40x16xf32>
    %29 = arith.subf %25, %28 : vector<40x16xf32>
    %30 = math.exp %29 : vector<40x16xf32>
    %cst_22 = arith.constant dense<0.000000e+00> : vector<40xf32>
    %31 = vector.multi_reduction <add>, %30, %cst_22 [1] : vector<40x16xf32> to vector<40xf32>
    %32 = vector.shape_cast %31 : vector<40xf32> to vector<40x1xf32>
    %33 = tpu.reciprocal %32 {approx = true} : vector<40x1xf32> -> vector<40x1xf32>
    %34 = vector.broadcast %33 : vector<40x1xf32> to vector<40x16xf32>
    %35 = arith.mulf %30, %34 : vector<40x16xf32>
    %cst_23 = arith.constant dense<0.000000e+00> : vector<40x16xf32>
    %36 = tpu.matmul %35, %22, %cst_23 {dimension_numbers = #tpu.dot_dimension_numbers<[1], [0], [0], [1], [0, 0, 1, 1], [], []>} : vector<40x16xf32>, vector<16x16xf32>, vector<40x16xf32> -> vector<40x16xf32>
    %c0_24 = arith.constant 0 : index
    %c0_25 = arith.constant 0 : index
    %37 = vector.load %arg8[%c0_24, %c0_25] : memref<64x64xf32, #tpu.memory_space<vmem>>, vector<16x64xf32>
    %cst_26 = arith.constant dense<0.000000e+00> : vector<40x64xf32>
    %38 = tpu.matmul %36, %37, %cst_26 {dimension_numbers = #tpu.dot_dimension_numbers<[1], [0], [0], [1], [0, 0, 1, 1], [], []>} : vector<40x16xf32>, vector<16x64xf32>, vector<40x64xf32> -> vector<40x64xf32>
    %39 = arith.addf %19, %38 : vector<40x64xf32>
    %40 = vector.extract_strided_slice %10 {offsets = [0, 16], sizes = [40, 16], strides = [1, 1]} : vector<40x64xf32> to vector<40x16xf32>
    %41 = vector.extract_strided_slice %15 {offsets = [0, 16], sizes = [16, 16], strides = [1, 1]} : vector<16x128xf32> to vector<16x16xf32>
    %42 = vector.extract_strided_slice %15 {offsets = [0, 80], sizes = [16, 16], strides = [1, 1]} : vector<16x128xf32> to vector<16x16xf32>
    %cst_27 = arith.constant dense<0.000000e+00> : vector<40x16xf32>
    %43 = tpu.matmul %40, %41, %cst_27 {dimension_numbers = #tpu.dot_dimension_numbers<[1], [1], [0], [0], [0, 0, 1, 0], [], []>} : vector<40x16xf32>, vector<16x16xf32>, vector<40x16xf32> -> vector<40x16xf32>
    %cst_28 = arith.constant 2.500000e-01 : f32
    %44 = vector.broadcast %cst_28 : f32 to vector<40x16xf32>
    %45 = arith.mulf %43, %44 : vector<40x16xf32>
    %cst_29 = arith.constant dense<0xFF800000> : vector<40xf32>
    %46 = vector.multi_reduction <maximumf>, %45, %cst_29 [1] : vector<40x16xf32> to vector<40xf32>
    %47 = vector.shape_cast %46 : vector<40xf32> to vector<40x1xf32>
    %48 = vector.broadcast %47 : vector<40x1xf32> to vector<40x16xf32>
    %49 = arith.subf %45, %48 : vector<40x16xf32>
    %50 = math.exp %49 : vector<40x16xf32>
    %cst_30 = arith.constant dense<0.000000e+00> : vector<40xf32>
    %51 = vector.multi_reduction <add>, %50, %cst_30 [1] : vector<40x16xf32> to vector<40xf32>
    %52 = vector.shape_cast %51 : vector<40xf32> to vector<40x1xf32>
    %53 = tpu.reciprocal %52 {approx = true} : vector<40x1xf32> -> vector<40x1xf32>
    %54 = vector.broadcast %53 : vector<40x1xf32> to vector<40x16xf32>
    %55 = arith.mulf %50, %54 : vector<40x16xf32>
    %cst_31 = arith.constant dense<0.000000e+00> : vector<40x16xf32>
    %56 = tpu.matmul %55, %42, %cst_31 {dimension_numbers = #tpu.dot_dimension_numbers<[1], [0], [0], [1], [0, 0, 1, 1], [], []>} : vector<40x16xf32>, vector<16x16xf32>, vector<40x16xf32> -> vector<40x16xf32>
    %c16 = arith.constant 16 : index
    %c0_32 = arith.constant 0 : index
    %57 = vector.load %arg8[%c16, %c0_32] : memref<64x64xf32, #tpu.memory_space<vmem>>, vector<16x64xf32>
    %cst_33 = arith.constant dense<0.000000e+00> : vector<40x64xf32>
    %58 = tpu.matmul %56, %57, %cst_33 {dimension_numbers = #tpu.dot_dimension_numbers<[1], [0], [0], [1], [0, 0, 1, 1], [], []>} : vector<40x16xf32>, vector<16x64xf32>, vector<40x64xf32> -> vector<40x64xf32>
    %59 = arith.addf %39, %58 : vector<40x64xf32>
    %60 = vector.extract_strided_slice %10 {offsets = [0, 32], sizes = [40, 16], strides = [1, 1]} : vector<40x64xf32> to vector<40x16xf32>
    %61 = vector.extract_strided_slice %15 {offsets = [0, 32], sizes = [16, 16], strides = [1, 1]} : vector<16x128xf32> to vector<16x16xf32>
    %62 = vector.extract_strided_slice %15 {offsets = [0, 96], sizes = [16, 16], strides = [1, 1]} : vector<16x128xf32> to vector<16x16xf32>
    %cst_34 = arith.constant dense<0.000000e+00> : vector<40x16xf32>
    %63 = tpu.matmul %60, %61, %cst_34 {dimension_numbers = #tpu.dot_dimension_numbers<[1], [1], [0], [0], [0, 0, 1, 0], [], []>} : vector<40x16xf32>, vector<16x16xf32>, vector<40x16xf32> -> vector<40x16xf32>
    %cst_35 = arith.constant 2.500000e-01 : f32
    %64 = vector.broadcast %cst_35 : f32 to vector<40x16xf32>
    %65 = arith.mulf %63, %64 : vector<40x16xf32>
    %cst_36 = arith.constant dense<0xFF800000> : vector<40xf32>
    %66 = vector.multi_reduction <maximumf>, %65, %cst_36 [1] : vector<40x16xf32> to vector<40xf32>
    %67 = vector.shape_cast %66 : vector<40xf32> to vector<40x1xf32>
    %68 = vector.broadcast %67 : vector<40x1xf32> to vector<40x16xf32>
    %69 = arith.subf %65, %68 : vector<40x16xf32>
    %70 = math.exp %69 : vector<40x16xf32>
    %cst_37 = arith.constant dense<0.000000e+00> : vector<40xf32>
    %71 = vector.multi_reduction <add>, %70, %cst_37 [1] : vector<40x16xf32> to vector<40xf32>
    %72 = vector.shape_cast %71 : vector<40xf32> to vector<40x1xf32>
    %73 = tpu.reciprocal %72 {approx = true} : vector<40x1xf32> -> vector<40x1xf32>
    %74 = vector.broadcast %73 : vector<40x1xf32> to vector<40x16xf32>
    %75 = arith.mulf %70, %74 : vector<40x16xf32>
    %cst_38 = arith.constant dense<0.000000e+00> : vector<40x16xf32>
    %76 = tpu.matmul %75, %62, %cst_38 {dimension_numbers = #tpu.dot_dimension_numbers<[1], [0], [0], [1], [0, 0, 1, 1], [], []>} : vector<40x16xf32>, vector<16x16xf32>, vector<40x16xf32> -> vector<40x16xf32>
    %c32 = arith.constant 32 : index
    %c0_39 = arith.constant 0 : index
    %77 = vector.load %arg8[%c32, %c0_39] : memref<64x64xf32, #tpu.memory_space<vmem>>, vector<16x64xf32>
    %cst_40 = arith.constant dense<0.000000e+00> : vector<40x64xf32>
    %78 = tpu.matmul %76, %77, %cst_40 {dimension_numbers = #tpu.dot_dimension_numbers<[1], [0], [0], [1], [0, 0, 1, 1], [], []>} : vector<40x16xf32>, vector<16x64xf32>, vector<40x64xf32> -> vector<40x64xf32>
    %79 = arith.addf %59, %78 : vector<40x64xf32>
    %80 = vector.extract_strided_slice %10 {offsets = [0, 48], sizes = [40, 16], strides = [1, 1]} : vector<40x64xf32> to vector<40x16xf32>
    %81 = vector.extract_strided_slice %15 {offsets = [0, 48], sizes = [16, 16], strides = [1, 1]} : vector<16x128xf32> to vector<16x16xf32>
    %82 = vector.extract_strided_slice %15 {offsets = [0, 112], sizes = [16, 16], strides = [1, 1]} : vector<16x128xf32> to vector<16x16xf32>
    %cst_41 = arith.constant dense<0.000000e+00> : vector<40x16xf32>
    %83 = tpu.matmul %80, %81, %cst_41 {dimension_numbers = #tpu.dot_dimension_numbers<[1], [1], [0], [0], [0, 0, 1, 0], [], []>} : vector<40x16xf32>, vector<16x16xf32>, vector<40x16xf32> -> vector<40x16xf32>
    %cst_42 = arith.constant 2.500000e-01 : f32
    %84 = vector.broadcast %cst_42 : f32 to vector<40x16xf32>
    %85 = arith.mulf %83, %84 : vector<40x16xf32>
    %cst_43 = arith.constant dense<0xFF800000> : vector<40xf32>
    %86 = vector.multi_reduction <maximumf>, %85, %cst_43 [1] : vector<40x16xf32> to vector<40xf32>
    %87 = vector.shape_cast %86 : vector<40xf32> to vector<40x1xf32>
    %88 = vector.broadcast %87 : vector<40x1xf32> to vector<40x16xf32>
    %89 = arith.subf %85, %88 : vector<40x16xf32>
    %90 = math.exp %89 : vector<40x16xf32>
    %cst_44 = arith.constant dense<0.000000e+00> : vector<40xf32>
    %91 = vector.multi_reduction <add>, %90, %cst_44 [1] : vector<40x16xf32> to vector<40xf32>
    %92 = vector.shape_cast %91 : vector<40xf32> to vector<40x1xf32>
    %93 = tpu.reciprocal %92 {approx = true} : vector<40x1xf32> -> vector<40x1xf32>
    %94 = vector.broadcast %93 : vector<40x1xf32> to vector<40x16xf32>
    %95 = arith.mulf %90, %94 : vector<40x16xf32>
    %cst_45 = arith.constant dense<0.000000e+00> : vector<40x16xf32>
    %96 = tpu.matmul %95, %82, %cst_45 {dimension_numbers = #tpu.dot_dimension_numbers<[1], [0], [0], [1], [0, 0, 1, 1], [], []>} : vector<40x16xf32>, vector<16x16xf32>, vector<40x16xf32> -> vector<40x16xf32>
    %c48 = arith.constant 48 : index
    %c0_46 = arith.constant 0 : index
    %97 = vector.load %arg8[%c48, %c0_46] : memref<64x64xf32, #tpu.memory_space<vmem>>, vector<16x64xf32>
    %cst_47 = arith.constant dense<0.000000e+00> : vector<40x64xf32>
    %98 = tpu.matmul %96, %97, %cst_47 {dimension_numbers = #tpu.dot_dimension_numbers<[1], [0], [0], [1], [0, 0, 1, 1], [], []>} : vector<40x16xf32>, vector<16x64xf32>, vector<40x64xf32> -> vector<40x64xf32>
    %99 = arith.addf %79, %98 : vector<40x64xf32>
    %100 = arith.addf %1, %99 : vector<40x64xf32>
    %c0_48 = arith.constant 0 : index
    %c0_49 = arith.constant 0 : index
    %101 = vector.load %arg10[%c0_48, %c0_49] : memref<1x64xf32, #tpu.memory_space<vmem>>, vector<1x64xf32>
    %c0_50 = arith.constant 0 : index
    %c0_51 = arith.constant 0 : index
    %102 = vector.load %arg11[%c0_50, %c0_51] : memref<1x64xf32, #tpu.memory_space<vmem>>, vector<1x64xf32>
    %cst_52 = arith.constant dense<0.000000e+00> : vector<40xf32>
    %103 = vector.multi_reduction <add>, %100, %cst_52 [1] : vector<40x64xf32> to vector<40xf32>
    %104 = vector.shape_cast %103 : vector<40xf32> to vector<40x1xf32>
    %cst_53 = arith.constant 6.400000e+01 : f32
    %105 = vector.broadcast %cst_53 : f32 to vector<40x1xf32>
    %106 = arith.divf %104, %105 : vector<40x1xf32>
    %107 = vector.broadcast %106 : vector<40x1xf32> to vector<40x64xf32>
    %108 = arith.subf %100, %107 : vector<40x64xf32>
    %109 = arith.mulf %108, %108 : vector<40x64xf32>
    %cst_54 = arith.constant dense<0.000000e+00> : vector<40xf32>
    %110 = vector.multi_reduction <add>, %109, %cst_54 [1] : vector<40x64xf32> to vector<40xf32>
    %111 = vector.shape_cast %110 : vector<40xf32> to vector<40x1xf32>
    %cst_55 = arith.constant 6.400000e+01 : f32
    %112 = vector.broadcast %cst_55 : f32 to vector<40x1xf32>
    %113 = arith.divf %111, %112 : vector<40x1xf32>
    %114 = vector.broadcast %106 : vector<40x1xf32> to vector<40x64xf32>
    %115 = arith.subf %100, %114 : vector<40x64xf32>
    %cst_56 = arith.constant 9.99999974E-6 : f32
    %116 = vector.broadcast %cst_56 : f32 to vector<40x1xf32>
    %117 = arith.addf %113, %116 : vector<40x1xf32>
    %118 = math.rsqrt %117 : vector<40x1xf32>
    %119 = vector.broadcast %118 : vector<40x1xf32> to vector<40x64xf32>
    %120 = arith.mulf %115, %119 : vector<40x64xf32>
    %121 = vector.broadcast %101 : vector<1x64xf32> to vector<40x64xf32>
    %122 = arith.mulf %120, %121 : vector<40x64xf32>
    %123 = vector.broadcast %102 : vector<1x64xf32> to vector<40x64xf32>
    %124 = arith.addf %122, %123 : vector<40x64xf32>
    %c0_57 = arith.constant 0 : index
    %c0_58 = arith.constant 0 : index
    %125 = vector.load %arg12[%c0_57, %c0_58] : memref<64x128xf32, #tpu.memory_space<vmem>>, vector<64x128xf32>
    %cst_59 = arith.constant dense<0.000000e+00> : vector<40x128xf32>
    %126 = tpu.matmul %124, %125, %cst_59 {dimension_numbers = #tpu.dot_dimension_numbers<[1], [0], [0], [1], [0, 0, 1, 1], [], []>} : vector<40x64xf32>, vector<64x128xf32>, vector<40x128xf32> -> vector<40x128xf32>
    %c0_60 = arith.constant 0 : index
    %c0_61 = arith.constant 0 : index
    %127 = vector.load %arg13[%c0_60, %c0_61] : memref<1x128xf32, #tpu.memory_space<vmem>>, vector<1x128xf32>
    %128 = vector.broadcast %127 : vector<1x128xf32> to vector<40x128xf32>
    %129 = arith.addf %126, %128 : vector<40x128xf32>
    %cst_62 = arith.constant 5.000000e-01 : f32
    %130 = vector.broadcast %cst_62 : f32 to vector<40x128xf32>
    %131 = arith.mulf %130, %129 : vector<40x128xf32>
    %cst_63 = arith.constant 0.707106769 : f32
    %132 = vector.broadcast %cst_63 : f32 to vector<40x128xf32>
    %133 = arith.mulf %129, %132 : vector<40x128xf32>
    %cst_64 = arith.constant 0.000000e+00 : f32
    %134 = vector.broadcast %cst_64 : f32 to vector<40x128xf32>
    %135 = arith.cmpf oge, %133, %134 : vector<40x128xf32>
    %cst_65 = arith.constant 1.000000e+00 : f32
    %cst_66 = arith.constant -1.000000e+00 : f32
    %136 = vector.broadcast %cst_65 : f32 to vector<40x128xf32>
    %137 = vector.broadcast %cst_66 : f32 to vector<40x128xf32>
    %138 = arith.select %135, %136, %137 : vector<40x128xi1>, vector<40x128xf32>
    %139 = math.absf %133 : vector<40x128xf32>
    %cst_67 = arith.constant 0.327591091 : f32
    %140 = vector.broadcast %cst_67 : f32 to vector<40x128xf32>
    %141 = arith.mulf %140, %139 : vector<40x128xf32>
    %cst_68 = arith.constant 1.000000e+00 : f32
    %142 = vector.broadcast %cst_68 : f32 to vector<40x128xf32>
    %143 = arith.addf %142, %141 : vector<40x128xf32>
    %cst_69 = arith.constant 1.000000e+00 : f32
    %144 = vector.broadcast %cst_69 : f32 to vector<40x128xf32>
    %145 = arith.divf %144, %143 : vector<40x128xf32>
    %cst_70 = arith.constant 1.06140542 : f32
    %146 = vector.broadcast %cst_70 : f32 to vector<40x128xf32>
    %147 = arith.mulf %146, %145 : vector<40x128xf32>
    %cst_71 = arith.constant -1.45315206 : f32
    %148 = vector.broadcast %cst_71 : f32 to vector<40x128xf32>
    %149 = arith.addf %147, %148 : vector<40x128xf32>
    %150 = arith.mulf %149, %145 : vector<40x128xf32>
    %cst_72 = arith.constant 1.42141378 : f32
    %151 = vector.broadcast %cst_72 : f32 to vector<40x128xf32>
    %152 = arith.addf %150, %151 : vector<40x128xf32>
    %153 = arith.mulf %152, %145 : vector<40x128xf32>
    %cst_73 = arith.constant -0.284496725 : f32
    %154 = vector.broadcast %cst_73 : f32 to vector<40x128xf32>
    %155 = arith.addf %153, %154 : vector<40x128xf32>
    %156 = arith.mulf %155, %145 : vector<40x128xf32>
    %cst_74 = arith.constant 0.254829586 : f32
    %157 = vector.broadcast %cst_74 : f32 to vector<40x128xf32>
    %158 = arith.addf %156, %157 : vector<40x128xf32>
    %159 = arith.mulf %158, %145 : vector<40x128xf32>
    %cst_75 = arith.constant 0.000000e+00 : f32
    %160 = vector.broadcast %cst_75 : f32 to vector<40x128xf32>
    %161 = arith.subf %160, %139 : vector<40x128xf32>
    %162 = arith.mulf %161, %139 : vector<40x128xf32>
    %163 = math.exp %162 : vector<40x128xf32>
    %164 = arith.mulf %159, %163 : vector<40x128xf32>
    %cst_76 = arith.constant 1.000000e+00 : f32
    %165 = vector.broadcast %cst_76 : f32 to vector<40x128xf32>
    %166 = arith.subf %165, %164 : vector<40x128xf32>
    %167 = arith.mulf %138, %166 : vector<40x128xf32>
    %cst_77 = arith.constant 1.000000e+00 : f32
    %168 = vector.broadcast %cst_77 : f32 to vector<40x128xf32>
    %169 = arith.addf %168, %167 : vector<40x128xf32>
    %170 = arith.mulf %131, %169 : vector<40x128xf32>
    %c0_78 = arith.constant 0 : index
    %c0_79 = arith.constant 0 : index
    %171 = vector.load %arg14[%c0_78, %c0_79] : memref<128x64xf32, #tpu.memory_space<vmem>>, vector<128x64xf32>
    %cst_80 = arith.constant dense<0.000000e+00> : vector<40x64xf32>
    %172 = tpu.matmul %170, %171, %cst_80 {dimension_numbers = #tpu.dot_dimension_numbers<[1], [0], [0], [1], [0, 0, 1, 1], [], []>} : vector<40x128xf32>, vector<128x64xf32>, vector<40x64xf32> -> vector<40x64xf32>
    %c0_81 = arith.constant 0 : index
    %c0_82 = arith.constant 0 : index
    %173 = vector.load %arg15[%c0_81, %c0_82] : memref<1x64xf32, #tpu.memory_space<vmem>>, vector<1x64xf32>
    %174 = vector.broadcast %173 : vector<1x64xf32> to vector<40x64xf32>
    %175 = arith.addf %172, %174 : vector<40x64xf32>
    %176 = arith.addf %124, %175 : vector<40x64xf32>
    %c0_83 = arith.constant 0 : index
    %c0_84 = arith.constant 0 : index
    %177 = vector.load %arg16[%c0_83, %c0_84] : memref<1x64xf32, #tpu.memory_space<vmem>>, vector<1x64xf32>
    %c0_85 = arith.constant 0 : index
    %c0_86 = arith.constant 0 : index
    %178 = vector.load %arg17[%c0_85, %c0_86] : memref<1x64xf32, #tpu.memory_space<vmem>>, vector<1x64xf32>
    %cst_87 = arith.constant dense<0.000000e+00> : vector<40xf32>
    %179 = vector.multi_reduction <add>, %176, %cst_87 [1] : vector<40x64xf32> to vector<40xf32>
    %180 = vector.shape_cast %179 : vector<40xf32> to vector<40x1xf32>
    %cst_88 = arith.constant 6.400000e+01 : f32
    %181 = vector.broadcast %cst_88 : f32 to vector<40x1xf32>
    %182 = arith.divf %180, %181 : vector<40x1xf32>
    %183 = vector.broadcast %182 : vector<40x1xf32> to vector<40x64xf32>
    %184 = arith.subf %176, %183 : vector<40x64xf32>
    %185 = arith.mulf %184, %184 : vector<40x64xf32>
    %cst_89 = arith.constant dense<0.000000e+00> : vector<40xf32>
    %186 = vector.multi_reduction <add>, %185, %cst_89 [1] : vector<40x64xf32> to vector<40xf32>
    %187 = vector.shape_cast %186 : vector<40xf32> to vector<40x1xf32>
    %cst_90 = arith.constant 6.400000e+01 : f32
    %188 = vector.broadcast %cst_90 : f32 to vector<40x1xf32>
    %189 = arith.divf %187, %188 : vector<40x1xf32>
    %190 = vector.broadcast %182 : vector<40x1xf32> to vector<40x64xf32>
    %191 = arith.subf %176, %190 : vector<40x64xf32>
    %cst_91 = arith.constant 9.99999974E-6 : f32
    %192 = vector.broadcast %cst_91 : f32 to vector<40x1xf32>
    %193 = arith.addf %189, %192 : vector<40x1xf32>
    %194 = math.rsqrt %193 : vector<40x1xf32>
    %195 = vector.broadcast %194 : vector<40x1xf32> to vector<40x64xf32>
    %196 = arith.mulf %191, %195 : vector<40x64xf32>
    %197 = vector.broadcast %177 : vector<1x64xf32> to vector<40x64xf32>
    %198 = arith.mulf %196, %197 : vector<40x64xf32>
    %199 = vector.broadcast %178 : vector<1x64xf32> to vector<40x64xf32>
    %200 = arith.addf %198, %199 : vector<40x64xf32>
    %c0_92 = arith.constant 0 : index
    %c0_93 = arith.constant 0 : index
    %c0_94 = arith.constant 0 : index
    %201 = vector.load %arg18[%c0_92, %c0_93, %c0_94] : memref<1x40x64xf32, #tpu.memory_space<vmem>>, vector<1x40x64xf32>
    %202 = vector.shape_cast %201 : vector<1x40x64xf32> to vector<40x64xf32>
    %203 = vector.shape_cast %200 : vector<40x64xf32> to vector<1x40x64xf32>
    tpu.vector_store %arg18[%c0_92, %c0_93, %c0_94], %203 {strides = array<i32>} : memref<1x40x64xf32, #tpu.memory_space<vmem>>, vector<1x40x64xf32>,
    return
  }
  func.func @transform_0(%arg0: i32) -> (i32, i32, i32) {
    %c0_i32 = arith.constant 0 : i32
    %c0_i32_0 = arith.constant 0 : i32
    %c0_i32_1 = arith.constant 0 : i32
    return %arg0, %c0_i32, %c0_i32_0 : i32, i32, i32
  }
  func.func @transform_1(%arg0: i32) -> (i32, i32, i32) {
    %c0_i32 = arith.constant 0 : i32
    %c0_i32_0 = arith.constant 0 : i32
    %c0_i32_1 = arith.constant 0 : i32
    return %arg0, %c0_i32, %c0_i32_0 : i32, i32, i32
  }
  func.func @transform_2(%arg0: i32) -> (i32, i32) {
    %c0_i32 = arith.constant 0 : i32
    %c0_i32_0 = arith.constant 0 : i32
    %c0_i32_1 = arith.constant 0 : i32
    return %c0_i32, %c0_i32_0 : i32, i32
  }
  func.func @transform_3(%arg0: i32) -> (i32, i32) {
    %c0_i32 = arith.constant 0 : i32
    %c0_i32_0 = arith.constant 0 : i32
    %c0_i32_1 = arith.constant 0 : i32
    return %c0_i32, %c0_i32_0 : i32, i32
  }
  func.func @transform_4(%arg0: i32) -> (i32, i32) {
    %c0_i32 = arith.constant 0 : i32
    %c0_i32_0 = arith.constant 0 : i32
    %c0_i32_1 = arith.constant 0 : i32
    return %c0_i32, %c0_i32_0 : i32, i32
  }
  func.func @transform_5(%arg0: i32) -> (i32, i32) {
    %c0_i32 = arith.constant 0 : i32
    %c0_i32_0 = arith.constant 0 : i32
    %c0_i32_1 = arith.constant 0 : i32
    return %c0_i32, %c0_i32_0 : i32, i32
  }
  func.func @transform_6(%arg0: i32) -> (i32, i32) {
    %c0_i32 = arith.constant 0 : i32
    %c0_i32_0 = arith.constant 0 : i32
    %c0_i32_1 = arith.constant 0 : i32
    return %c0_i32, %c0_i32_0 : i32, i32
  }
  func.func @transform_7(%arg0: i32) -> (i32, i32) {
    %c0_i32 = arith.constant 0 : i32
    %c0_i32_0 = arith.constant 0 : i32
    %c0_i32_1 = arith.constant 0 : i32
    return %c0_i32, %c0_i32_0 : i32, i32
  }
  func.func @transform_8(%arg0: i32) -> (i32, i32) {
    %c0_i32 = arith.constant 0 : i32
    %c0_i32_0 = arith.constant 0 : i32
    %c0_i32_1 = arith.constant 0 : i32
    return %c0_i32, %c0_i32_0 : i32, i32
  }
  func.func @transform_9(%arg0: i32) -> (i32, i32) {
    %c0_i32 = arith.constant 0 : i32
    %c0_i32_0 = arith.constant 0 : i32
    %c0_i32_1 = arith.constant 0 : i32
    return %c0_i32, %c0_i32_0 : i32, i32
  }
  func.func @transform_10(%arg0: i32) -> (i32, i32) {
    %c0_i32 = arith.constant 0 : i32
    %c0_i32_0 = arith.constant 0 : i32
    %c0_i32_1 = arith.constant 0 : i32
    return %c0_i32, %c0_i32_0 : i32, i32
  }
  func.func @transform_11(%arg0: i32) -> (i32, i32) {
    %c0_i32 = arith.constant 0 : i32
    %c0_i32_0 = arith.constant 0 : i32
    %c0_i32_1 = arith.constant 0 : i32
    return %c0_i32, %c0_i32_0 : i32, i32
  }
  func.func @transform_12(%arg0: i32) -> (i32, i32) {
    %c0_i32 = arith.constant 0 : i32
    %c0_i32_0 = arith.constant 0 : i32
    %c0_i32_1 = arith.constant 0 : i32
    return %c0_i32, %c0_i32_0 : i32, i32
  }
  func.func @transform_13(%arg0: i32) -> (i32, i32) {
    %c0_i32 = arith.constant 0 : i32
    %c0_i32_0 = arith.constant 0 : i32
    %c0_i32_1 = arith.constant 0 : i32
    return %c0_i32, %c0_i32_0 : i32, i32
  }
  func.func @transform_14(%arg0: i32) -> (i32, i32) {
    %c0_i32 = arith.constant 0 : i32
    %c0_i32_0 = arith.constant 0 : i32
    %c0_i32_1 = arith.constant 0 : i32
    return %c0_i32, %c0_i32_0 : i32, i32
  }
  func.func @transform_15(%arg0: i32) -> (i32, i32) {
    %c0_i32 = arith.constant 0 : i32
    %c0_i32_0 = arith.constant 0 : i32
    %c0_i32_1 = arith.constant 0 : i32
    return %c0_i32, %c0_i32_0 : i32, i32
  }
  func.func @transform_16(%arg0: i32) -> (i32, i32) {
    %c0_i32 = arith.constant 0 : i32
    %c0_i32_0 = arith.constant 0 : i32
    %c0_i32_1 = arith.constant 0 : i32
    return %c0_i32, %c0_i32_0 : i32, i32
  }
  func.func @transform_17(%arg0: i32) -> (i32, i32, i32) {
    %c0_i32 = arith.constant 0 : i32
    %c0_i32_0 = arith.constant 0 : i32
    %c0_i32_1 = arith.constant 0 : i32
    return %arg0, %c0_i32, %c0_i32_0 : i32, i32, i32
  }
}

module attributes {stable_mosaic.version = 11 : i64} {
  func.func @_tail_kernel(%arg0: i32, %arg1: memref<1x40x64xf32, #tpu.memory_space<vmem>>, %arg2: memref<64x32xf32, #tpu.memory_space<vmem>>, %arg3: memref<1x32xf32, #tpu.memory_space<vmem>>, %arg4: memref<3x3x32x32xf32, #tpu.memory_space<vmem>>, %arg5: memref<3x1x32xf32, #tpu.memory_space<vmem>>, %arg6: memref<5x8x42xf32, #tpu.memory_space<vmem>>, %arg7: memref<5x2x10xf32, #tpu.memory_space<vmem>>, %arg8: memref<2x1x2xf32, #tpu.memory_space<vmem>>, %arg9: memref<32x14xf32, #tpu.memory_space<vmem>>, %arg10: memref<1x14xf32, #tpu.memory_space<vmem>>, %arg11: memref<1x1x14xf32, #tpu.memory_space<vmem>>, %arg12: memref<44x32xf32, #tpu.memory_space<vmem>>) attributes {dimension_semantics = [#tpu.dimension_semantics<parallel>], iteration_bounds = array<i64: 2>, scalar_prefetch = 0 : i64, scratch_operands = 1 : i64, tpu.core_type = #tpu.core_type<tc>, window_params = [{transform_indices = @transform_0, window_bounds = array<i64: 1, 40, 64>}, {pipeline_mode = #tpu.pipeline_mode<synchronous>, transform_indices = @transform_1, window_bounds = array<i64: 64, 32>}, {pipeline_mode = #tpu.pipeline_mode<synchronous>, transform_indices = @transform_2, window_bounds = array<i64: 1, 32>}, {pipeline_mode = #tpu.pipeline_mode<synchronous>, transform_indices = @transform_3, window_bounds = array<i64: 3, 3, 32, 32>}, {pipeline_mode = #tpu.pipeline_mode<synchronous>, transform_indices = @transform_4, window_bounds = array<i64: 3, 1, 32>}, {pipeline_mode = #tpu.pipeline_mode<synchronous>, transform_indices = @transform_5, window_bounds = array<i64: 5, 8, 42>}, {pipeline_mode = #tpu.pipeline_mode<synchronous>, transform_indices = @transform_6, window_bounds = array<i64: 5, 2, 10>}, {pipeline_mode = #tpu.pipeline_mode<synchronous>, transform_indices = @transform_7, window_bounds = array<i64: 2, 1, 2>}, {pipeline_mode = #tpu.pipeline_mode<synchronous>, transform_indices = @transform_8, window_bounds = array<i64: 32, 14>}, {pipeline_mode = #tpu.pipeline_mode<synchronous>, transform_indices = @transform_9, window_bounds = array<i64: 1, 14>}, {transform_indices = @transform_10, window_bounds = array<i64: 1, 1, 14>}]} {
    %c0 = arith.constant 0 : index
    %c0_0 = arith.constant 0 : index
    %c0_1 = arith.constant 0 : index
    %0 = vector.load %arg1[%c0, %c0_0, %c0_1] : memref<1x40x64xf32, #tpu.memory_space<vmem>>, vector<1x40x64xf32>
    %1 = vector.shape_cast %0 : vector<1x40x64xf32> to vector<40x64xf32>
    %c0_2 = arith.constant 0 : index
    %c0_3 = arith.constant 0 : index
    %2 = vector.load %arg2[%c0_2, %c0_3] : memref<64x32xf32, #tpu.memory_space<vmem>>, vector<64x32xf32>
    %cst = arith.constant dense<0.000000e+00> : vector<40x32xf32>
    %3 = tpu.matmul %1, %2, %cst {dimension_numbers = #tpu.dot_dimension_numbers<[1], [0], [0], [1], [0, 0, 1, 1], [], []>} : vector<40x64xf32>, vector<64x32xf32>, vector<40x32xf32> -> vector<40x32xf32>
    %c0_4 = arith.constant 0 : index
    %c0_5 = arith.constant 0 : index
    %4 = vector.load %arg3[%c0_4, %c0_5] : memref<1x32xf32, #tpu.memory_space<vmem>>, vector<1x32xf32>
    %5 = vector.broadcast %4 : vector<1x32xf32> to vector<40x32xf32>
    %6 = arith.addf %3, %5 : vector<40x32xf32>
    %cst_6 = arith.constant 0.000000e+00 : f32
    %7 = vector.broadcast %cst_6 : f32 to vector<44x32xf32>
    %c0_7 = arith.constant 0 : index
    %c0_8 = arith.constant 0 : index
    %8 = vector.load %arg12[%c0_7, %c0_8] : memref<44x32xf32, #tpu.memory_space<vmem>>, vector<44x32xf32>
    tpu.vector_store %arg12[%c0_7, %c0_8], %7 {strides = array<i32>} : memref<44x32xf32, #tpu.memory_space<vmem>>, vector<44x32xf32>,
    %c2 = arith.constant 2 : index
    %c0_9 = arith.constant 0 : index
    %9 = vector.load %arg12[%c2, %c0_9] : memref<44x32xf32, #tpu.memory_space<vmem>>, vector<40x32xf32>
    tpu.vector_store %arg12[%c2, %c0_9], %6 {strides = array<i32>} : memref<44x32xf32, #tpu.memory_space<vmem>>, vector<40x32xf32>,
    %cst_10 = arith.constant 0.000000e+00 : f32
    %10 = vector.broadcast %cst_10 : f32 to vector<42x32xf32>
    %c0_11 = arith.constant 0 : index
    %c0_12 = arith.constant 0 : index
    %11 = vector.load %arg12[%c0_11, %c0_12] : memref<44x32xf32, #tpu.memory_space<vmem>>, vector<42x32xf32>
    %c0_13 = arith.constant 0 : index
    %c0_14 = arith.constant 0 : index
    %c0_15 = arith.constant 0 : index
    %c0_16 = arith.constant 0 : index
    %12 = vector.load %arg4[%c0_13, %c0_14, %c0_15, %c0_16] : memref<3x3x32x32xf32, #tpu.memory_space<vmem>>, vector<1x1x32x32xf32>
    %13 = vector.shape_cast %12 : vector<1x1x32x32xf32> to vector<32x32xf32>
    %cst_17 = arith.constant dense<0.000000e+00> : vector<42x32xf32>
    %14 = tpu.matmul %11, %13, %cst_17 {dimension_numbers = #tpu.dot_dimension_numbers<[1], [0], [0], [1], [0, 0, 1, 1], [], []>} : vector<42x32xf32>, vector<32x32xf32>, vector<42x32xf32> -> vector<42x32xf32>
    %15 = arith.addf %10, %14 : vector<42x32xf32>
    %c1 = arith.constant 1 : index
    %c0_18 = arith.constant 0 : index
    %16 = vector.load %arg12[%c1, %c0_18] : memref<44x32xf32, #tpu.memory_space<vmem>>, vector<42x32xf32>
    %c0_19 = arith.constant 0 : index
    %c1_20 = arith.constant 1 : index
    %c0_21 = arith.constant 0 : index
    %c0_22 = arith.constant 0 : index
    %17 = vector.load %arg4[%c0_19, %c1_20, %c0_21, %c0_22] : memref<3x3x32x32xf32, #tpu.memory_space<vmem>>, vector<1x1x32x32xf32>
    %18 = vector.shape_cast %17 : vector<1x1x32x32xf32> to vector<32x32xf32>
    %cst_23 = arith.constant dense<0.000000e+00> : vector<42x32xf32>
    %19 = tpu.matmul %16, %18, %cst_23 {dimension_numbers = #tpu.dot_dimension_numbers<[1], [0], [0], [1], [0, 0, 1, 1], [], []>} : vector<42x32xf32>, vector<32x32xf32>, vector<42x32xf32> -> vector<42x32xf32>
    %20 = arith.addf %15, %19 : vector<42x32xf32>
    %c2_24 = arith.constant 2 : index
    %c0_25 = arith.constant 0 : index
    %21 = vector.load %arg12[%c2_24, %c0_25] : memref<44x32xf32, #tpu.memory_space<vmem>>, vector<42x32xf32>
    %c0_26 = arith.constant 0 : index
    %c2_27 = arith.constant 2 : index
    %c0_28 = arith.constant 0 : index
    %c0_29 = arith.constant 0 : index
    %22 = vector.load %arg4[%c0_26, %c2_27, %c0_28, %c0_29] : memref<3x3x32x32xf32, #tpu.memory_space<vmem>>, vector<1x1x32x32xf32>
    %23 = vector.shape_cast %22 : vector<1x1x32x32xf32> to vector<32x32xf32>
    %cst_30 = arith.constant dense<0.000000e+00> : vector<42x32xf32>
    %24 = tpu.matmul %21, %23, %cst_30 {dimension_numbers = #tpu.dot_dimension_numbers<[1], [0], [0], [1], [0, 0, 1, 1], [], []>} : vector<42x32xf32>, vector<32x32xf32>, vector<42x32xf32> -> vector<42x32xf32>
    %25 = arith.addf %20, %24 : vector<42x32xf32>
    %c0_31 = arith.constant 0 : index
    %c0_32 = arith.constant 0 : index
    %c0_33 = arith.constant 0 : index
    %26 = vector.load %arg5[%c0_31, %c0_32, %c0_33] : memref<3x1x32xf32, #tpu.memory_space<vmem>>, vector<1x1x32xf32>
    %27 = vector.shape_cast %26 : vector<1x1x32xf32> to vector<1x32xf32>
    %28 = vector.broadcast %27 : vector<1x32xf32> to vector<42x32xf32>
    %29 = arith.addf %25, %28 : vector<42x32xf32>
    %cst_34 = arith.constant 0.000000e+00 : f32
    %30 = vector.broadcast %cst_34 : f32 to vector<42x32xf32>
    %31 = arith.maximumf %29, %30 : vector<42x32xf32>
    %c0_35 = arith.constant 0 : index
    %c0_36 = arith.constant 0 : index
    %c0_37 = arith.constant 0 : index
    %32 = vector.load %arg6[%c0_35, %c0_36, %c0_37] : memref<5x8x42xf32, #tpu.memory_space<vmem>>, vector<1x8x42xf32>
    %33 = vector.shape_cast %32 : vector<1x8x42xf32> to vector<8x42xf32>
    %cst_38 = arith.constant dense<0.000000e+00> : vector<8x32xf32>
    %34 = tpu.matmul %33, %31, %cst_38 {dimension_numbers = #tpu.dot_dimension_numbers<[1], [0], [0], [1], [0, 0, 1, 1], [], []>} : vector<8x42xf32>, vector<42x32xf32>, vector<8x32xf32> -> vector<8x32xf32>
    %c1_39 = arith.constant 1 : index
    %c0_40 = arith.constant 0 : index
    %c0_41 = arith.constant 0 : index
    %35 = vector.load %arg6[%c1_39, %c0_40, %c0_41] : memref<5x8x42xf32, #tpu.memory_space<vmem>>, vector<1x8x42xf32>
    %36 = vector.shape_cast %35 : vector<1x8x42xf32> to vector<8x42xf32>
    %cst_42 = arith.constant dense<0.000000e+00> : vector<8x32xf32>
    %37 = tpu.matmul %36, %31, %cst_42 {dimension_numbers = #tpu.dot_dimension_numbers<[1], [0], [0], [1], [0, 0, 1, 1], [], []>} : vector<8x42xf32>, vector<42x32xf32>, vector<8x32xf32> -> vector<8x32xf32>
    %38 = arith.maximumf %34, %37 : vector<8x32xf32>
    %c2_43 = arith.constant 2 : index
    %c0_44 = arith.constant 0 : index
    %c0_45 = arith.constant 0 : index
    %39 = vector.load %arg6[%c2_43, %c0_44, %c0_45] : memref<5x8x42xf32, #tpu.memory_space<vmem>>, vector<1x8x42xf32>
    %40 = vector.shape_cast %39 : vector<1x8x42xf32> to vector<8x42xf32>
    %cst_46 = arith.constant dense<0.000000e+00> : vector<8x32xf32>
    %41 = tpu.matmul %40, %31, %cst_46 {dimension_numbers = #tpu.dot_dimension_numbers<[1], [0], [0], [1], [0, 0, 1, 1], [], []>} : vector<8x42xf32>, vector<42x32xf32>, vector<8x32xf32> -> vector<8x32xf32>
    %42 = arith.maximumf %38, %41 : vector<8x32xf32>
    %c3 = arith.constant 3 : index
    %c0_47 = arith.constant 0 : index
    %c0_48 = arith.constant 0 : index
    %43 = vector.load %arg6[%c3, %c0_47, %c0_48] : memref<5x8x42xf32, #tpu.memory_space<vmem>>, vector<1x8x42xf32>
    %44 = vector.shape_cast %43 : vector<1x8x42xf32> to vector<8x42xf32>
    %cst_49 = arith.constant dense<0.000000e+00> : vector<8x32xf32>
    %45 = tpu.matmul %44, %31, %cst_49 {dimension_numbers = #tpu.dot_dimension_numbers<[1], [0], [0], [1], [0, 0, 1, 1], [], []>} : vector<8x42xf32>, vector<42x32xf32>, vector<8x32xf32> -> vector<8x32xf32>
    %46 = arith.maximumf %42, %45 : vector<8x32xf32>
    %c4 = arith.constant 4 : index
    %c0_50 = arith.constant 0 : index
    %c0_51 = arith.constant 0 : index
    %47 = vector.load %arg6[%c4, %c0_50, %c0_51] : memref<5x8x42xf32, #tpu.memory_space<vmem>>, vector<1x8x42xf32>
    %48 = vector.shape_cast %47 : vector<1x8x42xf32> to vector<8x42xf32>
    %cst_52 = arith.constant dense<0.000000e+00> : vector<8x32xf32>
    %49 = tpu.matmul %48, %31, %cst_52 {dimension_numbers = #tpu.dot_dimension_numbers<[1], [0], [0], [1], [0, 0, 1, 1], [], []>} : vector<8x42xf32>, vector<42x32xf32>, vector<8x32xf32> -> vector<8x32xf32>
    %50 = arith.maximumf %46, %49 : vector<8x32xf32>
    %cst_53 = arith.constant 0.000000e+00 : f32
    %51 = vector.broadcast %cst_53 : f32 to vector<12x32xf32>
    %c0_54 = arith.constant 0 : index
    %c0_55 = arith.constant 0 : index
    %52 = vector.load %arg12[%c0_54, %c0_55] : memref<44x32xf32, #tpu.memory_space<vmem>>, vector<12x32xf32>
    tpu.vector_store %arg12[%c0_54, %c0_55], %51 {strides = array<i32>} : memref<44x32xf32, #tpu.memory_space<vmem>>, vector<12x32xf32>,
    %c2_56 = arith.constant 2 : index
    %c0_57 = arith.constant 0 : index
    %53 = vector.load %arg12[%c2_56, %c0_57] : memref<44x32xf32, #tpu.memory_space<vmem>>, vector<8x32xf32>
    tpu.vector_store %arg12[%c2_56, %c0_57], %50 {strides = array<i32>} : memref<44x32xf32, #tpu.memory_space<vmem>>, vector<8x32xf32>,
    %cst_58 = arith.constant 0.000000e+00 : f32
    %54 = vector.broadcast %cst_58 : f32 to vector<10x32xf32>
    %c0_59 = arith.constant 0 : index
    %c0_60 = arith.constant 0 : index
    %55 = vector.load %arg12[%c0_59, %c0_60] : memref<44x32xf32, #tpu.memory_space<vmem>>, vector<10x32xf32>
    %c1_61 = arith.constant 1 : index
    %c0_62 = arith.constant 0 : index
    %c0_63 = arith.constant 0 : index
    %c0_64 = arith.constant 0 : index
    %56 = vector.load %arg4[%c1_61, %c0_62, %c0_63, %c0_64] : memref<3x3x32x32xf32, #tpu.memory_space<vmem>>, vector<1x1x32x32xf32>
    %57 = vector.shape_cast %56 : vector<1x1x32x32xf32> to vector<32x32xf32>
    %cst_65 = arith.constant dense<0.000000e+00> : vector<10x32xf32>
    %58 = tpu.matmul %55, %57, %cst_65 {dimension_numbers = #tpu.dot_dimension_numbers<[1], [0], [0], [1], [0, 0, 1, 1], [], []>} : vector<10x32xf32>, vector<32x32xf32>, vector<10x32xf32> -> vector<10x32xf32>
    %59 = arith.addf %54, %58 : vector<10x32xf32>
    %c1_66 = arith.constant 1 : index
    %c0_67 = arith.constant 0 : index
    %60 = vector.load %arg12[%c1_66, %c0_67] : memref<44x32xf32, #tpu.memory_space<vmem>>, vector<10x32xf32>
    %c1_68 = arith.constant 1 : index
    %c1_69 = arith.constant 1 : index
    %c0_70 = arith.constant 0 : index
    %c0_71 = arith.constant 0 : index
    %61 = vector.load %arg4[%c1_68, %c1_69, %c0_70, %c0_71] : memref<3x3x32x32xf32, #tpu.memory_space<vmem>>, vector<1x1x32x32xf32>
    %62 = vector.shape_cast %61 : vector<1x1x32x32xf32> to vector<32x32xf32>
    %cst_72 = arith.constant dense<0.000000e+00> : vector<10x32xf32>
    %63 = tpu.matmul %60, %62, %cst_72 {dimension_numbers = #tpu.dot_dimension_numbers<[1], [0], [0], [1], [0, 0, 1, 1], [], []>} : vector<10x32xf32>, vector<32x32xf32>, vector<10x32xf32> -> vector<10x32xf32>
    %64 = arith.addf %59, %63 : vector<10x32xf32>
    %c2_73 = arith.constant 2 : index
    %c0_74 = arith.constant 0 : index
    %65 = vector.load %arg12[%c2_73, %c0_74] : memref<44x32xf32, #tpu.memory_space<vmem>>, vector<10x32xf32>
    %c1_75 = arith.constant 1 : index
    %c2_76 = arith.constant 2 : index
    %c0_77 = arith.constant 0 : index
    %c0_78 = arith.constant 0 : index
    %66 = vector.load %arg4[%c1_75, %c2_76, %c0_77, %c0_78] : memref<3x3x32x32xf32, #tpu.memory_space<vmem>>, vector<1x1x32x32xf32>
    %67 = vector.shape_cast %66 : vector<1x1x32x32xf32> to vector<32x32xf32>
    %cst_79 = arith.constant dense<0.000000e+00> : vector<10x32xf32>
    %68 = tpu.matmul %65, %67, %cst_79 {dimension_numbers = #tpu.dot_dimension_numbers<[1], [0], [0], [1], [0, 0, 1, 1], [], []>} : vector<10x32xf32>, vector<32x32xf32>, vector<10x32xf32> -> vector<10x32xf32>
    %69 = arith.addf %64, %68 : vector<10x32xf32>
    %c1_80 = arith.constant 1 : index
    %c0_81 = arith.constant 0 : index
    %c0_82 = arith.constant 0 : index
    %70 = vector.load %arg5[%c1_80, %c0_81, %c0_82] : memref<3x1x32xf32, #tpu.memory_space<vmem>>, vector<1x1x32xf32>
    %71 = vector.shape_cast %70 : vector<1x1x32xf32> to vector<1x32xf32>
    %72 = vector.broadcast %71 : vector<1x32xf32> to vector<10x32xf32>
    %73 = arith.addf %69, %72 : vector<10x32xf32>
    %cst_83 = arith.constant 0.000000e+00 : f32
    %74 = vector.broadcast %cst_83 : f32 to vector<10x32xf32>
    %75 = arith.maximumf %73, %74 : vector<10x32xf32>
    %c0_84 = arith.constant 0 : index
    %c0_85 = arith.constant 0 : index
    %c0_86 = arith.constant 0 : index
    %76 = vector.load %arg7[%c0_84, %c0_85, %c0_86] : memref<5x2x10xf32, #tpu.memory_space<vmem>>, vector<1x2x10xf32>
    %77 = vector.shape_cast %76 : vector<1x2x10xf32> to vector<2x10xf32>
    %cst_87 = arith.constant dense<0.000000e+00> : vector<2x32xf32>
    %78 = tpu.matmul %77, %75, %cst_87 {dimension_numbers = #tpu.dot_dimension_numbers<[1], [0], [0], [1], [0, 0, 1, 1], [], []>} : vector<2x10xf32>, vector<10x32xf32>, vector<2x32xf32> -> vector<2x32xf32>
    %c1_88 = arith.constant 1 : index
    %c0_89 = arith.constant 0 : index
    %c0_90 = arith.constant 0 : index
    %79 = vector.load %arg7[%c1_88, %c0_89, %c0_90] : memref<5x2x10xf32, #tpu.memory_space<vmem>>, vector<1x2x10xf32>
    %80 = vector.shape_cast %79 : vector<1x2x10xf32> to vector<2x10xf32>
    %cst_91 = arith.constant dense<0.000000e+00> : vector<2x32xf32>
    %81 = tpu.matmul %80, %75, %cst_91 {dimension_numbers = #tpu.dot_dimension_numbers<[1], [0], [0], [1], [0, 0, 1, 1], [], []>} : vector<2x10xf32>, vector<10x32xf32>, vector<2x32xf32> -> vector<2x32xf32>
    %82 = arith.maximumf %78, %81 : vector<2x32xf32>
    %c2_92 = arith.constant 2 : index
    %c0_93 = arith.constant 0 : index
    %c0_94 = arith.constant 0 : index
    %83 = vector.load %arg7[%c2_92, %c0_93, %c0_94] : memref<5x2x10xf32, #tpu.memory_space<vmem>>, vector<1x2x10xf32>
    %84 = vector.shape_cast %83 : vector<1x2x10xf32> to vector<2x10xf32>
    %cst_95 = arith.constant dense<0.000000e+00> : vector<2x32xf32>
    %85 = tpu.matmul %84, %75, %cst_95 {dimension_numbers = #tpu.dot_dimension_numbers<[1], [0], [0], [1], [0, 0, 1, 1], [], []>} : vector<2x10xf32>, vector<10x32xf32>, vector<2x32xf32> -> vector<2x32xf32>
    %86 = arith.maximumf %82, %85 : vector<2x32xf32>
    %c3_96 = arith.constant 3 : index
    %c0_97 = arith.constant 0 : index
    %c0_98 = arith.constant 0 : index
    %87 = vector.load %arg7[%c3_96, %c0_97, %c0_98] : memref<5x2x10xf32, #tpu.memory_space<vmem>>, vector<1x2x10xf32>
    %88 = vector.shape_cast %87 : vector<1x2x10xf32> to vector<2x10xf32>
    %cst_99 = arith.constant dense<0.000000e+00> : vector<2x32xf32>
    %89 = tpu.matmul %88, %75, %cst_99 {dimension_numbers = #tpu.dot_dimension_numbers<[1], [0], [0], [1], [0, 0, 1, 1], [], []>} : vector<2x10xf32>, vector<10x32xf32>, vector<2x32xf32> -> vector<2x32xf32>
    %90 = arith.maximumf %86, %89 : vector<2x32xf32>
    %c4_100 = arith.constant 4 : index
    %c0_101 = arith.constant 0 : index
    %c0_102 = arith.constant 0 : index
    %91 = vector.load %arg7[%c4_100, %c0_101, %c0_102] : memref<5x2x10xf32, #tpu.memory_space<vmem>>, vector<1x2x10xf32>
    %92 = vector.shape_cast %91 : vector<1x2x10xf32> to vector<2x10xf32>
    %cst_103 = arith.constant dense<0.000000e+00> : vector<2x32xf32>
    %93 = tpu.matmul %92, %75, %cst_103 {dimension_numbers = #tpu.dot_dimension_numbers<[1], [0], [0], [1], [0, 0, 1, 1], [], []>} : vector<2x10xf32>, vector<10x32xf32>, vector<2x32xf32> -> vector<2x32xf32>
    %94 = arith.maximumf %90, %93 : vector<2x32xf32>
    %cst_104 = arith.constant 0.000000e+00 : f32
    %95 = vector.broadcast %cst_104 : f32 to vector<4x32xf32>
    %c0_105 = arith.constant 0 : index
    %c0_106 = arith.constant 0 : index
    %96 = vector.load %arg12[%c0_105, %c0_106] : memref<44x32xf32, #tpu.memory_space<vmem>>, vector<4x32xf32>
    tpu.vector_store %arg12[%c0_105, %c0_106], %95 {strides = array<i32>} : memref<44x32xf32, #tpu.memory_space<vmem>>, vector<4x32xf32>,
    %c1_107 = arith.constant 1 : index
    %c0_108 = arith.constant 0 : index
    %97 = vector.load %arg12[%c1_107, %c0_108] : memref<44x32xf32, #tpu.memory_space<vmem>>, vector<2x32xf32>
    tpu.vector_store %arg12[%c1_107, %c0_108], %94 {strides = array<i32>} : memref<44x32xf32, #tpu.memory_space<vmem>>, vector<2x32xf32>,
    %cst_109 = arith.constant 0.000000e+00 : f32
    %98 = vector.broadcast %cst_109 : f32 to vector<2x32xf32>
    %c0_110 = arith.constant 0 : index
    %c0_111 = arith.constant 0 : index
    %99 = vector.load %arg12[%c0_110, %c0_111] : memref<44x32xf32, #tpu.memory_space<vmem>>, vector<2x32xf32>
    %c2_112 = arith.constant 2 : index
    %c0_113 = arith.constant 0 : index
    %c0_114 = arith.constant 0 : index
    %c0_115 = arith.constant 0 : index
    %100 = vector.load %arg4[%c2_112, %c0_113, %c0_114, %c0_115] : memref<3x3x32x32xf32, #tpu.memory_space<vmem>>, vector<1x1x32x32xf32>
    %101 = vector.shape_cast %100 : vector<1x1x32x32xf32> to vector<32x32xf32>
    %cst_116 = arith.constant dense<0.000000e+00> : vector<2x32xf32>
    %102 = tpu.matmul %99, %101, %cst_116 {dimension_numbers = #tpu.dot_dimension_numbers<[1], [0], [0], [1], [0, 0, 1, 1], [], []>} : vector<2x32xf32>, vector<32x32xf32>, vector<2x32xf32> -> vector<2x32xf32>
    %103 = arith.addf %98, %102 : vector<2x32xf32>
    %c1_117 = arith.constant 1 : index
    %c0_118 = arith.constant 0 : index
    %104 = vector.load %arg12[%c1_117, %c0_118] : memref<44x32xf32, #tpu.memory_space<vmem>>, vector<2x32xf32>
    %c2_119 = arith.constant 2 : index
    %c1_120 = arith.constant 1 : index
    %c0_121 = arith.constant 0 : index
    %c0_122 = arith.constant 0 : index
    %105 = vector.load %arg4[%c2_119, %c1_120, %c0_121, %c0_122] : memref<3x3x32x32xf32, #tpu.memory_space<vmem>>, vector<1x1x32x32xf32>
    %106 = vector.shape_cast %105 : vector<1x1x32x32xf32> to vector<32x32xf32>
    %cst_123 = arith.constant dense<0.000000e+00> : vector<2x32xf32>
    %107 = tpu.matmul %104, %106, %cst_123 {dimension_numbers = #tpu.dot_dimension_numbers<[1], [0], [0], [1], [0, 0, 1, 1], [], []>} : vector<2x32xf32>, vector<32x32xf32>, vector<2x32xf32> -> vector<2x32xf32>
    %108 = arith.addf %103, %107 : vector<2x32xf32>
    %c2_124 = arith.constant 2 : index
    %c0_125 = arith.constant 0 : index
    %109 = vector.load %arg12[%c2_124, %c0_125] : memref<44x32xf32, #tpu.memory_space<vmem>>, vector<2x32xf32>
    %c2_126 = arith.constant 2 : index
    %c2_127 = arith.constant 2 : index
    %c0_128 = arith.constant 0 : index
    %c0_129 = arith.constant 0 : index
    %110 = vector.load %arg4[%c2_126, %c2_127, %c0_128, %c0_129] : memref<3x3x32x32xf32, #tpu.memory_space<vmem>>, vector<1x1x32x32xf32>
    %111 = vector.shape_cast %110 : vector<1x1x32x32xf32> to vector<32x32xf32>
    %cst_130 = arith.constant dense<0.000000e+00> : vector<2x32xf32>
    %112 = tpu.matmul %109, %111, %cst_130 {dimension_numbers = #tpu.dot_dimension_numbers<[1], [0], [0], [1], [0, 0, 1, 1], [], []>} : vector<2x32xf32>, vector<32x32xf32>, vector<2x32xf32> -> vector<2x32xf32>
    %113 = arith.addf %108, %112 : vector<2x32xf32>
    %c2_131 = arith.constant 2 : index
    %c0_132 = arith.constant 0 : index
    %c0_133 = arith.constant 0 : index
    %114 = vector.load %arg5[%c2_131, %c0_132, %c0_133] : memref<3x1x32xf32, #tpu.memory_space<vmem>>, vector<1x1x32xf32>
    %115 = vector.shape_cast %114 : vector<1x1x32xf32> to vector<1x32xf32>
    %116 = vector.broadcast %115 : vector<1x32xf32> to vector<2x32xf32>
    %117 = arith.addf %113, %116 : vector<2x32xf32>
    %cst_134 = arith.constant 0.000000e+00 : f32
    %118 = vector.broadcast %cst_134 : f32 to vector<2x32xf32>
    %119 = arith.maximumf %117, %118 : vector<2x32xf32>
    %cst_135 = arith.constant dense<0xFF800000> : vector<32xf32>
    %120 = vector.multi_reduction <maximumf>, %119, %cst_135 [0] : vector<2x32xf32> to vector<32xf32>
    %121 = vector.shape_cast %120 : vector<32xf32> to vector<1x32xf32>
    %cst_136 = arith.constant dense<0.000000e+00> : vector<32xf32>
    %122 = vector.multi_reduction <add>, %121, %cst_136 [0] : vector<1x32xf32> to vector<32xf32>
    %123 = vector.shape_cast %122 : vector<32xf32> to vector<1x32xf32>
    %cst_137 = arith.constant 1.000000e+00 : f32
    %124 = vector.broadcast %cst_137 : f32 to vector<1x32xf32>
    %125 = arith.divf %123, %124 : vector<1x32xf32>
    %c0_138 = arith.constant 0 : index
    %c0_139 = arith.constant 0 : index
    %126 = vector.load %arg9[%c0_138, %c0_139] : memref<32x14xf32, #tpu.memory_space<vmem>>, vector<32x14xf32>
    %cst_140 = arith.constant dense<0.000000e+00> : vector<1x14xf32>
    %127 = tpu.matmul %125, %126, %cst_140 {dimension_numbers = #tpu.dot_dimension_numbers<[1], [0], [0], [1], [0, 0, 1, 1], [], []>} : vector<1x32xf32>, vector<32x14xf32>, vector<1x14xf32> -> vector<1x14xf32>
    %c0_141 = arith.constant 0 : index
    %c0_142 = arith.constant 0 : index
    %128 = vector.load %arg10[%c0_141, %c0_142] : memref<1x14xf32, #tpu.memory_space<vmem>>, vector<1x14xf32>
    %129 = arith.addf %127, %128 : vector<1x14xf32>
    %130 = arith.negf %129 : vector<1x14xf32>
    %131 = math.exp %130 : vector<1x14xf32>
    %cst_143 = arith.constant 1.000000e+00 : f32
    %132 = vector.broadcast %cst_143 : f32 to vector<1x14xf32>
    %133 = arith.addf %132, %131 : vector<1x14xf32>
    %134 = arith.divf %132, %133 : vector<1x14xf32>
    %c0_144 = arith.constant 0 : index
    %c0_145 = arith.constant 0 : index
    %c0_146 = arith.constant 0 : index
    %135 = vector.load %arg11[%c0_144, %c0_145, %c0_146] : memref<1x1x14xf32, #tpu.memory_space<vmem>>, vector<1x1x14xf32>
    %136 = vector.shape_cast %135 : vector<1x1x14xf32> to vector<1x14xf32>
    %137 = vector.shape_cast %134 : vector<1x14xf32> to vector<1x1x14xf32>
    tpu.vector_store %arg11[%c0_144, %c0_145, %c0_146], %137 {strides = array<i32>} : memref<1x1x14xf32, #tpu.memory_space<vmem>>, vector<1x1x14xf32>,
    return
  }
  func.func @transform_0(%arg0: i32) -> (i32, i32, i32) {
    %c0_i32 = arith.constant 0 : i32
    %c0_i32_0 = arith.constant 0 : i32
    %c0_i32_1 = arith.constant 0 : i32
    return %arg0, %c0_i32, %c0_i32_0 : i32, i32, i32
  }
  func.func @transform_1(%arg0: i32) -> (i32, i32) {
    %c0_i32 = arith.constant 0 : i32
    %c0_i32_0 = arith.constant 0 : i32
    %c0_i32_1 = arith.constant 0 : i32
    return %c0_i32, %c0_i32_0 : i32, i32
  }
  func.func @transform_2(%arg0: i32) -> (i32, i32) {
    %c0_i32 = arith.constant 0 : i32
    %c0_i32_0 = arith.constant 0 : i32
    %c0_i32_1 = arith.constant 0 : i32
    return %c0_i32, %c0_i32_0 : i32, i32
  }
  func.func @transform_3(%arg0: i32) -> (i32, i32, i32, i32) {
    %c0_i32 = arith.constant 0 : i32
    %c0_i32_0 = arith.constant 0 : i32
    %c0_i32_1 = arith.constant 0 : i32
    %c0_i32_2 = arith.constant 0 : i32
    %c0_i32_3 = arith.constant 0 : i32
    return %c0_i32, %c0_i32_0, %c0_i32_1, %c0_i32_2 : i32, i32, i32, i32
  }
  func.func @transform_4(%arg0: i32) -> (i32, i32, i32) {
    %c0_i32 = arith.constant 0 : i32
    %c0_i32_0 = arith.constant 0 : i32
    %c0_i32_1 = arith.constant 0 : i32
    %c0_i32_2 = arith.constant 0 : i32
    return %c0_i32, %c0_i32_0, %c0_i32_1 : i32, i32, i32
  }
  func.func @transform_5(%arg0: i32) -> (i32, i32, i32) {
    %c0_i32 = arith.constant 0 : i32
    %c0_i32_0 = arith.constant 0 : i32
    %c0_i32_1 = arith.constant 0 : i32
    %c0_i32_2 = arith.constant 0 : i32
    return %c0_i32, %c0_i32_0, %c0_i32_1 : i32, i32, i32
  }
  func.func @transform_6(%arg0: i32) -> (i32, i32, i32) {
    %c0_i32 = arith.constant 0 : i32
    %c0_i32_0 = arith.constant 0 : i32
    %c0_i32_1 = arith.constant 0 : i32
    %c0_i32_2 = arith.constant 0 : i32
    return %c0_i32, %c0_i32_0, %c0_i32_1 : i32, i32, i32
  }
  func.func @transform_7(%arg0: i32) -> (i32, i32, i32) {
    %c0_i32 = arith.constant 0 : i32
    %c0_i32_0 = arith.constant 0 : i32
    %c0_i32_1 = arith.constant 0 : i32
    %c0_i32_2 = arith.constant 0 : i32
    return %c0_i32, %c0_i32_0, %c0_i32_1 : i32, i32, i32
  }
  func.func @transform_8(%arg0: i32) -> (i32, i32) {
    %c0_i32 = arith.constant 0 : i32
    %c0_i32_0 = arith.constant 0 : i32
    %c0_i32_1 = arith.constant 0 : i32
    return %c0_i32, %c0_i32_0 : i32, i32
  }
  func.func @transform_9(%arg0: i32) -> (i32, i32) {
    %c0_i32 = arith.constant 0 : i32
    %c0_i32_0 = arith.constant 0 : i32
    %c0_i32_1 = arith.constant 0 : i32
    return %c0_i32, %c0_i32_0 : i32, i32
  }
  func.func @transform_10(%arg0: i32) -> (i32, i32, i32) {
    %c0_i32 = arith.constant 0 : i32
    %c0_i32_0 = arith.constant 0 : i32
    %c0_i32_1 = arith.constant 0 : i32
    return %arg0, %c0_i32, %c0_i32_0 : i32, i32, i32
  }
}

</mosaic_0001>

<llo_original>
// kernel: trancnn_forward.5
$region0: #{trancnn_forward.5}
  #allocation0 [shape = 'u32[]', space=smem, size = 0x4, offset = 0x4, fixed_abs, tag = 'smem constant byte address 0x4 - core index']
  #allocation1 [shape = 'u32[72,128]{1,0:T(1,128)}', space=vmem, size = 0x9000, scoped, tag = 'internal scratch']
  %s0 = inlined_call_operand.vmem [shape: f32[2,40,64], index: 0, kind: input, shape index: {}]
  %s1 = inlined_call_operand.vmem [shape: f32[2,16,64], index: 1, kind: input, shape index: {}]
  %s2 = inlined_call_operand.vmem [shape: f32[40,64], index: 2, kind: input, shape index: {}]
  %s3 = inlined_call_operand.vmem [shape: f32[64,64], index: 3, kind: input, shape index: {}]
  %s4 = inlined_call_operand.vmem [shape: f32[1,64], index: 4, kind: input, shape index: {}]
  %s5 = inlined_call_operand.vmem [shape: f32[64,128], index: 5, kind: input, shape index: {}]
  %s6 = inlined_call_operand.vmem [shape: f32[1,128], index: 6, kind: input, shape index: {}]
  %s7 = inlined_call_operand.vmem [shape: f32[64,64], index: 7, kind: input, shape index: {}]
  %s8 = inlined_call_operand.vmem [shape: f32[1,64], index: 8, kind: input, shape index: {}]
  %s9 = inlined_call_operand.vmem [shape: f32[1,64], index: 9, kind: input, shape index: {}]
  %s10 = inlined_call_operand.vmem [shape: f32[1,64], index: 10, kind: input, shape index: {}]
  %s11 = inlined_call_operand.vmem [shape: f32[64,128], index: 11, kind: input, shape index: {}]
  %s12 = inlined_call_operand.vmem [shape: f32[1,128], index: 12, kind: input, shape index: {}]
  %s13 = inlined_call_operand.vmem [shape: f32[128,64], index: 13, kind: input, shape index: {}]
  %s14 = inlined_call_operand.vmem [shape: f32[1,64], index: 14, kind: input, shape index: {}]
  %s15 = inlined_call_operand.vmem [shape: f32[1,64], index: 15, kind: input, shape index: {}]
  %s16 = inlined_call_operand.vmem [shape: f32[1,64], index: 16, kind: input, shape index: {}]
  %s17 = inlined_call_operand.vmem [shape: f32[2,40,64], index: 17, kind: output, shape index: {}]
  %s18 = sld [smem:[#allocation0]]
  $region101: #{trancnn_forward.5} parent=0
    _
  %s20 = ssub.s32 1, %s18
  %s21 = scalar_select 0, %s20, %s18
  loop: start=0, step=1, limit=4
  $region2: #{trancnn_forward.5} parent=0 // loop_pre_header
    _
  $region3: #{trancnn_forward.5} parent=0 // loop_header
    %s23 = sphi 0, %s27
    %p24 = scmp.ge.s32.totalorder %s23, 4
    %s33 = sphi 0, %s35
    %s36 = sphi 0, %s33
    %s37 = sphi 0, %s36
    %s53 = sphi 0, %s37
    %s59 = sphi 0, %s61
    %s62 = sphi 0, %s59
    %s63 = sphi 0, %s62
    %s79 = sphi 0, %s63
    %s83 = sphi 0, %s83
    %s85 = sphi 0, %s83
    %s86 = sphi 0, %s85
    %s100 = sphi 0, %s86
    %s104 = sphi 0, %s104
    %s106 = sphi 0, %s104
    %s107 = sphi 0, %s106
    %s121 = sphi 0, %s107
    %s125 = sphi 0, %s125
    %s127 = sphi 0, %s125
    %s128 = sphi 0, %s127
    %s142 = sphi 0, %s128
    %s146 = sphi 0, %s146
    %s148 = sphi 0, %s146
    %s149 = sphi 0, %s148
    %s163 = sphi 0, %s149
    %s167 = sphi 0, %s167
    %s169 = sphi 0, %s167
    %s170 = sphi 0, %s169
    %s184 = sphi 0, %s170
    %s188 = sphi 0, %s188
    %s190 = sphi 0, %s188
    %s191 = sphi 0, %s190
    %s205 = sphi 0, %s191
    %s209 = sphi 0, %s209
    %s211 = sphi 0, %s209
    %s212 = sphi 0, %s211
    %s226 = sphi 0, %s212
    %s230 = sphi 0, %s230
    %s232 = sphi 0, %s230
    %s233 = sphi 0, %s232
    %s247 = sphi 0, %s233
    %s251 = sphi 0, %s251
    %s253 = sphi 0, %s251
    %s254 = sphi 0, %s253
    %s268 = sphi 0, %s254
    %s272 = sphi 0, %s272
    %s274 = sphi 0, %s272
    %s275 = sphi 0, %s274
    %s289 = sphi 0, %s275
    %s293 = sphi 0, %s293
    %s295 = sphi 0, %s293
    %s296 = sphi 0, %s295
    %s310 = sphi 0, %s296
    %s314 = sphi 0, %s314
    %s316 = sphi 0, %s314
    %s317 = sphi 0, %s316
    %s331 = sphi 0, %s317
    %s335 = sphi 0, %s335
    %s337 = sphi 0, %s335
    %s338 = sphi 0, %s337
    %s352 = sphi 0, %s338
    %s356 = sphi 0, %s356
    %s358 = sphi 0, %s356
    %s359 = sphi 0, %s358
    %s373 = sphi 0, %s359
    %s377 = sphi 0, %s377
    %s379 = sphi 0, %s377
    %s380 = sphi 0, %s379
    %s394 = sphi 0, %s380
    %s400 = sphi 0, %s402
    %s403 = sphi 0, %s400
    %s404 = sphi 0, %s403
    %s420 = sphi 0, %s404
  $region4: #{trancnn_forward.5} parent=0 // loop_header_branch
    %26 = sbr.rel (%p24) target = $region8
  $region5: #{trancnn_forward.5} parent=0 // loop_body
    %s28 = ssub.s32 %s23, 1
    %s29 = ssub.s32 %s23, 2
    %s30 = sadd.s32 %s23, 1
    %s31 = ssub.s32 %s23, %s30
    %p32 = scmp.eq.s32.totalorder %s31, 0
    %s34 = sadd.s32 %s33, 1
    %s35 = scalar_select %p32, %s33, %s34
    %p38 = pneg %p32
    %p39 = scmp.eq.s32.totalorder %s23, 1
    %p40 = por %p38, %p39
    %p41 = scmp.ne.s32.totalorder %s33, %s36
    %p42 = scmp.eq.s32.totalorder %s23, 0
    %p43 = por %p41, %p42
    %p44 = scmp.ne.s32.totalorder %s33, %s36
    %p45 = scmp.eq.s32.totalorder %s28, 1
    %p46 = por %p44, %p45
    %p47 = scmp.ne.s32.totalorder %s36, %s37
    %p48 = scmp.eq.s32.totalorder %s28, 0
    %p49 = por %p47, %p48
    %p50 = scmp.ne.s32.totalorder %s36, %s37
    %p51 = scmp.eq.s32.totalorder %s29, 1
    %p52 = por %p50, %p51
    %p54 = scmp.ne.s32.totalorder %s37, %s53
    %p55 = scmp.eq.s32.totalorder %s29, 0
    %p56 = por %p54, %p55
    %s57 = ssub.s32 %s23, %s30
    %p58 = scmp.eq.s32.totalorder %s57, 0
    %s60 = sadd.s32 %s59, 1
    %s61 = scalar_select %p58, %s59, %s60
    %p64 = pneg %p58
    %p65 = scmp.eq.s32.totalorder %s23, 1
    %p66 = por %p64, %p65
    %p67 = scmp.ne.s32.totalorder %s59, %s62
    %p68 = scmp.eq.s32.totalorder %s23, 0
    %p69 = por %p67, %p68
    %p70 = scmp.ne.s32.totalorder %s59, %s62
    %p71 = scmp.eq.s32.totalorder %s28, 1
    %p72 = por %p70, %p71
    %p73 = scmp.ne.s32.totalorder %s62, %s63
    %p74 = scmp.eq.s32.totalorder %s28, 0
    %p75 = por %p73, %p74
    %p76 = scmp.ne.s32.totalorder %s62, %s63
    %p77 = scmp.eq.s32.totalorder %s29, 1
    %p78 = por %p76, %p77
    %p80 = scmp.ne.s32.totalorder %s63, %s79
    %p81 = scmp.eq.s32.totalorder %s29, 0
    %p82 = por %p80, %p81
    %s84 = sadd.s32 %s83, 1
    %p87 = scmp.eq.s32.totalorder %s23, 1
    %p88 = scmp.ne.s32.totalorder %s83, %s85
    %p89 = scmp.eq.s32.totalorder %s23, 0
    %p90 = por %p88, %p89
    %p91 = scmp.ne.s32.totalorder %s83, %s85
    %p92 = scmp.eq.s32.totalorder %s28, 1
    %p93 = por %p91, %p92
    %p94 = scmp.ne.s32.totalorder %s85, %s86
    %p95 = scmp.eq.s32.totalorder %s28, 0
    %p96 = por %p94, %p95
    %p97 = scmp.ne.s32.totalorder %s85, %s86
    %p98 = scmp.eq.s32.totalorder %s29, 1
    %p99 = por %p97, %p98
    %p101 = scmp.ne.s32.totalorder %s86, %s100
    %p102 = scmp.eq.s32.totalorder %s29, 0
    %p103 = por %p101, %p102
    %s105 = sadd.s32 %s104, 1
    %p108 = scmp.eq.s32.totalorder %s23, 1
    %p109 = scmp.ne.s32.totalorder %s104, %s106
    %p110 = scmp.eq.s32.totalorder %s23, 0
    %p111 = por %p109, %p110
    %p112 = scmp.ne.s32.totalorder %s104, %s106
    %p113 = scmp.eq.s32.totalorder %s28, 1
    %p114 = por %p112, %p113
    %p115 = scmp.ne.s32.totalorder %s106, %s107
    %p116 = scmp.eq.s32.totalorder %s28, 0
    %p117 = por %p115, %p116
    %p118 = scmp.ne.s32.totalorder %s106, %s107
    %p119 = scmp.eq.s32.totalorder %s29, 1
    %p120 = por %p118, %p119
    %p122 = scmp.ne.s32.totalorder %s107, %s121
    %p123 = scmp.eq.s32.totalorder %s29, 0
    %p124 = por %p122, %p123
    %s126 = sadd.s32 %s125, 1
    %p129 = scmp.eq.s32.totalorder %s23, 1
    %p130 = scmp.ne.s32.totalorder %s125, %s127
    %p131 = scmp.eq.s32.totalorder %s23, 0
    %p132 = por %p130, %p131
    %p133 = scmp.ne.s32.totalorder %s125, %s127
    %p134 = scmp.eq.s32.totalorder %s28, 1
    %p135 = por %p133, %p134
    %p136 = scmp.ne.s32.totalorder %s127, %s128
    %p137 = scmp.eq.s32.totalorder %s28, 0
    %p138 = por %p136, %p137
    %p139 = scmp.ne.s32.totalorder %s127, %s128
    %p140 = scmp.eq.s32.totalorder %s29, 1
    %p141 = por %p139, %p140
    %p143 = scmp.ne.s32.totalorder %s128, %s142
    %p144 = scmp.eq.s32.totalorder %s29, 0
    %p145 = por %p143, %p144
    %s147 = sadd.s32 %s146, 1
    %p150 = scmp.eq.s32.totalorder %s23, 1
    %p151 = scmp.ne.s32.totalorder %s146, %s148
    %p152 = scmp.eq.s32.totalorder %s23, 0
    %p153 = por %p151, %p152
    %p154 = scmp.ne.s32.totalorder %s146, %s148
    %p155 = scmp.eq.s32.totalorder %s28, 1
    %p156 = por %p154, %p155
    %p157 = scmp.ne.s32.totalorder %s148, %s149
    %p158 = scmp.eq.s32.totalorder %s28, 0
    %p159 = por %p157, %p158
    %p160 = scmp.ne.s32.totalorder %s148, %s149
    %p161 = scmp.eq.s32.totalorder %s29, 1
    %p162 = por %p160, %p161
    %p164 = scmp.ne.s32.totalorder %s149, %s163
    %p165 = scmp.eq.s32.totalorder %s29, 0
    %p166 = por %p164, %p165
    %s168 = sadd.s32 %s167, 1
    %p171 = scmp.eq.s32.totalorder %s23, 1
    %p172 = scmp.ne.s32.totalorder %s167, %s169
    %p173 = scmp.eq.s32.totalorder %s23, 0
    %p174 = por %p172, %p173
    %p175 = scmp.ne.s32.totalorder %s167, %s169
    %p176 = scmp.eq.s32.totalorder %s28, 1
    %p177 = por %p175, %p176
    %p178 = scmp.ne.s32.totalorder %s169, %s170
    %p179 = scmp.eq.s32.totalorder %s28, 0
    %p180 = por %p178, %p179
    %p181 = scmp.ne.s32.totalorder %s169, %s170
    %p182 = scmp.eq.s32.totalorder %s29, 1
    %p183 = por %p181, %p182
    %p185 = scmp.ne.s32.totalorder %s170, %s184
    %p186 = scmp.eq.s32.totalorder %s29, 0
    %p187 = por %p185, %p186
    %s189 = sadd.s32 %s188, 1
    %p192 = scmp.eq.s32.totalorder %s23, 1
    %p193 = scmp.ne.s32.totalorder %s188, %s190
    %p194 = scmp.eq.s32.totalorder %s23, 0
    %p195 = por %p193, %p194
    %p196 = scmp.ne.s32.totalorder %s188, %s190
    %p197 = scmp.eq.s32.totalorder %s28, 1
    %p198 = por %p196, %p197
    %p199 = scmp.ne.s32.totalorder %s190, %s191
    %p200 = scmp.eq.s32.totalorder %s28, 0
    %p201 = por %p199, %p200
    %p202 = scmp.ne.s32.totalorder %s190, %s191
    %p203 = scmp.eq.s32.totalorder %s29, 1
    %p204 = por %p202, %p203
    %p206 = scmp.ne.s32.totalorder %s191, %s205
    %p207 = scmp.eq.s32.totalorder %s29, 0
    %p208 = por %p206, %p207
    %s210 = sadd.s32 %s209, 1
    %p213 = scmp.eq.s32.totalorder %s23, 1
    %p214 = scmp.ne.s32.totalorder %s209, %s211
    %p215 = scmp.eq.s32.totalorder %s23, 0
    %p216 = por %p214, %p215
    %p217 = scmp.ne.s32.totalorder %s209, %s211
    %p218 = scmp.eq.s32.totalorder %s28, 1
    %p219 = por %p217, %p218
    %p220 = scmp.ne.s32.totalorder %s211, %s212
    %p221 = scmp.eq.s32.totalorder %s28, 0
    %p222 = por %p220, %p221
    %p223 = scmp.ne.s32.totalorder %s211, %s212
    %p224 = scmp.eq.s32.totalorder %s29, 1
    %p225 = por %p223, %p224
    %p227 = scmp.ne.s32.totalorder %s212, %s226
    %p228 = scmp.eq.s32.totalorder %s29, 0
    %p229 = por %p227, %p228
    %s231 = sadd.s32 %s230, 1
    %p234 = scmp.eq.s32.totalorder %s23, 1
    %p235 = scmp.ne.s32.totalorder %s230, %s232
    %p236 = scmp.eq.s32.totalorder %s23, 0
    %p237 = por %p235, %p236
    %p238 = scmp.ne.s32.totalorder %s230, %s232
    %p239 = scmp.eq.s32.totalorder %s28, 1
    %p240 = por %p238, %p239
    %p241 = scmp.ne.s32.totalorder %s232, %s233
    %p242 = scmp.eq.s32.totalorder %s28, 0
    %p243 = por %p241, %p242
    %p244 = scmp.ne.s32.totalorder %s232, %s233
    %p245 = scmp.eq.s32.totalorder %s29, 1
    %p246 = por %p244, %p245
    %p248 = scmp.ne.s32.totalorder %s233, %s247
    %p249 = scmp.eq.s32.totalorder %s29, 0
    %p250 = por %p248, %p249
    %s252 = sadd.s32 %s251, 1
    %p255 = scmp.eq.s32.totalorder %s23, 1
    %p256 = scmp.ne.s32.totalorder %s251, %s253
    %p257 = scmp.eq.s32.totalorder %s23, 0
    %p258 = por %p256, %p257
    %p259 = scmp.ne.s32.totalorder %s251, %s253
    %p260 = scmp.eq.s32.totalorder %s28, 1
    %p261 = por %p259, %p260
    %p262 = scmp.ne.s32.totalorder %s253, %s254
    %p263 = scmp.eq.s32.totalorder %s28, 0
    %p264 = por %p262, %p263
    %p265 = scmp.ne.s32.totalorder %s253, %s254
    %p266 = scmp.eq.s32.totalorder %s29, 1
    %p267 = por %p265, %p266
    %p269 = scmp.ne.s32.totalorder %s254, %s268
    %p270 = scmp.eq.s32.totalorder %s29, 0
    %p271 = por %p269, %p270
    %s273 = sadd.s32 %s272, 1
    %p276 = scmp.eq.s32.totalorder %s23, 1
    %p277 = scmp.ne.s32.totalorder %s272, %s274
    %p278 = scmp.eq.s32.totalorder %s23, 0
    %p279 = por %p277, %p278
    %p280 = scmp.ne.s32.totalorder %s272, %s274
    %p281 = scmp.eq.s32.totalorder %s28, 1
    %p282 = por %p280, %p281
    %p283 = scmp.ne.s32.totalorder %s274, %s275
    %p284 = scmp.eq.s32.totalorder %s28, 0
    %p285 = por %p283, %p284
    %p286 = scmp.ne.s32.totalorder %s274, %s275
    %p287 = scmp.eq.s32.totalorder %s29, 1
    %p288 = por %p286, %p287
    %p290 = scmp.ne.s32.totalorder %s275, %s289
    %p291 = scmp.eq.s32.totalorder %s29, 0
    %p292 = por %p290, %p291
    %s294 = sadd.s32 %s293, 1
    %p297 = scmp.eq.s32.totalorder %s23, 1
    %p298 = scmp.ne.s32.totalorder %s293, %s295
    %p299 = scmp.eq.s32.totalorder %s23, 0
    %p300 = por %p298, %p299
    %p301 = scmp.ne.s32.totalorder %s293, %s295
    %p302 = scmp.eq.s32.totalorder %s28, 1
    %p303 = por %p301, %p302
    %p304 = scmp.ne.s32.totalorder %s295, %s296
    %p305 = scmp.eq.s32.totalorder %s28, 0
    %p306 = por %p304, %p305
    %p307 = scmp.ne.s32.totalorder %s295, %s296
    %p308 = scmp.eq.s32.totalorder %s29, 1
    %p309 = por %p307, %p308
    %p311 = scmp.ne.s32.totalorder %s296, %s310
    %p312 = scmp.eq.s32.totalorder %s29, 0
    %p313 = por %p311, %p312
    %s315 = sadd.s32 %s314, 1
    %p318 = scmp.eq.s32.totalorder %s23, 1
    %p319 = scmp.ne.s32.totalorder %s314, %s316
    %p320 = scmp.eq.s32.totalorder %s23, 0
    %p321 = por %p319, %p320
    %p322 = scmp.ne.s32.totalorder %s314, %s316
    %p323 = scmp.eq.s32.totalorder %s28, 1
    %p324 = por %p322, %p323
    %p325 = scmp.ne.s32.totalorder %s316, %s317
    %p326 = scmp.eq.s32.totalorder %s28, 0
    %p327 = por %p325, %p326
    %p328 = scmp.ne.s32.totalorder %s316, %s317
    %p329 = scmp.eq.s32.totalorder %s29, 1
    %p330 = por %p328, %p329
    %p332 = scmp.ne.s32.totalorder %s317, %s331
    %p333 = scmp.eq.s32.totalorder %s29, 0
    %p334 = por %p332, %p333
    %s336 = sadd.s32 %s335, 1
    %p339 = scmp.eq.s32.totalorder %s23, 1
    %p340 = scmp.ne.s32.totalorder %s335, %s337
    %p341 = scmp.eq.s32.totalorder %s23, 0
    %p342 = por %p340, %p341
    %p343 = scmp.ne.s32.totalorder %s335, %s337
    %p344 = scmp.eq.s32.totalorder %s28, 1
    %p345 = por %p343, %p344
    %p346 = scmp.ne.s32.totalorder %s337, %s338
    %p347 = scmp.eq.s32.totalorder %s28, 0
    %p348 = por %p346, %p347
    %p349 = scmp.ne.s32.totalorder %s337, %s338
    %p350 = scmp.eq.s32.totalorder %s29, 1
    %p351 = por %p349, %p350
    %p353 = scmp.ne.s32.totalorder %s338, %s352
    %p354 = scmp.eq.s32.totalorder %s29, 0
    %p355 = por %p353, %p354
    %s357 = sadd.s32 %s356, 1
    %p360 = scmp.eq.s32.totalorder %s23, 1
    %p361 = scmp.ne.s32.totalorder %s356, %s358
    %p362 = scmp.eq.s32.totalorder %s23, 0
    %p363 = por %p361, %p362
    %p364 = scmp.ne.s32.totalorder %s356, %s358
    %p365 = scmp.eq.s32.totalorder %s28, 1
    %p366 = por %p364, %p365
    %p367 = scmp.ne.s32.totalorder %s358, %s359
    %p368 = scmp.eq.s32.totalorder %s28, 0
    %p369 = por %p367, %p368
    %p370 = scmp.ne.s32.totalorder %s358, %s359
    %p371 = scmp.eq.s32.totalorder %s29, 1
    %p372 = por %p370, %p371
    %p374 = scmp.ne.s32.totalorder %s359, %s373
    %p375 = scmp.eq.s32.totalorder %s29, 0
    %p376 = por %p374, %p375
    %s378 = sadd.s32 %s377, 1
    %p381 = scmp.eq.s32.totalorder %s23, 1
    %p382 = scmp.ne.s32.totalorder %s377, %s379
    %p383 = scmp.eq.s32.totalorder %s23, 0
    %p384 = por %p382, %p383
    %p385 = scmp.ne.s32.totalorder %s377, %s379
    %p386 = scmp.eq.s32.totalorder %s28, 1
    %p387 = por %p385, %p386
    %p388 = scmp.ne.s32.totalorder %s379, %s380
    %p389 = scmp.eq.s32.totalorder %s28, 0
    %p390 = por %p388, %p389
    %p391 = scmp.ne.s32.totalorder %s379, %s380
    %p392 = scmp.eq.s32.totalorder %s29, 1
    %p393 = por %p391, %p392
    %p395 = scmp.ne.s32.totalorder %s380, %s394
    %p396 = scmp.eq.s32.totalorder %s29, 0
    %p397 = por %p395, %p396
    %s398 = ssub.s32 %s23, %s30
    %p399 = scmp.eq.s32.totalorder %s398, 0
    %s401 = sadd.s32 %s400, 1
    %s402 = scalar_select %p399, %s400, %s401
    %p405 = pneg %p399
    %p406 = scmp.eq.s32.totalorder %s23, 1
    %p407 = por %p405, %p406
    %p408 = scmp.ne.s32.totalorder %s400, %s403
    %p409 = scmp.eq.s32.totalorder %s23, 0
    %p410 = por %p408, %p409
    %p411 = scmp.ne.s32.totalorder %s400, %s403
    %p412 = scmp.eq.s32.totalorder %s28, 1
    %p413 = por %p411, %p412
    %p414 = scmp.ne.s32.totalorder %s403, %s404
    %p415 = scmp.eq.s32.totalorder %s28, 0
    %p416 = por %p414, %p415
    %p417 = scmp.ne.s32.totalorder %s403, %s404
    %p418 = scmp.eq.s32.totalorder %s29, 1
    %p419 = por %p417, %p418
    %p421 = scmp.ne.s32.totalorder %s404, %s420
    %p422 = scmp.eq.s32.totalorder %s29, 0
    %p423 = por %p421, %p422
    %p424 = scmp.le.s32.totalorder 1, %s23
    %p425 = scmp.lt.s32.totalorder %s23, 3
    %p426 = pnand %p424, %p425
    %p427 = pneg %p426
    // Predicated region
    $region9: #{trancnn_forward.5} parent=5 // pred_check
      _
    $region10: #{trancnn_forward.5} parent=5 // pred_check_branch
      %429 = sbr.rel (%p426) target = $region12
    $region11: #{trancnn_forward.5} parent=5 // pred_region
      %s430 = ssub.s32 %s23, 1
      // Predicated region
      $region13: #{trancnn_forward.5} parent=11 // pred_check
        %p431 = pneg %p96
      $region14: #{trancnn_forward.5} parent=11 // pred_check_branch
        %433 = sbr.rel (%p431) target = $region16
      $region15: #{trancnn_forward.5} parent=11 // pred_region
        _
      $region16: #{trancnn_forward.5} parent=11 // pred_fallthru
        _
      // Predicated region
      $region17: #{trancnn_forward.5} parent=11 // pred_check
        %p434 = pneg %p117
      $region18: #{trancnn_forward.5} parent=11 // pred_check_branch
        %436 = sbr.rel (%p434) target = $region20
      $region19: #{trancnn_forward.5} parent=11 // pred_region
        _
      $region20: #{trancnn_forward.5} parent=11 // pred_fallthru
        _
      // Predicated region
      $region21: #{trancnn_forward.5} parent=11 // pred_check
        %p437 = pneg %p138
      $region22: #{trancnn_forward.5} parent=11 // pred_check_branch
        %439 = sbr.rel (%p437) target = $region24
      $region23: #{trancnn_forward.5} parent=11 // pred_region
        _
      $region24: #{trancnn_forward.5} parent=11 // pred_fallthru
        _
      // Predicated region
      $region25: #{trancnn_forward.5} parent=11 // pred_check
        %p440 = pneg %p159
      $region26: #{trancnn_forward.5} parent=11 // pred_check_branch
        %442 = sbr.rel (%p440) target = $region28
      $region27: #{trancnn_forward.5} parent=11 // pred_region
        _
      $region28: #{trancnn_forward.5} parent=11 // pred_fallthru
        _
      // Predicated region
      $region29: #{trancnn_forward.5} parent=11 // pred_check
        %p443 = pneg %p180
      $region30: #{trancnn_forward.5} parent=11 // pred_check_branch
        %445 = sbr.rel (%p443) target = $region32
      $region31: #{trancnn_forward.5} parent=11 // pred_region
        _
      $region32: #{trancnn_forward.5} parent=11 // pred_fallthru
        _
      // Predicated region
      $region33: #{trancnn_forward.5} parent=11 // pred_check
        %p446 = pneg %p201
      $region34: #{trancnn_forward.5} parent=11 // pred_check_branch
        %448 = sbr.rel (%p446) target = $region36
      $region35: #{trancnn_forward.5} parent=11 // pred_region
        _
      $region36: #{trancnn_forward.5} parent=11 // pred_fallthru
        _
      // Predicated region
      $region37: #{trancnn_forward.5} parent=11 // pred_check
        %p449 = pneg %p222
      $region38: #{trancnn_forward.5} parent=11 // pred_check_branch
        %451 = sbr.rel (%p449) target = $region40
      $region39: #{trancnn_forward.5} parent=11 // pred_region
        _
      $region40: #{trancnn_forward.5} parent=11 // pred_fallthru
        _
      // Predicated region
      $region41: #{trancnn_forward.5} parent=11 // pred_check
        %p452 = pneg %p243
      $region42: #{trancnn_forward.5} parent=11 // pred_check_branch
        %454 = sbr.rel (%p452) target = $region44
      $region43: #{trancnn_forward.5} parent=11 // pred_region
        _
      $region44: #{trancnn_forward.5} parent=11 // pred_fallthru
        _
      // Predicated region
      $region45: #{trancnn_forward.5} parent=11 // pred_check
        %p455 = pneg %p264
      $region46: #{trancnn_forward.5} parent=11 // pred_check_branch
        %457 = sbr.rel (%p455) target = $region48
      $region47: #{trancnn_forward.5} parent=11 // pred_region
        _
      $region48: #{trancnn_forward.5} parent=11 // pred_fallthru
        _
      // Predicated region
      $region49: #{trancnn_forward.5} parent=11 // pred_check
        %p458 = pneg %p285
      $region50: #{trancnn_forward.5} parent=11 // pred_check_branch
        %460 = sbr.rel (%p458) target = $region52
      $region51: #{trancnn_forward.5} parent=11 // pred_region
        _
      $region52: #{trancnn_forward.5} parent=11 // pred_fallthru
        _
      // Predicated region
      $region53: #{trancnn_forward.5} parent=11 // pred_check
        %p461 = pneg %p306
      $region54: #{trancnn_forward.5} parent=11 // pred_check_branch
        %463 = sbr.rel (%p461) target = $region56
      $region55: #{trancnn_forward.5} parent=11 // pred_region
        _
      $region56: #{trancnn_forward.5} parent=11 // pred_fallthru
        _
      // Predicated region
      $region57: #{trancnn_forward.5} parent=11 // pred_check
        %p464 = pneg %p327
      $region58: #{trancnn_forward.5} parent=11 // pred_check_branch
        %466 = sbr.rel (%p464) target = $region60
      $region59: #{trancnn_forward.5} parent=11 // pred_region
        _
      $region60: #{trancnn_forward.5} parent=11 // pred_fallthru
        _
      // Predicated region
      $region61: #{trancnn_forward.5} parent=11 // pred_check
        %p467 = pneg %p348
      $region62: #{trancnn_forward.5} parent=11 // pred_check_branch
        %469 = sbr.rel (%p467) target = $region64
      $region63: #{trancnn_forward.5} parent=11 // pred_region
        _
      $region64: #{trancnn_forward.5} parent=11 // pred_fallthru
        _
      // Predicated region
      $region65: #{trancnn_forward.5} parent=11 // pred_check
        %p470 = pneg %p369
      $region66: #{trancnn_forward.5} parent=11 // pred_check_branch
        %472 = sbr.rel (%p470) target = $region68
      $region67: #{trancnn_forward.5} parent=11 // pred_region
        _
      $region68: #{trancnn_forward.5} parent=11 // pred_fallthru
        _
      // Predicated region
      $region69: #{trancnn_forward.5} parent=11 // pred_check
        %p473 = pneg %p390
      $region70: #{trancnn_forward.5} parent=11 // pred_check_branch
        %475 = sbr.rel (%p473) target = $region72
      $region71: #{trancnn_forward.5} parent=11 // pred_region
        _
      $region72: #{trancnn_forward.5} parent=11 // pred_fallthru
        _
    $region12: #{trancnn_forward.5} parent=5 // pred_fallthru
      _
    %p476 = scmp.lt.s32.totalorder %s23, 2
    // Predicated region
    $region73: #{trancnn_forward.5} parent=5 // pred_check
      %p477 = pneg %p476
    $region74: #{trancnn_forward.5} parent=5 // pred_check_branch
      %479 = sbr.rel (%p477) target = $region76
    $region75: #{trancnn_forward.5} parent=5 // pred_region
      // Predicated region
      $region77: #{trancnn_forward.5} parent=75 // pred_check
        %p480 = pneg %p43
      $region78: #{trancnn_forward.5} parent=75 // pred_check_branch
        %482 = sbr.rel (%p480) target = $region80
      $region79: #{trancnn_forward.5} parent=75 // pred_region
        %p483 = scmp.lt.s32.totalorder %s23, 1
        %s484 = scalar_select %p483, %s23, 1
        %s485 = smul.addr %s484, 5
        %s486 = smul.addr %s485, 8
        %s487 = scalar_lea.vmem %s0, %s486
      $region80: #{trancnn_forward.5} parent=75 // pred_fallthru
        _
      // Predicated region
      $region81: #{trancnn_forward.5} parent=75 // pred_check
        %p488 = pneg %p69
      $region82: #{trancnn_forward.5} parent=75 // pred_check_branch
        %490 = sbr.rel (%p488) target = $region84
      $region83: #{trancnn_forward.5} parent=75 // pred_region
        %p491 = scmp.lt.s32.totalorder %s23, 1
        %s492 = scalar_select %p491, %s23, 1
        %s493 = smul.addr %s492, 2
        %s494 = smul.addr %s493, 8
        %s495 = scalar_lea.vmem %s1, %s494
      $region84: #{trancnn_forward.5} parent=75 // pred_fallthru
        _
    $region76: #{trancnn_forward.5} parent=5 // pred_fallthru
      _
    %p496 = scmp.le.s32.totalorder 1, %s23
    %p497 = scmp.lt.s32.totalorder %s23, 3
    %p498 = pnand %p496, %p497
    %p499 = pneg %p498
    // Predicated region
    $region85: #{trancnn_forward.5} parent=5 // pred_check
      _
    $region86: #{trancnn_forward.5} parent=5 // pred_check_branch
      %501 = sbr.rel (%p498) target = $region88
    $region87: #{trancnn_forward.5} parent=5 // pred_region
      %s502 = ssub.s32 %s23, 1
      %p503 = scmp.lt.s32.totalorder %s28, 1
      %s504 = scalar_select %p503, %s28, 1
      %s505 = smul.addr %s504, 5
      %s506 = smul.addr %s505, 8
      %s507 = scalar_lea.vmem %s0, %s506
      %p508 = pneg %p49
      %p509 = pneg %p46
      %p510 = scmp.lt.s32.totalorder %s28, 1
      %s511 = scalar_select %p510, %s28, 1
      %s512 = smul.addr %s511, 2
      %s513 = smul.addr %s512, 8
      %s514 = scalar_lea.vmem %s1, %s513
      %p515 = pneg %p75
      %p516 = pneg %p72
      %p517 = pneg %p96
      %p518 = pneg %p93
      %p519 = pneg %p117
      %p520 = pneg %p114
      %p521 = pneg %p138
      %p522 = pneg %p135
      %p523 = pneg %p159
      %p524 = pneg %p156
      %p525 = pneg %p180
      %p526 = pneg %p177
      %p527 = pneg %p201
      %p528 = pneg %p198
      %p529 = pneg %p222
      %p530 = pneg %p219
      %p531 = pneg %p243
      %p532 = pneg %p240
      %p533 = pneg %p264
      %p534 = pneg %p261
      %p535 = pneg %p285
      %p536 = pneg %p282
      %p537 = pneg %p306
      %p538 = pneg %p303
      %p539 = pneg %p327
      %p540 = pneg %p324
      %p541 = pneg %p348
      %p542 = pneg %p345
      %p543 = pneg %p369
      %p544 = pneg %p366
      %p545 = pneg %p390
      %p546 = pneg %p387
      %p547 = pneg %p416
      %p548 = pneg %p413
      %p549 = scmp.lt.s32.totalorder %s28, 1
      %s550 = scalar_select %p549, %s28, 1
      %s551 = smul.addr %s550, 5
      %s552 = smul.addr %s551, 8
      %s553 = scalar_lea.vmem %s17, %s552
      %p554 = scmp.lt.s32.totalorder %s28, 1
      %s555 = scalar_select %p554, %s28, 1
      %s556 = smul.addr %s555, 5
      %s557 = smul.addr %s556, 8
      %s558 = scalar_lea.vmem %s0, %s557
      %p559 = scmp.lt.s32.totalorder %s28, 1
      %s560 = scalar_select %p559, %s28, 1
      %s561 = smul.addr %s560, 2
      %s562 = smul.addr %s561, 8
      %s563 = scalar_lea.vmem %s1, %s562
      %p564 = scmp.lt.s32.totalorder %s28, 1
      %s565 = scalar_select %p564, %s28, 1
      %s566 = smul.addr %s565, 5
      %s567 = smul.addr %s566, 8
      %s568 = scalar_lea.vmem %s17, %s567
      %v569 = vld [vmem:[%s558] sm:$0xff]
      %v570 = vld [vmem:[%s558 + $0x8] sm:$0xff]
      %v571 = vld [vmem:[%s558 + $0x10] sm:$0xff]
      %v572 = vld [vmem:[%s558 + $0x18] sm:$0xff]
      %v573 = vld [vmem:[%s558 + $0x20] sm:$0xff]
      %v574 = vld [vmem:[%s563] sm:$0xff]
      %v575 = vld [vmem:[%s563 + $0x8] sm:$0xff]
      %v576 = vld [vmem:[%s2] sm:$0xff]
      %v577 = vld [vmem:[%s2 + $0x8] sm:$0xff]
      %v578 = vld [vmem:[%s2 + $0x10] sm:$0xff]
      %v579 = vld [vmem:[%s2 + $0x18] sm:$0xff]
      %v580 = vld [vmem:[%s2 + $0x20] sm:$0xff]
      %v581 = vadd.f32 %v569, %v576
      %v582 = vadd.f32 %v570, %v577
      %v583 = vadd.f32 %v571, %v578
      %v584 = vadd.f32 %v572, %v579
      %v585 = vadd.f32 %v573, %v580
      %v586 = vld [vmem:[%s3] sm:$0xff]
      %v587 = vld [vmem:[%s3 + $0x8] sm:$0xff]
      %v588 = vld [vmem:[%s3 + $0x10] sm:$0xff]
      %v589 = vld [vmem:[%s3 + $0x18] sm:$0xff]
      %v590 = vld [vmem:[%s3 + $0x20] sm:$0xff]
      %v591 = vld [vmem:[%s3 + $0x28] sm:$0xff]
      %v592 = vld [vmem:[%s3 + $0x30] sm:$0xff]
      %v593 = vld [vmem:[%s3 + $0x38] sm:$0xff]
      %v594 = vld [vmem:[%s4] sm:$0x1]
      %v596 = vperm.slane %v594, 0
      %vm598 = vcmask 523264
      %v600 = vsel %vm598, %v581, 0
      %v603 = vsel %vm598, %v582, 0
      %v606 = vsel %vm598, %v583, 0
      %v609 = vsel %vm598, %v584, 0
      %v612 = vsel %vm598, %v585, 0
      %614 = vmatpush.msra.mxu0 0.0
      %615 = vmatpush.msra.mxu0 0.0
      %616 = vmatpush.msra.mxu0 0.0
      %617 = vmatpush.msra.mxu0 0.0
      %618 = vmatpush.msra.mxu0 0.0
      %619 = vmatpush.msra.mxu0 0.0
      %620 = vmatpush.msra.mxu0 0.0
      %621 = vmatpush.msra.mxu0 0.0
      %622 = vmatpush.msra.mxu0 %v593
      %623 = vmatpush.msra.mxu0 %v592
      %624 = vmatpush.msra.mxu0 %v591
      %625 = vmatpush.msra.mxu0 %v590
      %626 = vmatpush.msra.mxu0 %v589
      %627 = vmatpush.msra.mxu0 %v588
      %628 = vmatpush.msra.mxu0 %v587
      %629 = vmatpush.msra.mxu0 %v586
      %630 = vmatmul.f32.gmra.mxu0 %v600
      %v631 = vpop.f32.mrf.mxu0
      %v632 = vadd.f32 %v596, %v631
      %633 = vmatmul.f32.gmra.mxu0 %v603
      %v634 = vpop.f32.mrf.mxu0
      %v635 = vadd.f32 %v596, %v634
      %636 = vmatmul.f32.gmra.mxu0 %v606
      %v637 = vpop.f32.mrf.mxu0
      %v638 = vadd.f32 %v596, %v637
      %639 = vmatmul.f32.gmra.mxu0 %v609
      %v640 = vpop.f32.mrf.mxu0
      %v641 = vadd.f32 %v596, %v640
      %642 = vmatmul.f32.gmra.mxu0 %v612
      %v643 = vpop.f32.mrf.mxu0
      %v644 = vadd.f32 %v596, %v643
      %645 = vdwg.mxu0
      %v646 = vld [vmem:[%s5] sm:$0xff]
      %v647 = vld [vmem:[%s5 + $0x8] sm:$0xff]
      %v648 = vld [vmem:[%s5 + $0x10] sm:$0xff]
      %v649 = vld [vmem:[%s5 + $0x18] sm:$0xff]
      %v650 = vld [vmem:[%s5 + $0x20] sm:$0xff]
      %v651 = vld [vmem:[%s5 + $0x28] sm:$0xff]
      %v652 = vld [vmem:[%s5 + $0x30] sm:$0xff]
      %v653 = vld [vmem:[%s5 + $0x38] sm:$0xff]
      %v654 = vld [vmem:[%s6] sm:$0x1]
      %v656 = vperm.slane %v654, 0
      %v659 = vsel %vm598, %v574, 0
      %v662 = vsel %vm598, %v575, 0
      %664 = vmatpush.msra.mxu0 0.0
      %665 = vmatpush.msra.mxu0 0.0
      %666 = vmatpush.msra.mxu0 0.0
      %667 = vmatpush.msra.mxu0 0.0
      %668 = vmatpush.msra.mxu0 0.0
      %669 = vmatpush.msra.mxu0 0.0
      %670 = vmatpush.msra.mxu0 0.0
      %671 = vmatpush.msra.mxu0 0.0
      %672 = vmatpush.msra.mxu0 %v653
      %673 = vmatpush.msra.mxu0 %v652
      %674 = vmatpush.msra.mxu0 %v651
      %675 = vmatpush.msra.mxu0 %v650
      %676 = vmatpush.msra.mxu0 %v649
      %677 = vmatpush.msra.mxu0 %v648
      %678 = vmatpush.msra.mxu0 %v647
      %679 = vmatpush.msra.mxu0 %v646
      %680 = vmatmul.f32.gmra.mxu0 %v659
      %v681 = vpop.f32.mrf.mxu0
      %v682 = vadd.f32 %v656, %v681
      %683 = vmatmul.f32.gmra.mxu0 %v662
      %v684 = vpop.f32.mrf.mxu0
      %v685 = vadd.f32 %v656, %v684
      %686 = vdwg.mxu0
      %v687 = vld [vmem:[%s8] sm:$0x1]
      %v689 = vperm.slane %v687, 0
      %v691 = vadd.f32 %v689, 0.0
      %vm692 = vcmask 130048
      %v694 = vsel %vm692, %v632, 0
      %v697 = vsel %vm692, %v635, 0
      %v700 = vsel %vm692, %v638, 0
      %v703 = vsel %vm692, %v641, 0
      %v706 = vsel %vm692, %v644, 0
      %v709 = vsel %vm692, %v682, 0
      %v712 = vsel %vm692, %v685, 0
      %714 = vmatpush.xpose.msra.mxu0 0.0
      %715 = vmatpush.xpose.msra.mxu0 0.0
      %716 = vmatpush.xpose.msra.mxu0 0.0
      %717 = vmatpush.xpose.msra.mxu0 0.0
      %718 = vmatpush.xpose.msra.mxu0 0.0
      %719 = vmatpush.xpose.msra.mxu0 0.0
      %720 = vmatpush.xpose.msra.mxu0 0.0
      %721 = vmatpush.xpose.msra.mxu0 0.0
      %722 = vmatpush.xpose.msra.mxu0 0.0
      %723 = vmatpush.xpose.msra.mxu0 0.0
      %724 = vmatpush.xpose.msra.mxu0 0.0
      %725 = vmatpush.xpose.msra.mxu0 0.0
      %726 = vmatpush.xpose.msra.mxu0 0.0
      %727 = vmatpush.xpose.msra.mxu0 0.0
      %728 = vmatpush.xpose.msra.mxu0 %v712
      %729 = vmatpush.xpose.msra.mxu0 %v709
      %730 = vmatmul.f32.gmra.mxu0 %v694
      %v731 = vpop.f32.mrf.mxu0
      %v732 = vadd.f32 0.0, %v731
      %733 = vmatmul.f32.gmra.mxu0 %v697
      %v734 = vpop.f32.mrf.mxu0
      %v735 = vadd.f32 0.0, %v734
      %736 = vmatmul.f32.gmra.mxu0 %v700
      %v737 = vpop.f32.mrf.mxu0
      %v738 = vadd.f32 0.0, %v737
      %739 = vmatmul.f32.gmra.mxu0 %v703
      %v740 = vpop.f32.mrf.mxu0
      %v741 = vadd.f32 0.0, %v740
      %742 = vmatmul.f32.gmra.mxu0 %v706
      %v743 = vpop.f32.mrf.mxu0
      %v744 = vadd.f32 0.0, %v743
      %745 = vdwg.mxu0
      %v746 = vmul.f32 %v732, 0.25
      %v747 = vmul.f32 %v735, 0.25
      %v748 = vmul.f32 %v738, 0.25
      %v749 = vmul.f32 %v741, 0.25
      %v750 = vmul.f32 %v744, 0.25
      %v751 = vsel %vm692, %v746, -inf
      %752 = vmax.xlane.f32.xlu0 %v751
      %v753 = vpop.xlane.xlu0 %752
      %v754 = vsel %vm692, %v747, -inf
      %755 = vmax.xlane.f32.xlu0 %v754
      %v756 = vpop.xlane.xlu0 %755
      %v757 = vsel %vm692, %v748, -inf
      %758 = vmax.xlane.f32.xlu0 %v757
      %v759 = vpop.xlane.xlu0 %758
      %v760 = vsel %vm692, %v749, -inf
      %761 = vmax.xlane.f32.xlu0 %v760
      %v762 = vpop.xlane.xlu0 %761
      %v763 = vsel %vm692, %v750, -inf
      %764 = vmax.xlane.f32.xlu0 %v763
      %v765 = vpop.xlane.xlu0 %764
      %v766 = vsub.f32 %v746, %v753
      %v767 = vsub.f32 %v747, %v756
      %v768 = vsub.f32 %v748, %v759
      %v769 = vsub.f32 %v749, %v762
      %v770 = vsub.f32 %v750, %v765
      %v771 = vmul.f32 %v766, 1.442695
      %v772 = vpow.pop %v771
      %v773 = vmul.f32 %v767, 1.442695
      %v774 = vpow.pop %v773
      %v775 = vmul.f32 %v768, 1.442695
      %v776 = vpow.pop %v775
      %v777 = vmul.f32 %v769, 1.442695
      %v778 = vpow.pop %v777
      %v779 = vmul.f32 %v770, 1.442695
      %v780 = vpow.pop %v779
      %v781 = vsel %vm692, %v772, 0.0
      %782 = vadd.xlane.f32.xlu0 %v781
      %v783 = vpop.xlane.xlu0 %782
      %v784 = vsel %vm692, %v774, 0.0
      %785 = vadd.xlane.f32.xlu0 %v784
      %v786 = vpop.xlane.xlu0 %785
      %v787 = vsel %vm692, %v776, 0.0
      %788 = vadd.xlane.f32.xlu0 %v787
      %v789 = vpop.xlane.xlu0 %788
      %v790 = vsel %vm692, %v778, 0.0
      %791 = vadd.xlane.f32.xlu0 %v790
      %v792 = vpop.xlane.xlu0 %791
      %v793 = vsel %vm692, %v780, 0.0
      %794 = vadd.xlane.f32.xlu0 %v793
      %v795 = vpop.xlane.xlu0 %794
      %v796 = vrcp.pop %v783
      %v797 = vrcp.pop %v786
      %v798 = vrcp.pop %v789
      %v799 = vrcp.pop %v792
      %v800 = vrcp.pop %v795
      %v801 = vmul.f32 %v772, %v796
      %v802 = vmul.f32 %v774, %v797
      %v803 = vmul.f32 %v776, %v798
      %v804 = vmul.f32 %v778, %v799
      %v805 = vmul.f32 %v780, %v800
      %806 = vrot.lane.b32.xlu0 %v682, 64
      %v807 = vpop.permute.xlu0 %806
      %808 = vrot.lane.b32.xlu0 %v685, 64
      %v809 = vpop.permute.xlu0 %808
      %v813 = vsel %vm692, %v801, 0
      %v816 = vsel %vm692, %v802, 0
      %v819 = vsel %vm692, %v803, 0
      %v822 = vsel %vm692, %v804, 0
      %v825 = vsel %vm692, %v805, 0
      %827 = vmatpush.msra.mxu0 0.0
      %828 = vmatpush.msra.mxu0 0.0
      %829 = vmatpush.msra.mxu0 0.0
      %830 = vmatpush.msra.mxu0 0.0
      %831 = vmatpush.msra.mxu0 0.0
      %832 = vmatpush.msra.mxu0 0.0
      %833 = vmatpush.msra.mxu0 0.0
      %834 = vmatpush.msra.mxu0 0.0
      %835 = vmatpush.msra.mxu0 0.0
      %836 = vmatpush.msra.mxu0 0.0
      %837 = vmatpush.msra.mxu0 0.0
      %838 = vmatpush.msra.mxu0 0.0
      %839 = vmatpush.msra.mxu0 0.0
      %840 = vmatpush.msra.mxu0 0.0
      %841 = vmatpush.msra.mxu0 %v809
      %842 = vmatpush.msra.mxu0 %v807
      %843 = vmatmul.f32.gmra.mxu0 %v813
      %v844 = vpop.f32.mrf.mxu0
      %v845 = vadd.f32 0.0, %v844
      %846 = vmatmul.f32.gmra.mxu0 %v816
      %v847 = vpop.f32.mrf.mxu0
      %v848 = vadd.f32 0.0, %v847
      %849 = vmatmul.f32.gmra.mxu0 %v819
      %v850 = vpop.f32.mrf.mxu0
      %v851 = vadd.f32 0.0, %v850
      %852 = vmatmul.f32.gmra.mxu0 %v822
      %v853 = vpop.f32.mrf.mxu0
      %v854 = vadd.f32 0.0, %v853
      %855 = vmatmul.f32.gmra.mxu0 %v825
      %v856 = vpop.f32.mrf.mxu0
      %v857 = vadd.f32 0.0, %v856
      %858 = vdwg.mxu0
      %v859 = vld [vmem:[%s7] sm:$0xff]
      %v860 = vld [vmem:[%s7 + $0x8] sm:$0xff]
      %v862 = vsel %vm692, %v845, 0
      %v865 = vsel %vm692, %v848, 0
      %v868 = vsel %vm692, %v851, 0
      %v871 = vsel %vm692, %v854, 0
      %v874 = vsel %vm692, %v857, 0
      %876 = vmatpush.msra.mxu0 0.0
      %877 = vmatpush.msra.mxu0 0.0
      %878 = vmatpush.msra.mxu0 0.0
      %879 = vmatpush.msra.mxu0 0.0
      %880 = vmatpush.msra.mxu0 0.0
      %881 = vmatpush.msra.mxu0 0.0
      %882 = vmatpush.msra.mxu0 0.0
      %883 = vmatpush.msra.mxu0 0.0
      %884 = vmatpush.msra.mxu0 0.0
      %885 = vmatpush.msra.mxu0 0.0
      %886 = vmatpush.msra.mxu0 0.0
      %887 = vmatpush.msra.mxu0 0.0
      %888 = vmatpush.msra.mxu0 0.0
      %889 = vmatpush.msra.mxu0 0.0
      %890 = vmatpush.msra.mxu0 %v860
      %891 = vmatpush.msra.mxu0 %v859
      %892 = vmatmul.f32.gmra.mxu0 %v862
      %v893 = vpop.f32.mrf.mxu0
      %v894 = vadd.f32 0.0, %v893
      %895 = vmatmul.f32.gmra.mxu0 %v865
      %v896 = vpop.f32.mrf.mxu0
      %v897 = vadd.f32 0.0, %v896
      %898 = vmatmul.f32.gmra.mxu0 %v868
      %v899 = vpop.f32.mrf.mxu0
      %v900 = vadd.f32 0.0, %v899
      %901 = vmatmul.f32.gmra.mxu0 %v871
      %v902 = vpop.f32.mrf.mxu0
      %v903 = vadd.f32 0.0, %v902
      %904 = vmatmul.f32.gmra.mxu0 %v874
      %v905 = vpop.f32.mrf.mxu0
      %v906 = vadd.f32 0.0, %v905
      %907 = vdwg.mxu0
      %v908 = vadd.f32 %v691, %v894
      %v909 = vadd.f32 %v691, %v897
      %v910 = vadd.f32 %v691, %v900
      %v911 = vadd.f32 %v691, %v903
      %v912 = vadd.f32 %v691, %v906
      %913 = vrot.lane.b32.xlu0 %v632, 112
      %v914 = vpop.permute.xlu0 %913
      %915 = vrot.lane.b32.xlu0 %v635, 112
      %v916 = vpop.permute.xlu0 %915
      %917 = vrot.lane.b32.xlu0 %v638, 112
      %v918 = vpop.permute.xlu0 %917
      %919 = vrot.lane.b32.xlu0 %v641, 112
      %v920 = vpop.permute.xlu0 %919
      %921 = vrot.lane.b32.xlu0 %v644, 112
      %v922 = vpop.permute.xlu0 %921
      %923 = vrot.lane.b32.xlu0 %v682, 112
      %v924 = vpop.permute.xlu0 %923
      %925 = vrot.lane.b32.xlu0 %v685, 112
      %v926 = vpop.permute.xlu0 %925
      %v927 = vsel %vm692, %v914, 0
      %v929 = vsel %vm692, %v916, 0
      %v931 = vsel %vm692, %v918, 0
      %v933 = vsel %vm692, %v920, 0
      %v935 = vsel %vm692, %v922, 0
      %v937 = vsel %vm692, %v924, 0
      %v939 = vsel %vm692, %v926, 0
      %941 = vmatpush.xpose.msra.mxu0 0.0
      %942 = vmatpush.xpose.msra.mxu0 0.0
      %943 = vmatpush.xpose.msra.mxu0 0.0
      %944 = vmatpush.xpose.msra.mxu0 0.0
      %945 = vmatpush.xpose.msra.mxu0 0.0
      %946 = vmatpush.xpose.msra.mxu0 0.0
      %947 = vmatpush.xpose.msra.mxu0 0.0
      %948 = vmatpush.xpose.msra.mxu0 0.0
      %949 = vmatpush.xpose.msra.mxu0 0.0
      %950 = vmatpush.xpose.msra.mxu0 0.0
      %951 = vmatpush.xpose.msra.mxu0 0.0
      %952 = vmatpush.xpose.msra.mxu0 0.0
      %953 = vmatpush.xpose.msra.mxu0 0.0
      %954 = vmatpush.xpose.msra.mxu0 0.0
      %955 = vmatpush.xpose.msra.mxu0 %v939
      %956 = vmatpush.xpose.msra.mxu0 %v937
      %957 = vmatmul.f32.gmra.mxu0 %v927
      %v958 = vpop.f32.mrf.mxu0
      %v959 = vadd.f32 0.0, %v958
      %960 = vmatmul.f32.gmra.mxu0 %v929
      %v961 = vpop.f32.mrf.mxu0
      %v962 = vadd.f32 0.0, %v961
      %963 = vmatmul.f32.gmra.mxu0 %v931
      %v964 = vpop.f32.mrf.mxu0
      %v965 = vadd.f32 0.0, %v964
      %966 = vmatmul.f32.gmra.mxu0 %v933
      %v967 = vpop.f32.mrf.mxu0
      %v968 = vadd.f32 0.0, %v967
      %969 = vmatmul.f32.gmra.mxu0 %v935
      %v970 = vpop.f32.mrf.mxu0
      %v971 = vadd.f32 0.0, %v970
      %972 = vdwg.mxu0
      %v973 = vmul.f32 %v959, 0.25
      %v974 = vmul.f32 %v962, 0.25
      %v975 = vmul.f32 %v965, 0.25
      %v976 = vmul.f32 %v968, 0.25
      %v977 = vmul.f32 %v971, 0.25
      %v978 = vsel %vm692, %v973, -inf
      %979 = vmax.xlane.f32.xlu0 %v978
      %v980 = vpop.xlane.xlu0 %979
      %v981 = vsel %vm692, %v974, -inf
      %982 = vmax.xlane.f32.xlu0 %v981
      %v983 = vpop.xlane.xlu0 %982
      %v984 = vsel %vm692, %v975, -inf
      %985 = vmax.xlane.f32.xlu0 %v984
      %v986 = vpop.xlane.xlu0 %985
      %v987 = vsel %vm692, %v976, -inf
      %988 = vmax.xlane.f32.xlu0 %v987
      %v989 = vpop.xlane.xlu0 %988
      %v990 = vsel %vm692, %v977, -inf
      %991 = vmax.xlane.f32.xlu0 %v990
      %v992 = vpop.xlane.xlu0 %991
      %v993 = vsub.f32 %v973, %v980
      %v994 = vsub.f32 %v974, %v983
      %v995 = vsub.f32 %v975, %v986
      %v996 = vsub.f32 %v976, %v989
      %v997 = vsub.f32 %v977, %v992
      %v998 = vmul.f32 %v993, 1.442695
      %v999 = vpow.pop %v998
      %v1000 = vmul.f32 %v994, 1.442695
      %v1001 = vpow.pop %v1000
      %v1002 = vmul.f32 %v995, 1.442695
      %v1003 = vpow.pop %v1002
      %v1004 = vmul.f32 %v996, 1.442695
      %v1005 = vpow.pop %v1004
      %v1006 = vmul.f32 %v997, 1.442695
      %v1007 = vpow.pop %v1006
      %v1008 = vsel %vm692, %v999, 0.0
      %1009 = vadd.xlane.f32.xlu0 %v1008
      %v1010 = vpop.xlane.xlu0 %1009
      %v1011 = vsel %vm692, %v1001, 0.0
      %1012 = vadd.xlane.f32.xlu0 %v1011
      %v1013 = vpop.xlane.xlu0 %1012
      %v1014 = vsel %vm692, %v1003, 0.0
      %1015 = vadd.xlane.f32.xlu0 %v1014
      %v1016 = vpop.xlane.xlu0 %1015
      %v1017 = vsel %vm692, %v1005, 0.0
      %1018 = vadd.xlane.f32.xlu0 %v1017
      %v1019 = vpop.xlane.xlu0 %1018
      %v1020 = vsel %vm692, %v1007, 0.0
      %1021 = vadd.xlane.f32.xlu0 %v1020
      %v1022 = vpop.xlane.xlu0 %1021
      %v1023 = vrcp.pop %v1010
      %v1024 = vrcp.pop %v1013
      %v1025 = vrcp.pop %v1016
      %v1026 = vrcp.pop %v1019
      %v1027 = vrcp.pop %v1022
      %v1028 = vmul.f32 %v999, %v1023
      %v1029 = vmul.f32 %v1001, %v1024
      %v1030 = vmul.f32 %v1003, %v1025
      %v1031 = vmul.f32 %v1005, %v1026
      %v1032 = vmul.f32 %v1007, %v1027
      %1033 = vrot.lane.b32.xlu0 %v682, 48
      %v1034 = vpop.permute.xlu0 %1033
      %1035 = vrot.lane.b32.xlu0 %v685, 48
      %v1036 = vpop.permute.xlu0 %1035
      %v1040 = vsel %vm692, %v1028, 0
      %v1043 = vsel %vm692, %v1029, 0
      %v1046 = vsel %vm692, %v1030, 0
      %v1049 = vsel %vm692, %v1031, 0
      %v1052 = vsel %vm692, %v1032, 0
      %1054 = vmatpush.msra.mxu0 0.0
      %1055 = vmatpush.msra.mxu0 0.0
      %1056 = vmatpush.msra.mxu0 0.0
      %1057 = vmatpush.msra.mxu0 0.0
      %1058 = vmatpush.msra.mxu0 0.0
      %1059 = vmatpush.msra.mxu0 0.0
      %1060 = vmatpush.msra.mxu0 0.0
      %1061 = vmatpush.msra.mxu0 0.0
      %1062 = vmatpush.msra.mxu0 0.0
      %1063 = vmatpush.msra.mxu0 0.0
      %1064 = vmatpush.msra.mxu0 0.0
      %1065 = vmatpush.msra.mxu0 0.0
      %1066 = vmatpush.msra.mxu0 0.0
      %1067 = vmatpush.msra.mxu0 0.0
      %1068 = vmatpush.msra.mxu0 %v1036
      %1069 = vmatpush.msra.mxu0 %v1034
      %1070 = vmatmul.f32.gmra.mxu0 %v1040
      %v1071 = vpop.f32.mrf.mxu0
      %v1072 = vadd.f32 0.0, %v1071
      %1073 = vmatmul.f32.gmra.mxu0 %v1043
      %v1074 = vpop.f32.mrf.mxu0
      %v1075 = vadd.f32 0.0, %v1074
      %1076 = vmatmul.f32.gmra.mxu0 %v1046
      %v1077 = vpop.f32.mrf.mxu0
      %v1078 = vadd.f32 0.0, %v1077
      %1079 = vmatmul.f32.gmra.mxu0 %v1049
      %v1080 = vpop.f32.mrf.mxu0
      %v1081 = vadd.f32 0.0, %v1080
      %1082 = vmatmul.f32.gmra.mxu0 %v1052
      %v1083 = vpop.f32.mrf.mxu0
      %v1084 = vadd.f32 0.0, %v1083
      %1085 = vdwg.mxu0
      %v1086 = vld [vmem:[%s7 + $0x10] sm:$0xff]
      %v1087 = vld [vmem:[%s7 + $0x18] sm:$0xff]
      %v1089 = vsel %vm692, %v1072, 0
      %v1092 = vsel %vm692, %v1075, 0
      %v1095 = vsel %vm692, %v1078, 0
      %v1098 = vsel %vm692, %v1081, 0
      %v1101 = vsel %vm692, %v1084, 0
      %1103 = vmatpush.msra.mxu0 0.0
      %1104 = vmatpush.msra.mxu0 0.0
      %1105 = vmatpush.msra.mxu0 0.0
      %1106 = vmatpush.msra.mxu0 0.0
      %1107 = vmatpush.msra.mxu0 0.0
      %1108 = vmatpush.msra.mxu0 0.0
      %1109 = vmatpush.msra.mxu0 0.0
      %1110 = vmatpush.msra.mxu0 0.0
      %1111 = vmatpush.msra.mxu0 0.0
      %1112 = vmatpush.msra.mxu0 0.0
      %1113 = vmatpush.msra.mxu0 0.0
      %1114 = vmatpush.msra.mxu0 0.0
      %1115 = vmatpush.msra.mxu0 0.0
      %1116 = vmatpush.msra.mxu0 0.0
      %1117 = vmatpush.msra.mxu0 %v1087
      %1118 = vmatpush.msra.mxu0 %v1086
      %1119 = vmatmul.f32.gmra.mxu0 %v1089
      %v1120 = vpop.f32.mrf.mxu0
      %v1121 = vadd.f32 0.0, %v1120
      %1122 = vmatmul.f32.gmra.mxu0 %v1092
      %v1123 = vpop.f32.mrf.mxu0
      %v1124 = vadd.f32 0.0, %v1123
      %1125 = vmatmul.f32.gmra.mxu0 %v1095
      %v1126 = vpop.f32.mrf.mxu0
      %v1127 = vadd.f32 0.0, %v1126
      %1128 = vmatmul.f32.gmra.mxu0 %v1098
      %v1129 = vpop.f32.mrf.mxu0
      %v1130 = vadd.f32 0.0, %v1129
      %1131 = vmatmul.f32.gmra.mxu0 %v1101
      %v1132 = vpop.f32.mrf.mxu0
      %v1133 = vadd.f32 0.0, %v1132
      %1134 = vdwg.mxu0
      %v1135 = vadd.f32 %v908, %v1121
      %v1136 = vadd.f32 %v909, %v1124
      %v1137 = vadd.f32 %v910, %v1127
      %v1138 = vadd.f32 %v911, %v1130
      %v1139 = vadd.f32 %v912, %v1133
      %1140 = vrot.lane.b32.xlu0 %v632, 96
      %v1141 = vpop.permute.xlu0 %1140
      %1142 = vrot.lane.b32.xlu0 %v635, 96
      %v1143 = vpop.permute.xlu0 %1142
      %1144 = vrot.lane.b32.xlu0 %v638, 96
      %v1145 = vpop.permute.xlu0 %1144
      %1146 = vrot.lane.b32.xlu0 %v641, 96
      %v1147 = vpop.permute.xlu0 %1146
      %1148 = vrot.lane.b32.xlu0 %v644, 96
      %v1149 = vpop.permute.xlu0 %1148
      %1150 = vrot.lane.b32.xlu0 %v682, 96
      %v1151 = vpop.permute.xlu0 %1150
      %1152 = vrot.lane.b32.xlu0 %v685, 96
      %v1153 = vpop.permute.xlu0 %1152
      %v1154 = vsel %vm692, %v1141, 0
      %v1156 = vsel %vm692, %v1143, 0
      %v1158 = vsel %vm692, %v1145, 0
      %v1160 = vsel %vm692, %v1147, 0
      %v1162 = vsel %vm692, %v1149, 0
      %v1164 = vsel %vm692, %v1151, 0
      %v1166 = vsel %vm692, %v1153, 0
      %1168 = vmatpush.xpose.msra.mxu0 0.0
      %1169 = vmatpush.xpose.msra.mxu0 0.0
      %1170 = vmatpush.xpose.msra.mxu0 0.0
      %1171 = vmatpush.xpose.msra.mxu0 0.0
      %1172 = vmatpush.xpose.msra.mxu0 0.0
      %1173 = vmatpush.xpose.msra.mxu0 0.0
      %1174 = vmatpush.xpose.msra.mxu0 0.0
      %1175 = vmatpush.xpose.msra.mxu0 0.0
      %1176 = vmatpush.xpose.msra.mxu0 0.0
      %1177 = vmatpush.xpose.msra.mxu0 0.0
      %1178 = vmatpush.xpose.msra.mxu0 0.0
      %1179 = vmatpush.xpose.msra.mxu0 0.0
      %1180 = vmatpush.xpose.msra.mxu0 0.0
      %1181 = vmatpush.xpose.msra.mxu0 0.0
      %1182 = vmatpush.xpose.msra.mxu0 %v1166
      %1183 = vmatpush.xpose.msra.mxu0 %v1164
      %1184 = vmatmul.f32.gmra.mxu0 %v1154
      %v1185 = vpop.f32.mrf.mxu0
      %v1186 = vadd.f32 0.0, %v1185
      %1187 = vmatmul.f32.gmra.mxu0 %v1156
      %v1188 = vpop.f32.mrf.mxu0
      %v1189 = vadd.f32 0.0, %v1188
      %1190 = vmatmul.f32.gmra.mxu0 %v1158
      %v1191 = vpop.f32.mrf.mxu0
      %v1192 = vadd.f32 0.0, %v1191
      %1193 = vmatmul.f32.gmra.mxu0 %v1160
      %v1194 = vpop.f32.mrf.mxu0
      %v1195 = vadd.f32 0.0, %v1194
      %1196 = vmatmul.f32.gmra.mxu0 %v1162
      %v1197 = vpop.f32.mrf.mxu0
      %v1198 = vadd.f32 0.0, %v1197
      %1199 = vdwg.mxu0
      %v1200 = vmul.f32 %v1186, 0.25
      %v1201 = vmul.f32 %v1189, 0.25
      %v1202 = vmul.f32 %v1192, 0.25
      %v1203 = vmul.f32 %v1195, 0.25
      %v1204 = vmul.f32 %v1198, 0.25
      %v1205 = vsel %vm692, %v1200, -inf
      %1206 = vmax.xlane.f32.xlu0 %v1205
      %v1207 = vpop.xlane.xlu0 %1206
      %v1208 = vsel %vm692, %v1201, -inf
      %1209 = vmax.xlane.f32.xlu0 %v1208
      %v1210 = vpop.xlane.xlu0 %1209
      %v1211 = vsel %vm692, %v1202, -inf
      %1212 = vmax.xlane.f32.xlu0 %v1211
      %v1213 = vpop.xlane.xlu0 %1212
      %v1214 = vsel %vm692, %v1203, -inf
      %1215 = vmax.xlane.f32.xlu0 %v1214
      %v1216 = vpop.xlane.xlu0 %1215
      %v1217 = vsel %vm692, %v1204, -inf
      %1218 = vmax.xlane.f32.xlu0 %v1217
      %v1219 = vpop.xlane.xlu0 %1218
      %v1220 = vsub.f32 %v1200, %v1207
      %v1221 = vsub.f32 %v1201, %v1210
      %v1222 = vsub.f32 %v1202, %v1213
      %v1223 = vsub.f32 %v1203, %v1216
      %v1224 = vsub.f32 %v1204, %v1219
      %v1225 = vmul.f32 %v1220, 1.442695
      %v1226 = vpow.pop %v1225
      %v1227 = vmul.f32 %v1221, 1.442695
      %v1228 = vpow.pop %v1227
      %v1229 = vmul.f32 %v1222, 1.442695
      %v1230 = vpow.pop %v1229
      %v1231 = vmul.f32 %v1223, 1.442695
      %v1232 = vpow.pop %v1231
      %v1233 = vmul.f32 %v1224, 1.442695
      %v1234 = vpow.pop %v1233
      %v1235 = vsel %vm692, %v1226, 0.0
      %1236 = vadd.xlane.f32.xlu0 %v1235
      %v1237 = vpop.xlane.xlu0 %1236
      %v1238 = vsel %vm692, %v1228, 0.0
      %1239 = vadd.xlane.f32.xlu0 %v1238
      %v1240 = vpop.xlane.xlu0 %1239
      %v1241 = vsel %vm692, %v1230, 0.0
      %1242 = vadd.xlane.f32.xlu0 %v1241
      %v1243 = vpop.xlane.xlu0 %1242
      %v1244 = vsel %vm692, %v1232, 0.0
      %1245 = vadd.xlane.f32.xlu0 %v1244
      %v1246 = vpop.xlane.xlu0 %1245
      %v1247 = vsel %vm692, %v1234, 0.0
      %1248 = vadd.xlane.f32.xlu0 %v1247
      %v1249 = vpop.xlane.xlu0 %1248
      %v1250 = vrcp.pop %v1237
      %v1251 = vrcp.pop %v1240
      %v1252 = vrcp.pop %v1243
      %v1253 = vrcp.pop %v1246
      %v1254 = vrcp.pop %v1249
      %v1255 = vmul.f32 %v1226, %v1250
      %v1256 = vmul.f32 %v1228, %v1251
      %v1257 = vmul.f32 %v1230, %v1252
      %v1258 = vmul.f32 %v1232, %v1253
      %v1259 = vmul.f32 %v1234, %v1254
      %1260 = vrot.lane.b32.xlu0 %v682, 32
      %v1261 = vpop.permute.xlu0 %1260
      %1262 = vrot.lane.b32.xlu0 %v685, 32
      %v1263 = vpop.permute.xlu0 %1262
      %v1267 = vsel %vm692, %v1255, 0
      %v1270 = vsel %vm692, %v1256, 0
      %v1273 = vsel %vm692, %v1257, 0
      %v1276 = vsel %vm692, %v1258, 0
      %v1279 = vsel %vm692, %v1259, 0
      %1281 = vmatpush.msra.mxu0 0.0
      %1282 = vmatpush.msra.mxu0 0.0
      %1283 = vmatpush.msra.mxu0 0.0
      %1284 = vmatpush.msra.mxu0 0.0
      %1285 = vmatpush.msra.mxu0 0.0
      %1286 = vmatpush.msra.mxu0 0.0
      %1287 = vmatpush.msra.mxu0 0.0
      %1288 = vmatpush.msra.mxu0 0.0
      %1289 = vmatpush.msra.mxu0 0.0
      %1290 = vmatpush.msra.mxu0 0.0
      %1291 = vmatpush.msra.mxu0 0.0
      %1292 = vmatpush.msra.mxu0 0.0
      %1293 = vmatpush.msra.mxu0 0.0
      %1294 = vmatpush.msra.mxu0 0.0
      %1295 = vmatpush.msra.mxu0 %v1263
      %1296 = vmatpush.msra.mxu0 %v1261
      %1297 = vmatmul.f32.gmra.mxu0 %v1267
      %v1298 = vpop.f32.mrf.mxu0
      %v1299 = vadd.f32 0.0, %v1298
      %1300 = vmatmul.f32.gmra.mxu0 %v1270
      %v1301 = vpop.f32.mrf.mxu0
      %v1302 = vadd.f32 0.0, %v1301
      %1303 = vmatmul.f32.gmra.mxu0 %v1273
      %v1304 = vpop.f32.mrf.mxu0
      %v1305 = vadd.f32 0.0, %v1304
      %1306 = vmatmul.f32.gmra.mxu0 %v1276
      %v1307 = vpop.f32.mrf.mxu0
      %v1308 = vadd.f32 0.0, %v1307
      %1309 = vmatmul.f32.gmra.mxu0 %v1279
      %v1310 = vpop.f32.mrf.mxu0
      %v1311 = vadd.f32 0.0, %v1310
      %1312 = vdwg.mxu0
      %v1313 = vld [vmem:[%s7 + $0x20] sm:$0xff]
      %v1314 = vld [vmem:[%s7 + $0x28] sm:$0xff]
      %v1316 = vsel %vm692, %v1299, 0
      %v1319 = vsel %vm692, %v1302, 0
      %v1322 = vsel %vm692, %v1305, 0
      %v1325 = vsel %vm692, %v1308, 0
      %v1328 = vsel %vm692, %v1311, 0
      %1330 = vmatpush.msra.mxu0 0.0
      %1331 = vmatpush.msra.mxu0 0.0
      %1332 = vmatpush.msra.mxu0 0.0
      %1333 = vmatpush.msra.mxu0 0.0
      %1334 = vmatpush.msra.mxu0 0.0
      %1335 = vmatpush.msra.mxu0 0.0
      %1336 = vmatpush.msra.mxu0 0.0
      %1337 = vmatpush.msra.mxu0 0.0
      %1338 = vmatpush.msra.mxu0 0.0
      %1339 = vmatpush.msra.mxu0 0.0
      %1340 = vmatpush.msra.mxu0 0.0
      %1341 = vmatpush.msra.mxu0 0.0
      %1342 = vmatpush.msra.mxu0 0.0
      %1343 = vmatpush.msra.mxu0 0.0
      %1344 = vmatpush.msra.mxu0 %v1314
      %1345 = vmatpush.msra.mxu0 %v1313
      %1346 = vmatmul.f32.gmra.mxu0 %v1316
      %v1347 = vpop.f32.mrf.mxu0
      %v1348 = vadd.f32 0.0, %v1347
      %1349 = vmatmul.f32.gmra.mxu0 %v1319
      %v1350 = vpop.f32.mrf.mxu0
      %v1351 = vadd.f32 0.0, %v1350
      %1352 = vmatmul.f32.gmra.mxu0 %v1322
      %v1353 = vpop.f32.mrf.mxu0
      %v1354 = vadd.f32 0.0, %v1353
      %1355 = vmatmul.f32.gmra.mxu0 %v1325
      %v1356 = vpop.f32.mrf.mxu0
      %v1357 = vadd.f32 0.0, %v1356
      %1358 = vmatmul.f32.gmra.mxu0 %v1328
      %v1359 = vpop.f32.mrf.mxu0
      %v1360 = vadd.f32 0.0, %v1359
      %1361 = vdwg.mxu0
      %v1362 = vadd.f32 %v1135, %v1348
      %v1363 = vadd.f32 %v1136, %v1351
      %v1364 = vadd.f32 %v1137, %v1354
      %v1365 = vadd.f32 %v1138, %v1357
      %v1366 = vadd.f32 %v1139, %v1360
      %1367 = vrot.lane.b32.xlu0 %v632, 80
      %v1368 = vpop.permute.xlu0 %1367
      %1369 = vrot.lane.b32.xlu0 %v635, 80
      %v1370 = vpop.permute.xlu0 %1369
      %1371 = vrot.lane.b32.xlu0 %v638, 80
      %v1372 = vpop.permute.xlu0 %1371
      %1373 = vrot.lane.b32.xlu0 %v641, 80
      %v1374 = vpop.permute.xlu0 %1373
      %1375 = vrot.lane.b32.xlu0 %v644, 80
      %v1376 = vpop.permute.xlu0 %1375
      %1377 = vrot.lane.b32.xlu0 %v682, 80
      %v1378 = vpop.permute.xlu0 %1377
      %1379 = vrot.lane.b32.xlu0 %v685, 80
      %v1380 = vpop.permute.xlu0 %1379
      %v1381 = vsel %vm692, %v1368, 0
      %v1383 = vsel %vm692, %v1370, 0
      %v1385 = vsel %vm692, %v1372, 0
      %v1387 = vsel %vm692, %v1374, 0
      %v1389 = vsel %vm692, %v1376, 0
      %v1391 = vsel %vm692, %v1378, 0
      %v1393 = vsel %vm692, %v1380, 0
      %1395 = vmatpush.xpose.msra.mxu0 0.0
      %1396 = vmatpush.xpose.msra.mxu0 0.0
      %1397 = vmatpush.xpose.msra.mxu0 0.0
      %1398 = vmatpush.xpose.msra.mxu0 0.0
      %1399 = vmatpush.xpose.msra.mxu0 0.0
      %1400 = vmatpush.xpose.msra.mxu0 0.0
      %1401 = vmatpush.xpose.msra.mxu0 0.0
      %1402 = vmatpush.xpose.msra.mxu0 0.0
      %1403 = vmatpush.xpose.msra.mxu0 0.0
      %1404 = vmatpush.xpose.msra.mxu0 0.0
      %1405 = vmatpush.xpose.msra.mxu0 0.0
      %1406 = vmatpush.xpose.msra.mxu0 0.0
      %1407 = vmatpush.xpose.msra.mxu0 0.0
      %1408 = vmatpush.xpose.msra.mxu0 0.0
      %1409 = vmatpush.xpose.msra.mxu0 %v1393
      %1410 = vmatpush.xpose.msra.mxu0 %v1391
      %1411 = vmatmul.f32.gmra.mxu0 %v1381
      %v1412 = vpop.f32.mrf.mxu0
      %v1413 = vadd.f32 0.0, %v1412
      %1414 = vmatmul.f32.gmra.mxu0 %v1383
      %v1415 = vpop.f32.mrf.mxu0
      %v1416 = vadd.f32 0.0, %v1415
      %1417 = vmatmul.f32.gmra.mxu0 %v1385
      %v1418 = vpop.f32.mrf.mxu0
      %v1419 = vadd.f32 0.0, %v1418
      %1420 = vmatmul.f32.gmra.mxu0 %v1387
      %v1421 = vpop.f32.mrf.mxu0
      %v1422 = vadd.f32 0.0, %v1421
      %1423 = vmatmul.f32.gmra.mxu0 %v1389
      %v1424 = vpop.f32.mrf.mxu0
      %v1425 = vadd.f32 0.0, %v1424
      %1426 = vdwg.mxu0
      %v1427 = vmul.f32 %v1413, 0.25
      %v1428 = vmul.f32 %v1416, 0.25
      %v1429 = vmul.f32 %v1419, 0.25
      %v1430 = vmul.f32 %v1422, 0.25
      %v1431 = vmul.f32 %v1425, 0.25
      %v1432 = vsel %vm692, %v1427, -inf
      %1433 = vmax.xlane.f32.xlu0 %v1432
      %v1434 = vpop.xlane.xlu0 %1433
      %v1435 = vsel %vm692, %v1428, -inf
      %1436 = vmax.xlane.f32.xlu0 %v1435
      %v1437 = vpop.xlane.xlu0 %1436
      %v1438 = vsel %vm692, %v1429, -inf
      %1439 = vmax.xlane.f32.xlu0 %v1438
      %v1440 = vpop.xlane.xlu0 %1439
      %v1441 = vsel %vm692, %v1430, -inf
      %1442 = vmax.xlane.f32.xlu0 %v1441
      %v1443 = vpop.xlane.xlu0 %1442
      %v1444 = vsel %vm692, %v1431, -inf
      %1445 = vmax.xlane.f32.xlu0 %v1444
      %v1446 = vpop.xlane.xlu0 %1445
      %v1447 = vsub.f32 %v1427, %v1434
      %v1448 = vsub.f32 %v1428, %v1437
      %v1449 = vsub.f32 %v1429, %v1440
      %v1450 = vsub.f32 %v1430, %v1443
      %v1451 = vsub.f32 %v1431, %v1446
      %v1452 = vmul.f32 %v1447, 1.442695
      %v1453 = vpow.pop %v1452
      %v1454 = vmul.f32 %v1448, 1.442695
      %v1455 = vpow.pop %v1454
      %v1456 = vmul.f32 %v1449, 1.442695
      %v1457 = vpow.pop %v1456
      %v1458 = vmul.f32 %v1450, 1.442695
      %v1459 = vpow.pop %v1458
      %v1460 = vmul.f32 %v1451, 1.442695
      %v1461 = vpow.pop %v1460
      %v1462 = vsel %vm692, %v1453, 0.0
      %1463 = vadd.xlane.f32.xlu0 %v1462
      %v1464 = vpop.xlane.xlu0 %1463
      %v1465 = vsel %vm692, %v1455, 0.0
      %1466 = vadd.xlane.f32.xlu0 %v1465
      %v1467 = vpop.xlane.xlu0 %1466
      %v1468 = vsel %vm692, %v1457, 0.0
      %1469 = vadd.xlane.f32.xlu0 %v1468
      %v1470 = vpop.xlane.xlu0 %1469
      %v1471 = vsel %vm692, %v1459, 0.0
      %1472 = vadd.xlane.f32.xlu0 %v1471
      %v1473 = vpop.xlane.xlu0 %1472
      %v1474 = vsel %vm692, %v1461, 0.0
      %1475 = vadd.xlane.f32.xlu0 %v1474
      %v1476 = vpop.xlane.xlu0 %1475
      %v1477 = vrcp.pop %v1464
      %v1478 = vrcp.pop %v1467
      %v1479 = vrcp.pop %v1470
      %v1480 = vrcp.pop %v1473
      %v1481 = vrcp.pop %v1476
      %v1482 = vmul.f32 %v1453, %v1477
      %v1483 = vmul.f32 %v1455, %v1478
      %v1484 = vmul.f32 %v1457, %v1479
      %v1485 = vmul.f32 %v1459, %v1480
      %v1486 = vmul.f32 %v1461, %v1481
      %1487 = vrot.lane.b32.xlu0 %v682, 16
      %v1488 = vpop.permute.xlu0 %1487
      %1489 = vrot.lane.b32.xlu0 %v685, 16
      %v1490 = vpop.permute.xlu0 %1489
      %v1494 = vsel %vm692, %v1482, 0
      %v1497 = vsel %vm692, %v1483, 0
      %v1500 = vsel %vm692, %v1484, 0
      %v1503 = vsel %vm692, %v1485, 0
      %v1506 = vsel %vm692, %v1486, 0
      %1508 = vmatpush.msra.mxu0 0.0
      %1509 = vmatpush.msra.mxu0 0.0
      %1510 = vmatpush.msra.mxu0 0.0
      %1511 = vmatpush.msra.mxu0 0.0
      %1512 = vmatpush.msra.mxu0 0.0
      %1513 = vmatpush.msra.mxu0 0.0
      %1514 = vmatpush.msra.mxu0 0.0
      %1515 = vmatpush.msra.mxu0 0.0
      %1516 = vmatpush.msra.mxu0 0.0
      %1517 = vmatpush.msra.mxu0 0.0
      %1518 = vmatpush.msra.mxu0 0.0
      %1519 = vmatpush.msra.mxu0 0.0
      %1520 = vmatpush.msra.mxu0 0.0
      %1521 = vmatpush.msra.mxu0 0.0
      %1522 = vmatpush.msra.mxu0 %v1490
      %1523 = vmatpush.msra.mxu0 %v1488
      %1524 = vmatmul.f32.gmra.mxu0 %v1494
      %v1525 = vpop.f32.mrf.mxu0
      %v1526 = vadd.f32 0.0, %v1525
      %1527 = vmatmul.f32.gmra.mxu0 %v1497
      %v1528 = vpop.f32.mrf.mxu0
      %v1529 = vadd.f32 0.0, %v1528
      %1530 = vmatmul.f32.gmra.mxu0 %v1500
      %v1531 = vpop.f32.mrf.mxu0
      %v1532 = vadd.f32 0.0, %v1531
      %1533 = vmatmul.f32.gmra.mxu0 %v1503
      %v1534 = vpop.f32.mrf.mxu0
      %v1535 = vadd.f32 0.0, %v1534
      %1536 = vmatmul.f32.gmra.mxu0 %v1506
      %v1537 = vpop.f32.mrf.mxu0
      %v1538 = vadd.f32 0.0, %v1537
      %1539 = vdwg.mxu0
      %v1540 = vld [vmem:[%s7 + $0x30] sm:$0xff]
      %v1541 = vld [vmem:[%s7 + $0x38] sm:$0xff]
      %v1543 = vsel %vm692, %v1526, 0
      %v1546 = vsel %vm692, %v1529, 0
      %v1549 = vsel %vm692, %v1532, 0
      %v1552 = vsel %vm692, %v1535, 0
      %v1555 = vsel %vm692, %v1538, 0
      %1557 = vmatpush.msra.mxu0 0.0
      %1558 = vmatpush.msra.mxu0 0.0
      %1559 = vmatpush.msra.mxu0 0.0
      %1560 = vmatpush.msra.mxu0 0.0
      %1561 = vmatpush.msra.mxu0 0.0
      %1562 = vmatpush.msra.mxu0 0.0
      %1563 = vmatpush.msra.mxu0 0.0
      %1564 = vmatpush.msra.mxu0 0.0
      %1565 = vmatpush.msra.mxu0 0.0
      %1566 = vmatpush.msra.mxu0 0.0
      %1567 = vmatpush.msra.mxu0 0.0
      %1568 = vmatpush.msra.mxu0 0.0
      %1569 = vmatpush.msra.mxu0 0.0
      %1570 = vmatpush.msra.mxu0 0.0
      %1571 = vmatpush.msra.mxu0 %v1541
      %1572 = vmatpush.msra.mxu0 %v1540
      %1573 = vmatmul.f32.gmra.mxu0 %v1543
      %v1574 = vpop.f32.mrf.mxu0
      %v1575 = vadd.f32 0.0, %v1574
      %1576 = vmatmul.f32.gmra.mxu0 %v1546
      %v1577 = vpop.f32.mrf.mxu0
      %v1578 = vadd.f32 0.0, %v1577
      %1579 = vmatmul.f32.gmra.mxu0 %v1549
      %v1580 = vpop.f32.mrf.mxu0
      %v1581 = vadd.f32 0.0, %v1580
      %1582 = vmatmul.f32.gmra.mxu0 %v1552
      %v1583 = vpop.f32.mrf.mxu0
      %v1584 = vadd.f32 0.0, %v1583
      %1585 = vmatmul.f32.gmra.mxu0 %v1555
      %v1586 = vpop.f32.mrf.mxu0
      %v1587 = vadd.f32 0.0, %v1586
      %1588 = vdwg.mxu0
      %v1589 = vadd.f32 %v1362, %v1575
      %v1590 = vadd.f32 %v1363, %v1578
      %v1591 = vadd.f32 %v1364, %v1581
      %v1592 = vadd.f32 %v1365, %v1584
      %v1593 = vadd.f32 %v1366, %v1587
      %v1594 = vadd.f32 %v569, %v1589
      %v1595 = vadd.f32 %v570, %v1590
      %v1596 = vadd.f32 %v571, %v1591
      %v1597 = vadd.f32 %v572, %v1592
      %v1598 = vadd.f32 %v573, %v1593
      %v1599 = vld [vmem:[%s9] sm:$0x1]
      %v1600 = vld [vmem:[%s10] sm:$0x1]
      %v1601 = vsel %vm598, %v1594, 0.0
      %1602 = vadd.xlane.f32.xlu0 %v1601
      %v1603 = vpop.xlane.xlu0 %1602
      %v1604 = vsel %vm598, %v1595, 0.0
      %1605 = vadd.xlane.f32.xlu0 %v1604
      %v1606 = vpop.xlane.xlu0 %1605
      %v1607 = vsel %vm598, %v1596, 0.0
      %1608 = vadd.xlane.f32.xlu0 %v1607
      %v1609 = vpop.xlane.xlu0 %1608
      %v1610 = vsel %vm598, %v1597, 0.0
      %1611 = vadd.xlane.f32.xlu0 %v1610
      %v1612 = vpop.xlane.xlu0 %1611
      %v1613 = vsel %vm598, %v1598, 0.0
      %1614 = vadd.xlane.f32.xlu0 %v1613
      %v1615 = vpop.xlane.xlu0 %1614
      %v1616 = vrcp.pop 64.0
      %v1617 = vmul.f32 64.0, %v1616
      %v1618 = vsub.f32 1.0, %v1617
      %v1619 = vmul.f32 %v1616, %v1618
      %v1620 = vadd.f32 %v1616, %v1619
      %vm1621 = vweird.f32 %v1616
      %v1622 = vsel %vm1621, %v1616, %v1620
      %v1623 = vmul.f32 %v1603, %v1622
      %v1624 = vmul.f32 %v1606, %v1622
      %v1625 = vmul.f32 %v1609, %v1622
      %v1626 = vmul.f32 %v1612, %v1622
      %v1627 = vmul.f32 %v1615, %v1622
      %v1628 = vsub.f32 %v1594, %v1623
      %v1629 = vsub.f32 %v1595, %v1624
      %v1630 = vsub.f32 %v1596, %v1625
      %v1631 = vsub.f32 %v1597, %v1626
      %v1632 = vsub.f32 %v1598, %v1627
      %v1633 = vmul.f32 %v1628, %v1628
      %v1634 = vmul.f32 %v1629, %v1629
      %v1635 = vmul.f32 %v1630, %v1630
      %v1636 = vmul.f32 %v1631, %v1631
      %v1637 = vmul.f32 %v1632, %v1632
      %v1638 = vsel %vm598, %v1633, 0.0
      %1639 = vadd.xlane.f32.xlu0 %v1638
      %v1640 = vpop.xlane.xlu0 %1639
      %v1641 = vsel %vm598, %v1634, 0.0
      %1642 = vadd.xlane.f32.xlu0 %v1641
      %v1643 = vpop.xlane.xlu0 %1642
      %v1644 = vsel %vm598, %v1635, 0.0
      %1645 = vadd.xlane.f32.xlu0 %v1644
      %v1646 = vpop.xlane.xlu0 %1645
      %v1647 = vsel %vm598, %v1636, 0.0
      %1648 = vadd.xlane.f32.xlu0 %v1647
      %v1649 = vpop.xlane.xlu0 %1648
      %v1650 = vsel %vm598, %v1637, 0.0
      %1651 = vadd.xlane.f32.xlu0 %v1650
      %v1652 = vpop.xlane.xlu0 %1651
      %v1653 = vmul.f32 %v1640, %v1622
      %v1654 = vmul.f32 %v1643, %v1622
      %v1655 = vmul.f32 %v1646, %v1622
      %v1656 = vmul.f32 %v1649, %v1622
      %v1657 = vmul.f32 %v1652, %v1622
      %v1658 = vadd.f32 %v1653, 1e-05
      %v1659 = vadd.f32 %v1654, 1e-05
      %v1660 = vadd.f32 %v1655, 1e-05
      %v1661 = vadd.f32 %v1656, 1e-05
      %v1662 = vadd.f32 %v1657, 1e-05
      %v1663 = vrsqrt.pop %v1658
      %v1664 = vmul.f32 %v1663, %v1658
      %v1665 = vmul.f32 %v1664, %v1663
      %v1666 = vmul.f32 0.5, %v1665
      %v1667 = vsub.f32 1.5, %v1666
      %v1668 = vmul.f32 %v1663, %v1667
      %vm1669 = vweird.f32 %v1658
      %vm1670 = vweird.f32 %v1663
      %vm1671 = vmor %vm1669, %vm1670
      %v1672 = vsel %vm1671, %v1663, %v1668
      %v1673 = vrsqrt.pop %v1659
      %v1674 = vmul.f32 %v1673, %v1659
      %v1675 = vmul.f32 %v1674, %v1673
      %v1676 = vmul.f32 0.5, %v1675
      %v1677 = vsub.f32 1.5, %v1676
      %v1678 = vmul.f32 %v1673, %v1677
      %vm1679 = vweird.f32 %v1659
      %vm1680 = vweird.f32 %v1673
      %vm1681 = vmor %vm1679, %vm1680
      %v1682 = vsel %vm1681, %v1673, %v1678
      %v1683 = vrsqrt.pop %v1660
      %v1684 = vmul.f32 %v1683, %v1660
      %v1685 = vmul.f32 %v1684, %v1683
      %v1686 = vmul.f32 0.5, %v1685
      %v1687 = vsub.f32 1.5, %v1686
      %v1688 = vmul.f32 %v1683, %v1687
      %vm1689 = vweird.f32 %v1660
      %vm1690 = vweird.f32 %v1683
      %vm1691 = vmor %vm1689, %vm1690
      %v1692 = vsel %vm1691, %v1683, %v1688
      %v1693 = vrsqrt.pop %v1661
      %v1694 = vmul.f32 %v1693, %v1661
      %v1695 = vmul.f32 %v1694, %v1693
      %v1696 = vmul.f32 0.5, %v1695
      %v1697 = vsub.f32 1.5, %v1696
      %v1698 = vmul.f32 %v1693, %v1697
      %vm1699 = vweird.f32 %v1661
      %vm1700 = vweird.f32 %v1693
      %vm1701 = vmor %vm1699, %vm1700
      %v1702 = vsel %vm1701, %v1693, %v1698
      %v1703 = vrsqrt.pop %v1662
      %v1704 = vmul.f32 %v1703, %v1662
      %v1705 = vmul.f32 %v1704, %v1703
      %v1706 = vmul.f32 0.5, %v1705
      %v1707 = vsub.f32 1.5, %v1706
      %v1708 = vmul.f32 %v1703, %v1707
      %vm1709 = vweird.f32 %v1662
      %vm1710 = vweird.f32 %v1703
      %vm1711 = vmor %vm1709, %vm1710
      %v1712 = vsel %vm1711, %v1703, %v1708
      %v1713 = vmul.f32 %v1628, %v1672
      %v1714 = vmul.f32 %v1629, %v1682
      %v1715 = vmul.f32 %v1630, %v1692
      %v1716 = vmul.f32 %v1631, %v1702
      %v1717 = vmul.f32 %v1632, %v1712
      %v1719 = vperm.slane %v1599, 0
      %v1721 = vmul.f32 %v1713, %v1719
      %v1722 = vmul.f32 %v1714, %v1719
      %v1723 = vmul.f32 %v1715, %v1719
      %v1724 = vmul.f32 %v1716, %v1719
      %v1725 = vmul.f32 %v1717, %v1719
      %v1727 = vperm.slane %v1600, 0
      %v1729 = vadd.f32 %v1721, %v1727
      %v1730 = vadd.f32 %v1722, %v1727
      %v1731 = vadd.f32 %v1723, %v1727
      %v1732 = vadd.f32 %v1724, %v1727
      %v1733 = vadd.f32 %v1725, %v1727
      %v1734 = vld [vmem:[%s11] sm:$0xff]
      %v1735 = vld [vmem:[%s11 + $0x8] sm:$0xff]
      %v1736 = vld [vmem:[%s11 + $0x10] sm:$0xff]
      %v1737 = vld [vmem:[%s11 + $0x18] sm:$0xff]
      %v1738 = vld [vmem:[%s11 + $0x20] sm:$0xff]
      %v1739 = vld [vmem:[%s11 + $0x28] sm:$0xff]
      %v1740 = vld [vmem:[%s11 + $0x30] sm:$0xff]
      %v1741 = vld [vmem:[%s11 + $0x38] sm:$0xff]
      %v1742 = vld [vmem:[%s12] sm:$0x1]
      %v1744 = vperm.slane %v1742, 0
      %v1747 = vsel %vm598, %v1729, 0
      %v1750 = vsel %vm598, %v1730, 0
      %v1753 = vsel %vm598, %v1731, 0
      %v1756 = vsel %vm598, %v1732, 0
      %v1759 = vsel %vm598, %v1733, 0
      %1761 = vmatpush.msra.mxu0 0.0
      %1762 = vmatpush.msra.mxu0 0.0
      %1763 = vmatpush.msra.mxu0 0.0
      %1764 = vmatpush.msra.mxu0 0.0
      %1765 = vmatpush.msra.mxu0 0.0
      %1766 = vmatpush.msra.mxu0 0.0
      %1767 = vmatpush.msra.mxu0 0.0
      %1768 = vmatpush.msra.mxu0 0.0
      %1769 = vmatpush.msra.mxu0 %v1741
      %1770 = vmatpush.msra.mxu0 %v1740
      %1771 = vmatpush.msra.mxu0 %v1739
      %1772 = vmatpush.msra.mxu0 %v1738
      %1773 = vmatpush.msra.mxu0 %v1737
      %1774 = vmatpush.msra.mxu0 %v1736
      %1775 = vmatpush.msra.mxu0 %v1735
      %1776 = vmatpush.msra.mxu0 %v1734
      %1777 = vmatmul.f32.gmra.mxu0 %v1747
      %v1778 = vpop.f32.mrf.mxu0
      %v1779 = vadd.f32 %v1744, %v1778
      %1780 = vmatmul.f32.gmra.mxu0 %v1750
      %v1781 = vpop.f32.mrf.mxu0
      %v1782 = vadd.f32 %v1744, %v1781
      %1783 = vmatmul.f32.gmra.mxu0 %v1753
      %v1784 = vpop.f32.mrf.mxu0
      %v1785 = vadd.f32 %v1744, %v1784
      %1786 = vmatmul.f32.gmra.mxu0 %v1756
      %v1787 = vpop.f32.mrf.mxu0
      %v1788 = vadd.f32 %v1744, %v1787
      %1789 = vmatmul.f32.gmra.mxu0 %v1759
      %v1790 = vpop.f32.mrf.mxu0
      %v1791 = vadd.f32 %v1744, %v1790
      %1792 = vdwg.mxu0
      %v1793 = vmul.f32 %v1779, 0.5
      %v1794 = vmul.f32 %v1782, 0.5
      %v1795 = vmul.f32 %v1785, 0.5
      %v1796 = vmul.f32 %v1788, 0.5
      %v1797 = vmul.f32 %v1791, 0.5
      %v1798 = vmul.f32 %v1779, 0.70710677
      %v1799 = vmul.f32 %v1782, 0.70710677
      %v1800 = vmul.f32 %v1785, 0.70710677
      %v1801 = vmul.f32 %v1788, 0.70710677
      %v1802 = vmul.f32 %v1791, 0.70710677
      %vm1803 = vcmp.ge.f32.partialorder %v1798, 0.0
      %vm1804 = vcmp.ge.f32.partialorder %v1799, 0.0
      %vm1805 = vcmp.ge.f32.partialorder %v1800, 0.0
      %vm1806 = vcmp.ge.f32.partialorder %v1801, 0.0
      %vm1807 = vcmp.ge.f32.partialorder %v1802, 0.0
      %v1808 = vsel %vm1803, 1.0, -1.0
      %v1809 = vsel %vm1804, 1.0, -1.0
      %v1810 = vsel %vm1805, 1.0, -1.0
      %v1811 = vsel %vm1806, 1.0, -1.0
      %v1812 = vsel %vm1807, 1.0, -1.0
      %v1813 = vand.u32 2147483647, %v1798
      %v1814 = vand.u32 2147483647, %v1799
      %v1815 = vand.u32 2147483647, %v1800
      %v1816 = vand.u32 2147483647, %v1801
      %v1817 = vand.u32 2147483647, %v1802
      %v1818 = vmul.f32 %v1813, 0.3275911
      %v1819 = vmul.f32 %v1814, 0.3275911
      %v1820 = vmul.f32 %v1815, 0.3275911
      %v1821 = vmul.f32 %v1816, 0.3275911
      %v1822 = vmul.f32 %v1817, 0.3275911
      %v1823 = vadd.f32 %v1818, 1.0
      %v1824 = vadd.f32 %v1819, 1.0
      %v1825 = vadd.f32 %v1820, 1.0
      %v1826 = vadd.f32 %v1821, 1.0
      %v1827 = vadd.f32 %v1822, 1.0
      %v1828 = vrcp.pop %v1823
      %v1829 = vmul.f32 %v1823, %v1828
      %v1830 = vsub.f32 1.0, %v1829
      %v1831 = vmul.f32 %v1828, %v1830
      %v1832 = vadd.f32 %v1828, %v1831
      %vm1833 = vweird.f32 %v1823
      %vm1834 = vweird.f32 %v1828
      %vm1835 = vmor %vm1833, %vm1834
      %v1836 = vsel %vm1835, %v1828, %v1832
      %v1837 = vand.u32 2147483647, %v1823
      %vm1838 = vcmp.eq.f32.partialorder %v1837, 8.507059e+37
      %v1839 = vand.u32 %v1823, 2147483648
      %v1840 = vor.u32 1.1754944e-38, %v1839
      %v1841 = vsel %vm1838, %v1840, %v1836
      %v1842 = vmul.f32 1.0, %v1841
      %v1843 = vrcp.pop %v1824
      %v1844 = vmul.f32 %v1824, %v1843
      %v1845 = vsub.f32 1.0, %v1844
      %v1846 = vmul.f32 %v1843, %v1845
      %v1847 = vadd.f32 %v1843, %v1846
      %vm1848 = vweird.f32 %v1824
      %vm1849 = vweird.f32 %v1843
      %vm1850 = vmor %vm1848, %vm1849
      %v1851 = vsel %vm1850, %v1843, %v1847
      %v1852 = vand.u32 2147483647, %v1824
      %vm1853 = vcmp.eq.f32.partialorder %v1852, 8.507059e+37
      %v1854 = vand.u32 %v1824, 2147483648
      %v1855 = vor.u32 1.1754944e-38, %v1854
      %v1856 = vsel %vm1853, %v1855, %v1851
      %v1857 = vmul.f32 1.0, %v1856
      %v1858 = vrcp.pop %v1825
      %v1859 = vmul.f32 %v1825, %v1858
      %v1860 = vsub.f32 1.0, %v1859
      %v1861 = vmul.f32 %v1858, %v1860
      %v1862 = vadd.f32 %v1858, %v1861
      %vm1863 = vweird.f32 %v1825
      %vm1864 = vweird.f32 %v1858
      %vm1865 = vmor %vm1863, %vm1864
      %v1866 = vsel %vm1865, %v1858, %v1862
      %v1867 = vand.u32 2147483647, %v1825
      %vm1868 = vcmp.eq.f32.partialorder %v1867, 8.507059e+37
      %v1869 = vand.u32 %v1825, 2147483648
      %v1870 = vor.u32 1.1754944e-38, %v1869
      %v1871 = vsel %vm1868, %v1870, %v1866
      %v1872 = vmul.f32 1.0, %v1871
      %v1873 = vrcp.pop %v1826
      %v1874 = vmul.f32 %v1826, %v1873
      %v1875 = vsub.f32 1.0, %v1874
      %v1876 = vmul.f32 %v1873, %v1875
      %v1877 = vadd.f32 %v1873, %v1876
      %vm1878 = vweird.f32 %v1826
      %vm1879 = vweird.f32 %v1873
      %vm1880 = vmor %vm1878, %vm1879
      %v1881 = vsel %vm1880, %v1873, %v1877
      %v1882 = vand.u32 2147483647, %v1826
      %vm1883 = vcmp.eq.f32.partialorder %v1882, 8.507059e+37
      %v1884 = vand.u32 %v1826, 2147483648
      %v1885 = vor.u32 1.1754944e-38, %v1884
      %v1886 = vsel %vm1883, %v1885, %v1881
      %v1887 = vmul.f32 1.0, %v1886
      %v1888 = vrcp.pop %v1827
      %v1889 = vmul.f32 %v1827, %v1888
      %v1890 = vsub.f32 1.0, %v1889
      %v1891 = vmul.f32 %v1888, %v1890
      %v1892 = vadd.f32 %v1888, %v1891
      %vm1893 = vweird.f32 %v1827
      %vm1894 = vweird.f32 %v1888
      %vm1895 = vmor %vm1893, %vm1894
      %v1896 = vsel %vm1895, %v1888, %v1892
      %v1897 = vand.u32 2147483647, %v1827
      %vm1898 = vcmp.eq.f32.partialorder %v1897, 8.507059e+37
      %v1899 = vand.u32 %v1827, 2147483648
      %v1900 = vor.u32 1.1754944e-38, %v1899
      %v1901 = vsel %vm1898, %v1900, %v1896
      %v1902 = vmul.f32 1.0, %v1901
      %v1903 = vmul.f32 %v1842, 1.0614054
      %v1904 = vmul.f32 %v1857, 1.0614054
      %v1905 = vmul.f32 %v1872, 1.0614054
      %v1906 = vmul.f32 %v1887, 1.0614054
      %v1907 = vmul.f32 %v1902, 1.0614054
      %v1908 = vadd.f32 %v1903, -1.4531521
      %v1909 = vadd.f32 %v1904, -1.4531521
      %v1910 = vadd.f32 %v1905, -1.4531521
      %v1911 = vadd.f32 %v1906, -1.4531521
      %v1912 = vadd.f32 %v1907, -1.4531521
      %v1913 = vmul.f32 %v1908, %v1842
      %v1914 = vmul.f32 %v1909, %v1857
      %v1915 = vmul.f32 %v1910, %v1872
      %v1916 = vmul.f32 %v1911, %v1887
      %v1917 = vmul.f32 %v1912, %v1902
      %v1918 = vadd.f32 %v1913, 1.4214138
      %v1919 = vadd.f32 %v1914, 1.4214138
      %v1920 = vadd.f32 %v1915, 1.4214138
      %v1921 = vadd.f32 %v1916, 1.4214138
      %v1922 = vadd.f32 %v1917, 1.4214138
      %v1923 = vmul.f32 %v1918, %v1842
      %v1924 = vmul.f32 %v1919, %v1857
      %v1925 = vmul.f32 %v1920, %v1872
      %v1926 = vmul.f32 %v1921, %v1887
      %v1927 = vmul.f32 %v1922, %v1902
      %v1928 = vadd.f32 %v1923, -0.28449672
      %v1929 = vadd.f32 %v1924, -0.28449672
      %v1930 = vadd.f32 %v1925, -0.28449672
      %v1931 = vadd.f32 %v1926, -0.28449672
      %v1932 = vadd.f32 %v1927, -0.28449672
      %v1933 = vmul.f32 %v1928, %v1842
      %v1934 = vmul.f32 %v1929, %v1857
      %v1935 = vmul.f32 %v1930, %v1872
      %v1936 = vmul.f32 %v1931, %v1887
      %v1937 = vmul.f32 %v1932, %v1902
      %v1938 = vadd.f32 %v1933, 0.2548296
      %v1939 = vadd.f32 %v1934, 0.2548296
      %v1940 = vadd.f32 %v1935, 0.2548296
      %v1941 = vadd.f32 %v1936, 0.2548296
      %v1942 = vadd.f32 %v1937, 0.2548296
      %v1943 = vmul.f32 %v1938, %v1842
      %v1944 = vmul.f32 %v1939, %v1857
      %v1945 = vmul.f32 %v1940, %v1872
      %v1946 = vmul.f32 %v1941, %v1887
      %v1947 = vmul.f32 %v1942, %v1902
      %v1948 = vsub.f32 0.0, %v1813
      %v1949 = vsub.f32 0.0, %v1814
      %v1950 = vsub.f32 0.0, %v1815
      %v1951 = vsub.f32 0.0, %v1816
      %v1952 = vsub.f32 0.0, %v1817
      %v1953 = vmul.f32 %v1948, %v1813
      %v1954 = vmul.f32 %v1949, %v1814
      %v1955 = vmul.f32 %v1950, %v1815
      %v1956 = vmul.f32 %v1951, %v1816
      %v1957 = vmul.f32 %v1952, %v1817
      %v1958 = vmul.f32 %v1953, 1.442695
      %v1959 = vpow.pop %v1958
      %v1960 = vmul.f32 %v1954, 1.442695
      %v1961 = vpow.pop %v1960
      %v1962 = vmul.f32 %v1955, 1.442695
      %v1963 = vpow.pop %v1962
      %v1964 = vmul.f32 %v1956, 1.442695
      %v1965 = vpow.pop %v1964
      %v1966 = vmul.f32 %v1957, 1.442695
      %v1967 = vpow.pop %v1966
      %v1968 = vmul.f32 %v1943, %v1959
      %v1969 = vmul.f32 %v1944, %v1961
      %v1970 = vmul.f32 %v1945, %v1963
      %v1971 = vmul.f32 %v1946, %v1965
      %v1972 = vmul.f32 %v1947, %v1967
      %v1973 = vsub.f32 1.0, %v1968
      %v1974 = vsub.f32 1.0, %v1969
      %v1975 = vsub.f32 1.0, %v1970
      %v1976 = vsub.f32 1.0, %v1971
      %v1977 = vsub.f32 1.0, %v1972
      %v1978 = vmul.f32 %v1808, %v1973
      %v1979 = vmul.f32 %v1809, %v1974
      %v1980 = vmul.f32 %v1810, %v1975
      %v1981 = vmul.f32 %v1811, %v1976
      %v1982 = vmul.f32 %v1812, %v1977
      %v1983 = vadd.f32 %v1978, 1.0
      %v1984 = vadd.f32 %v1979, 1.0
      %v1985 = vadd.f32 %v1980, 1.0
      %v1986 = vadd.f32 %v1981, 1.0
      %v1987 = vadd.f32 %v1982, 1.0
      %v1988 = vmul.f32 %v1793, %v1983
      %v1989 = vmul.f32 %v1794, %v1984
      %v1990 = vmul.f32 %v1795, %v1985
      %v1991 = vmul.f32 %v1796, %v1986
      %v1992 = vmul.f32 %v1797, %v1987
      %v1993 = vld [vmem:[%s13] sm:$0xff]
      %v1994 = vld [vmem:[%s13 + $0x8] sm:$0xff]
      %v1995 = vld [vmem:[%s13 + $0x10] sm:$0xff]
      %v1996 = vld [vmem:[%s13 + $0x18] sm:$0xff]
      %v1997 = vld [vmem:[%s13 + $0x20] sm:$0xff]
      %v1998 = vld [vmem:[%s13 + $0x28] sm:$0xff]
      %v1999 = vld [vmem:[%s13 + $0x30] sm:$0xff]
      %v2000 = vld [vmem:[%s13 + $0x38] sm:$0xff]
      %v2001 = vld [vmem:[%s13 + $0x40] sm:$0xff]
      %v2002 = vld [vmem:[%s13 + $0x48] sm:$0xff]
      %v2003 = vld [vmem:[%s13 + $0x50] sm:$0xff]
      %v2004 = vld [vmem:[%s13 + $0x58] sm:$0xff]
      %v2005 = vld [vmem:[%s13 + $0x60] sm:$0xff]
      %v2006 = vld [vmem:[%s13 + $0x68] sm:$0xff]
      %v2007 = vld [vmem:[%s13 + $0x70] sm:$0xff]
      %v2008 = vld [vmem:[%s13 + $0x78] sm:$0xff]
      %v2009 = vld [vmem:[%s14] sm:$0x1]
      %v2011 = vperm.slane %v2009, 0
      %2013 = vmatpush.msra.mxu0 %v2008
      %2014 = vmatpush.msra.mxu0 %v2007
      %2015 = vmatpush.msra.mxu0 %v2006
      %2016 = vmatpush.msra.mxu0 %v2005
      %2017 = vmatpush.msra.mxu0 %v2004
      %2018 = vmatpush.msra.mxu0 %v2003
      %2019 = vmatpush.msra.mxu0 %v2002
      %2020 = vmatpush.msra.mxu0 %v2001
      %2021 = vmatpush.msra.mxu0 %v2000
      %2022 = vmatpush.msra.mxu0 %v1999
      %2023 = vmatpush.msra.mxu0 %v1998
      %2024 = vmatpush.msra.mxu0 %v1997
      %2025 = vmatpush.msra.mxu0 %v1996
      %2026 = vmatpush.msra.mxu0 %v1995
      %2027 = vmatpush.msra.mxu0 %v1994
      %2028 = vmatpush.msra.mxu0 %v1993
      %2029 = vmatmul.f32.gmra.mxu0 %v1988
      %v2030 = vpop.f32.mrf.mxu0
      %v2031 = vadd.f32 %v2011, %v2030
      %2032 = vmatmul.f32.gmra.mxu0 %v1989
      %v2033 = vpop.f32.mrf.mxu0
      %v2034 = vadd.f32 %v2011, %v2033
      %2035 = vmatmul.f32.gmra.mxu0 %v1990
      %v2036 = vpop.f32.mrf.mxu0
      %v2037 = vadd.f32 %v2011, %v2036
      %2038 = vmatmul.f32.gmra.mxu0 %v1991
      %v2039 = vpop.f32.mrf.mxu0
      %v2040 = vadd.f32 %v2011, %v2039
      %2041 = vmatmul.f32.gmra.mxu0 %v1992
      %v2042 = vpop.f32.mrf.mxu0
      %v2043 = vadd.f32 %v2011, %v2042
      %2044 = vdwg.mxu0
      %v2045 = vadd.f32 %v1729, %v2031
      %v2046 = vadd.f32 %v1730, %v2034
      %v2047 = vadd.f32 %v1731, %v2037
      %v2048 = vadd.f32 %v1732, %v2040
      %v2049 = vadd.f32 %v1733, %v2043
      %v2050 = vld [vmem:[%s15] sm:$0x1]
      %v2051 = vld [vmem:[%s16] sm:$0x1]
      %v2052 = vsel %vm598, %v2045, 0.0
      %2053 = vadd.xlane.f32.xlu0 %v2052
      %v2054 = vpop.xlane.xlu0 %2053
      %v2055 = vsel %vm598, %v2046, 0.0
      %2056 = vadd.xlane.f32.xlu0 %v2055
      %v2057 = vpop.xlane.xlu0 %2056
      %v2058 = vsel %vm598, %v2047, 0.0
      %2059 = vadd.xlane.f32.xlu0 %v2058
      %v2060 = vpop.xlane.xlu0 %2059
      %v2061 = vsel %vm598, %v2048, 0.0
      %2062 = vadd.xlane.f32.xlu0 %v2061
      %v2063 = vpop.xlane.xlu0 %2062
      %v2064 = vsel %vm598, %v2049, 0.0
      %2065 = vadd.xlane.f32.xlu0 %v2064
      %v2066 = vpop.xlane.xlu0 %2065
      %v2067 = vmul.f32 %v2054, %v1622
      %v2068 = vmul.f32 %v2057, %v1622
      %v2069 = vmul.f32 %v2060, %v1622
      %v2070 = vmul.f32 %v2063, %v1622
      %v2071 = vmul.f32 %v2066, %v1622
      %v2072 = vsub.f32 %v2045, %v2067
      %v2073 = vsub.f32 %v2046, %v2068
      %v2074 = vsub.f32 %v2047, %v2069
      %v2075 = vsub.f32 %v2048, %v2070
      %v2076 = vsub.f32 %v2049, %v2071
      %v2077 = vmul.f32 %v2072, %v2072
      %v2078 = vmul.f32 %v2073, %v2073
      %v2079 = vmul.f32 %v2074, %v2074
      %v2080 = vmul.f32 %v2075, %v2075
      %v2081 = vmul.f32 %v2076, %v2076
      %v2082 = vsel %vm598, %v2077, 0.0
      %2083 = vadd.xlane.f32.xlu0 %v2082
      %v2084 = vpop.xlane.xlu0 %2083
      %v2085 = vsel %vm598, %v2078, 0.0
      %2086 = vadd.xlane.f32.xlu0 %v2085
      %v2087 = vpop.xlane.xlu0 %2086
      %v2088 = vsel %vm598, %v2079, 0.0
      %2089 = vadd.xlane.f32.xlu0 %v2088
      %v2090 = vpop.xlane.xlu0 %2089
      %v2091 = vsel %vm598, %v2080, 0.0
      %2092 = vadd.xlane.f32.xlu0 %v2091
      %v2093 = vpop.xlane.xlu0 %2092
      %v2094 = vsel %vm598, %v2081, 0.0
      %2095 = vadd.xlane.f32.xlu0 %v2094
      %v2096 = vpop.xlane.xlu0 %2095
      %v2097 = vmul.f32 %v2084, %v1622
      %v2098 = vmul.f32 %v2087, %v1622
      %v2099 = vmul.f32 %v2090, %v1622
      %v2100 = vmul.f32 %v2093, %v1622
      %v2101 = vmul.f32 %v2096, %v1622
      %v2102 = vadd.f32 %v2097, 1e-05
      %v2103 = vadd.f32 %v2098, 1e-05
      %v2104 = vadd.f32 %v2099, 1e-05
      %v2105 = vadd.f32 %v2100, 1e-05
      %v2106 = vadd.f32 %v2101, 1e-05
      %v2107 = vrsqrt.pop %v2102
      %v2108 = vmul.f32 %v2107, %v2102
      %v2109 = vmul.f32 %v2108, %v2107
      %v2110 = vmul.f32 0.5, %v2109
      %v2111 = vsub.f32 1.5, %v2110
      %v2112 = vmul.f32 %v2107, %v2111
      %vm2113 = vweird.f32 %v2102
      %vm2114 = vweird.f32 %v2107
      %vm2115 = vmor %vm2113, %vm2114
      %v2116 = vsel %vm2115, %v2107, %v2112
      %v2117 = vrsqrt.pop %v2103
      %v2118 = vmul.f32 %v2117, %v2103
      %v2119 = vmul.f32 %v2118, %v2117
      %v2120 = vmul.f32 0.5, %v2119
      %v2121 = vsub.f32 1.5, %v2120
      %v2122 = vmul.f32 %v2117, %v2121
      %vm2123 = vweird.f32 %v2103
      %vm2124 = vweird.f32 %v2117
      %vm2125 = vmor %vm2123, %vm2124
      %v2126 = vsel %vm2125, %v2117, %v2122
      %v2127 = vrsqrt.pop %v2104
      %v2128 = vmul.f32 %v2127, %v2104
      %v2129 = vmul.f32 %v2128, %v2127
      %v2130 = vmul.f32 0.5, %v2129
      %v2131 = vsub.f32 1.5, %v2130
      %v2132 = vmul.f32 %v2127, %v2131
      %vm2133 = vweird.f32 %v2104
      %vm2134 = vweird.f32 %v2127
      %vm2135 = vmor %vm2133, %vm2134
      %v2136 = vsel %vm2135, %v2127, %v2132
      %v2137 = vrsqrt.pop %v2105
      %v2138 = vmul.f32 %v2137, %v2105
      %v2139 = vmul.f32 %v2138, %v2137
      %v2140 = vmul.f32 0.5, %v2139
      %v2141 = vsub.f32 1.5, %v2140
      %v2142 = vmul.f32 %v2137, %v2141
      %vm2143 = vweird.f32 %v2105
      %vm2144 = vweird.f32 %v2137
      %vm2145 = vmor %vm2143, %vm2144
      %v2146 = vsel %vm2145, %v2137, %v2142
      %v2147 = vrsqrt.pop %v2106
      %v2148 = vmul.f32 %v2147, %v2106
      %v2149 = vmul.f32 %v2148, %v2147
      %v2150 = vmul.f32 0.5, %v2149
      %v2151 = vsub.f32 1.5, %v2150
      %v2152 = vmul.f32 %v2147, %v2151
      %vm2153 = vweird.f32 %v2106
      %vm2154 = vweird.f32 %v2147
      %vm2155 = vmor %vm2153, %vm2154
      %v2156 = vsel %vm2155, %v2147, %v2152
      %v2157 = vmul.f32 %v2072, %v2116
      %v2158 = vmul.f32 %v2073, %v2126
      %v2159 = vmul.f32 %v2074, %v2136
      %v2160 = vmul.f32 %v2075, %v2146
      %v2161 = vmul.f32 %v2076, %v2156
      %v2163 = vperm.slane %v2050, 0
      %v2165 = vmul.f32 %v2157, %v2163
      %v2166 = vmul.f32 %v2158, %v2163
      %v2167 = vmul.f32 %v2159, %v2163
      %v2168 = vmul.f32 %v2160, %v2163
      %v2169 = vmul.f32 %v2161, %v2163
      %v2171 = vperm.slane %v2051, 0
      %v2173 = vadd.f32 %v2165, %v2171
      %v2174 = vadd.f32 %v2166, %v2171
      %v2175 = vadd.f32 %v2167, %v2171
      %v2176 = vadd.f32 %v2168, %v2171
      %v2177 = vadd.f32 %v2169, %v2171
      %2178 = vst.msk [vmem:[%s568] sm:$0xff] %vm598, %v2173
      %2179 = vst.msk [vmem:[%s568 + $0x8] sm:$0xff] %vm598, %v2174
      %2180 = vst.msk [vmem:[%s568 + $0x10] sm:$0xff] %vm598, %v2175
      %2181 = vst.msk [vmem:[%s568 + $0x18] sm:$0xff] %vm598, %v2176
      %2182 = vst.msk [vmem:[%s568 + $0x20] sm:$0xff] %vm598, %v2177
      %p2183 = scmp.lt.s32.totalorder %s28, 1
      %s2184 = scalar_select %p2183, %s28, 1
      %s2185 = smul.addr %s2184, 5
      %s2186 = smul.addr %s2185, 8
      %s2187 = scalar_lea.vmem %s17, %s2186
      // Predicated region
      $region89: #{trancnn_forward.5} parent=87 // pred_check
        %p2188 = pneg %p413
      $region90: #{trancnn_forward.5} parent=87 // pred_check_branch
        %2190 = sbr.rel (%p2188) target = $region92
      $region91: #{trancnn_forward.5} parent=87 // pred_region
        _
      $region92: #{trancnn_forward.5} parent=87 // pred_fallthru
        _
    $region88: #{trancnn_forward.5} parent=5 // pred_fallthru
      _
    %p2191 = scmp.le.s32.totalorder 2, %s23
    // Predicated region
    $region93: #{trancnn_forward.5} parent=5 // pred_check
      %p2192 = pneg %p2191
    $region94: #{trancnn_forward.5} parent=5 // pred_check_branch
      %2194 = sbr.rel (%p2192) target = $region96
    $region95: #{trancnn_forward.5} parent=5 // pred_region
      %s2195 = ssub.s32 %s23, 2
      // Predicated region
      $region97: #{trancnn_forward.5} parent=95 // pred_check
        %p2196 = pneg %p419
      $region98: #{trancnn_forward.5} parent=95 // pred_check_branch
        %2198 = sbr.rel (%p2196) target = $region100
      $region99: #{trancnn_forward.5} parent=95 // pred_region
        %p2199 = scmp.lt.s32.totalorder %s29, 1
        %s2200 = scalar_select %p2199, %s29, 1
        %s2201 = smul.addr %s2200, 5
        %s2202 = smul.addr %s2201, 8
        %s2203 = scalar_lea.vmem %s17, %s2202
      $region100: #{trancnn_forward.5} parent=95 // pred_fallthru
        _
    $region96: #{trancnn_forward.5} parent=5 // pred_fallthru
      _
  $region6: #{trancnn_forward.5} parent=0 // loop_footer
    %s27 = sadd.s32 1, %s23
  $region7: #{trancnn_forward.5} parent=0 // loop_footer_branch
    %22 = sbr.rel target = $region3
  $region8: #{trancnn_forward.5} parent=0 // loop_exit
    _

// kernel: trancnn_forward.4
$region0: #{trancnn_forward.4}
  #allocation0 [shape = 'u32[]', space=smem, size = 0x4, offset = 0x4, fixed_abs, tag = 'smem constant byte address 0x4 - core index']
  #allocation1 [shape = 'u32[72,128]{1,0:T(1,128)}', space=vmem, size = 0x9000, scoped, tag = 'internal scratch']
  %s0 = inlined_call_operand.vmem [shape: f32[2,84,36], index: 0, kind: input, shape index: {}]
  %s1 = inlined_call_operand.vmem [shape: f32[4,36,96], index: 1, kind: input, shape index: {}]
  %s2 = inlined_call_operand.vmem [shape: f32[1,96], index: 2, kind: input, shape index: {}]
  %s3 = inlined_call_operand.vmem [shape: f32[2,40,80], index: 3, kind: input, shape index: {}]
  %s4 = inlined_call_operand.vmem [shape: f32[3,3,40,40], index: 4, kind: input, shape index: {}]
  %s5 = inlined_call_operand.vmem [shape: f32[32,64], index: 5, kind: input, shape index: {}]
  %s6 = inlined_call_operand.vmem [shape: f32[1,64], index: 6, kind: input, shape index: {}]
  %s7 = inlined_call_operand.vmem [shape: f32[40,64], index: 7, kind: input, shape index: {}]
  %s8 = inlined_call_operand.vmem [shape: f32[2,40,64], index: 8, kind: output, shape index: {}]
  %s9 = sld [smem:[#allocation0]]
  $region65: #{trancnn_forward.4} parent=0
    _
  %s11 = ssub.s32 1, %s9
  %s12 = scalar_select 0, %s11, %s9
  loop: start=0, step=1, limit=4
  $region2: #{trancnn_forward.4} parent=0 // loop_pre_header
    _
  $region3: #{trancnn_forward.4} parent=0 // loop_header
    %s14 = sphi 0, %s18
    %p15 = scmp.ge.s32.totalorder %s14, 4
    %s24 = sphi 0, %s26
    %s27 = sphi 0, %s24
    %s28 = sphi 0, %s27
    %s44 = sphi 0, %s28
    %s48 = sphi 0, %s48
    %s50 = sphi 0, %s48
    %s51 = sphi 0, %s50
    %s65 = sphi 0, %s51
    %s69 = sphi 0, %s69
    %s71 = sphi 0, %s69
    %s72 = sphi 0, %s71
    %s86 = sphi 0, %s72
    %s90 = sphi 0, %s90
    %s92 = sphi 0, %s90
    %s93 = sphi 0, %s92
    %s107 = sphi 0, %s93
    %s111 = sphi 0, %s111
    %s113 = sphi 0, %s111
    %s114 = sphi 0, %s113
    %s128 = sphi 0, %s114
    %s132 = sphi 0, %s132
    %s134 = sphi 0, %s132
    %s135 = sphi 0, %s134
    %s149 = sphi 0, %s135
    %s153 = sphi 0, %s153
    %s155 = sphi 0, %s153
    %s156 = sphi 0, %s155
    %s170 = sphi 0, %s156
    %s174 = sphi 0, %s174
    %s176 = sphi 0, %s174
    %s177 = sphi 0, %s176
    %s191 = sphi 0, %s177
    %s197 = sphi 0, %s199
    %s200 = sphi 0, %s197
    %s201 = sphi 0, %s200
    %s217 = sphi 0, %s201
  $region4: #{trancnn_forward.4} parent=0 // loop_header_branch
    %17 = sbr.rel (%p15) target = $region8
  $region5: #{trancnn_forward.4} parent=0 // loop_body
    %s19 = ssub.s32 %s14, 1
    %s20 = ssub.s32 %s14, 2
    %s21 = sadd.s32 %s14, 1
    %s22 = ssub.s32 %s14, %s21
    %p23 = scmp.eq.s32.totalorder %s22, 0
    %s25 = sadd.s32 %s24, 1
    %s26 = scalar_select %p23, %s24, %s25
    %p29 = pneg %p23
    %p30 = scmp.eq.s32.totalorder %s14, 1
    %p31 = por %p29, %p30
    %p32 = scmp.ne.s32.totalorder %s24, %s27
    %p33 = scmp.eq.s32.totalorder %s14, 0
    %p34 = por %p32, %p33
    %p35 = scmp.ne.s32.totalorder %s24, %s27
    %p36 = scmp.eq.s32.totalorder %s19, 1
    %p37 = por %p35, %p36
    %p38 = scmp.ne.s32.totalorder %s27, %s28
    %p39 = scmp.eq.s32.totalorder %s19, 0
    %p40 = por %p38, %p39
    %p41 = scmp.ne.s32.totalorder %s27, %s28
    %p42 = scmp.eq.s32.totalorder %s20, 1
    %p43 = por %p41, %p42
    %p45 = scmp.ne.s32.totalorder %s28, %s44
    %p46 = scmp.eq.s32.totalorder %s20, 0
    %p47 = por %p45, %p46
    %s49 = sadd.s32 %s48, 1
    %p52 = scmp.eq.s32.totalorder %s14, 1
    %p53 = scmp.ne.s32.totalorder %s48, %s50
    %p54 = scmp.eq.s32.totalorder %s14, 0
    %p55 = por %p53, %p54
    %p56 = scmp.ne.s32.totalorder %s48, %s50
    %p57 = scmp.eq.s32.totalorder %s19, 1
    %p58 = por %p56, %p57
    %p59 = scmp.ne.s32.totalorder %s50, %s51
    %p60 = scmp.eq.s32.totalorder %s19, 0
    %p61 = por %p59, %p60
    %p62 = scmp.ne.s32.totalorder %s50, %s51
    %p63 = scmp.eq.s32.totalorder %s20, 1
    %p64 = por %p62, %p63
    %p66 = scmp.ne.s32.totalorder %s51, %s65
    %p67 = scmp.eq.s32.totalorder %s20, 0
    %p68 = por %p66, %p67
    %s70 = sadd.s32 %s69, 1
    %p73 = scmp.eq.s32.totalorder %s14, 1
    %p74 = scmp.ne.s32.totalorder %s69, %s71
    %p75 = scmp.eq.s32.totalorder %s14, 0
    %p76 = por %p74, %p75
    %p77 = scmp.ne.s32.totalorder %s69, %s71
    %p78 = scmp.eq.s32.totalorder %s19, 1
    %p79 = por %p77, %p78
    %p80 = scmp.ne.s32.totalorder %s71, %s72
    %p81 = scmp.eq.s32.totalorder %s19, 0
    %p82 = por %p80, %p81
    %p83 = scmp.ne.s32.totalorder %s71, %s72
    %p84 = scmp.eq.s32.totalorder %s20, 1
    %p85 = por %p83, %p84
    %p87 = scmp.ne.s32.totalorder %s72, %s86
    %p88 = scmp.eq.s32.totalorder %s20, 0
    %p89 = por %p87, %p88
    %s91 = sadd.s32 %s90, 1
    %p94 = scmp.eq.s32.totalorder %s14, 1
    %p95 = scmp.ne.s32.totalorder %s90, %s92
    %p96 = scmp.eq.s32.totalorder %s14, 0
    %p97 = por %p95, %p96
    %p98 = scmp.ne.s32.totalorder %s90, %s92
    %p99 = scmp.eq.s32.totalorder %s19, 1
    %p100 = por %p98, %p99
    %p101 = scmp.ne.s32.totalorder %s92, %s93
    %p102 = scmp.eq.s32.totalorder %s19, 0
    %p103 = por %p101, %p102
    %p104 = scmp.ne.s32.totalorder %s92, %s93
    %p105 = scmp.eq.s32.totalorder %s20, 1
    %p106 = por %p104, %p105
    %p108 = scmp.ne.s32.totalorder %s93, %s107
    %p109 = scmp.eq.s32.totalorder %s20, 0
    %p110 = por %p108, %p109
    %s112 = sadd.s32 %s111, 1
    %p115 = scmp.eq.s32.totalorder %s14, 1
    %p116 = scmp.ne.s32.totalorder %s111, %s113
    %p117 = scmp.eq.s32.totalorder %s14, 0
    %p118 = por %p116, %p117
    %p119 = scmp.ne.s32.totalorder %s111, %s113
    %p120 = scmp.eq.s32.totalorder %s19, 1
    %p121 = por %p119, %p120
    %p122 = scmp.ne.s32.totalorder %s113, %s114
    %p123 = scmp.eq.s32.totalorder %s19, 0
    %p124 = por %p122, %p123
    %p125 = scmp.ne.s32.totalorder %s113, %s114
    %p126 = scmp.eq.s32.totalorder %s20, 1
    %p127 = por %p125, %p126
    %p129 = scmp.ne.s32.totalorder %s114, %s128
    %p130 = scmp.eq.s32.totalorder %s20, 0
    %p131 = por %p129, %p130
    %s133 = sadd.s32 %s132, 1
    %p136 = scmp.eq.s32.totalorder %s14, 1
    %p137 = scmp.ne.s32.totalorder %s132, %s134
    %p138 = scmp.eq.s32.totalorder %s14, 0
    %p139 = por %p137, %p138
    %p140 = scmp.ne.s32.totalorder %s132, %s134
    %p141 = scmp.eq.s32.totalorder %s19, 1
    %p142 = por %p140, %p141
    %p143 = scmp.ne.s32.totalorder %s134, %s135
    %p144 = scmp.eq.s32.totalorder %s19, 0
    %p145 = por %p143, %p144
    %p146 = scmp.ne.s32.totalorder %s134, %s135
    %p147 = scmp.eq.s32.totalorder %s20, 1
    %p148 = por %p146, %p147
    %p150 = scmp.ne.s32.totalorder %s135, %s149
    %p151 = scmp.eq.s32.totalorder %s20, 0
    %p152 = por %p150, %p151
    %s154 = sadd.s32 %s153, 1
    %p157 = scmp.eq.s32.totalorder %s14, 1
    %p158 = scmp.ne.s32.totalorder %s153, %s155
    %p159 = scmp.eq.s32.totalorder %s14, 0
    %p160 = por %p158, %p159
    %p161 = scmp.ne.s32.totalorder %s153, %s155
    %p162 = scmp.eq.s32.totalorder %s19, 1
    %p163 = por %p161, %p162
    %p164 = scmp.ne.s32.totalorder %s155, %s156
    %p165 = scmp.eq.s32.totalorder %s19, 0
    %p166 = por %p164, %p165
    %p167 = scmp.ne.s32.totalorder %s155, %s156
    %p168 = scmp.eq.s32.totalorder %s20, 1
    %p169 = por %p167, %p168
    %p171 = scmp.ne.s32.totalorder %s156, %s170
    %p172 = scmp.eq.s32.totalorder %s20, 0
    %p173 = por %p171, %p172
    %s175 = sadd.s32 %s174, 1
    %p178 = scmp.eq.s32.totalorder %s14, 1
    %p179 = scmp.ne.s32.totalorder %s174, %s176
    %p180 = scmp.eq.s32.totalorder %s14, 0
    %p181 = por %p179, %p180
    %p182 = scmp.ne.s32.totalorder %s174, %s176
    %p183 = scmp.eq.s32.totalorder %s19, 1
    %p184 = por %p182, %p183
    %p185 = scmp.ne.s32.totalorder %s176, %s177
    %p186 = scmp.eq.s32.totalorder %s19, 0
    %p187 = por %p185, %p186
    %p188 = scmp.ne.s32.totalorder %s176, %s177
    %p189 = scmp.eq.s32.totalorder %s20, 1
    %p190 = por %p188, %p189
    %p192 = scmp.ne.s32.totalorder %s177, %s191
    %p193 = scmp.eq.s32.totalorder %s20, 0
    %p194 = por %p192, %p193
    %s195 = ssub.s32 %s14, %s21
    %p196 = scmp.eq.s32.totalorder %s195, 0
    %s198 = sadd.s32 %s197, 1
    %s199 = scalar_select %p196, %s197, %s198
    %p202 = pneg %p196
    %p203 = scmp.eq.s32.totalorder %s14, 1
    %p204 = por %p202, %p203
    %p205 = scmp.ne.s32.totalorder %s197, %s200
    %p206 = scmp.eq.s32.totalorder %s14, 0
    %p207 = por %p205, %p206
    %p208 = scmp.ne.s32.totalorder %s197, %s200
    %p209 = scmp.eq.s32.totalorder %s19, 1
    %p210 = por %p208, %p209
    %p211 = scmp.ne.s32.totalorder %s200, %s201
    %p212 = scmp.eq.s32.totalorder %s19, 0
    %p213 = por %p211, %p212
    %p214 = scmp.ne.s32.totalorder %s200, %s201
    %p215 = scmp.eq.s32.totalorder %s20, 1
    %p216 = por %p214, %p215
    %p218 = scmp.ne.s32.totalorder %s201, %s217
    %p219 = scmp.eq.s32.totalorder %s20, 0
    %p220 = por %p218, %p219
    %p221 = scmp.le.s32.totalorder 1, %s14
    %p222 = scmp.lt.s32.totalorder %s14, 3
    %p223 = pnand %p221, %p222
    %p224 = pneg %p223
    // Predicated region
    $region9: #{trancnn_forward.4} parent=5 // pred_check
      _
    $region10: #{trancnn_forward.4} parent=5 // pred_check_branch
      %226 = sbr.rel (%p223) target = $region12
    $region11: #{trancnn_forward.4} parent=5 // pred_region
      %s227 = ssub.s32 %s14, 1
      // Predicated region
      $region13: #{trancnn_forward.4} parent=11 // pred_check
        %p228 = pneg %p61
      $region14: #{trancnn_forward.4} parent=11 // pred_check_branch
        %230 = sbr.rel (%p228) target = $region16
      $region15: #{trancnn_forward.4} parent=11 // pred_region
        _
      $region16: #{trancnn_forward.4} parent=11 // pred_fallthru
        _
      // Predicated region
      $region17: #{trancnn_forward.4} parent=11 // pred_check
        %p231 = pneg %p82
      $region18: #{trancnn_forward.4} parent=11 // pred_check_branch
        %233 = sbr.rel (%p231) target = $region20
      $region19: #{trancnn_forward.4} parent=11 // pred_region
        _
      $region20: #{trancnn_forward.4} parent=11 // pred_fallthru
        _
      // Predicated region
      $region21: #{trancnn_forward.4} parent=11 // pred_check
        %p234 = pneg %p103
      $region22: #{trancnn_forward.4} parent=11 // pred_check_branch
        %236 = sbr.rel (%p234) target = $region24
      $region23: #{trancnn_forward.4} parent=11 // pred_region
        _
      $region24: #{trancnn_forward.4} parent=11 // pred_fallthru
        _
      // Predicated region
      $region25: #{trancnn_forward.4} parent=11 // pred_check
        %p237 = pneg %p124
      $region26: #{trancnn_forward.4} parent=11 // pred_check_branch
        %239 = sbr.rel (%p237) target = $region28
      $region27: #{trancnn_forward.4} parent=11 // pred_region
        _
      $region28: #{trancnn_forward.4} parent=11 // pred_fallthru
        _
      // Predicated region
      $region29: #{trancnn_forward.4} parent=11 // pred_check
        %p240 = pneg %p145
      $region30: #{trancnn_forward.4} parent=11 // pred_check_branch
        %242 = sbr.rel (%p240) target = $region32
      $region31: #{trancnn_forward.4} parent=11 // pred_region
        _
      $region32: #{trancnn_forward.4} parent=11 // pred_fallthru
        _
      // Predicated region
      $region33: #{trancnn_forward.4} parent=11 // pred_check
        %p243 = pneg %p166
      $region34: #{trancnn_forward.4} parent=11 // pred_check_branch
        %245 = sbr.rel (%p243) target = $region36
      $region35: #{trancnn_forward.4} parent=11 // pred_region
        _
      $region36: #{trancnn_forward.4} parent=11 // pred_fallthru
        _
      // Predicated region
      $region37: #{trancnn_forward.4} parent=11 // pred_check
        %p246 = pneg %p187
      $region38: #{trancnn_forward.4} parent=11 // pred_check_branch
        %248 = sbr.rel (%p246) target = $region40
      $region39: #{trancnn_forward.4} parent=11 // pred_region
        _
      $region40: #{trancnn_forward.4} parent=11 // pred_fallthru
        _
    $region12: #{trancnn_forward.4} parent=5 // pred_fallthru
      _
    %p249 = scmp.lt.s32.totalorder %s14, 2
    // Predicated region
    $region41: #{trancnn_forward.4} parent=5 // pred_check
      %p250 = pneg %p249
    $region42: #{trancnn_forward.4} parent=5 // pred_check_branch
      %252 = sbr.rel (%p250) target = $region44
    $region43: #{trancnn_forward.4} parent=5 // pred_region
      // Predicated region
      $region45: #{trancnn_forward.4} parent=43 // pred_check
        %p253 = pneg %p34
      $region46: #{trancnn_forward.4} parent=43 // pred_check_branch
        %255 = sbr.rel (%p253) target = $region48
      $region47: #{trancnn_forward.4} parent=43 // pred_region
        %p256 = scmp.lt.s32.totalorder %s14, 1
        %s257 = scalar_select %p256, %s14, 1
        %s258 = smul.addr %s257, 11
        %s259 = smul.addr %s258, 8
        %s260 = scalar_lea.vmem %s0, %s259
      $region48: #{trancnn_forward.4} parent=43 // pred_fallthru
        _
    $region44: #{trancnn_forward.4} parent=5 // pred_fallthru
      _
    %p261 = scmp.le.s32.totalorder 1, %s14
    %p262 = scmp.lt.s32.totalorder %s14, 3
    %p263 = pnand %p261, %p262
    %p264 = pneg %p263
    // Predicated region
    $region49: #{trancnn_forward.4} parent=5 // pred_check
      _
    $region50: #{trancnn_forward.4} parent=5 // pred_check_branch
      %266 = sbr.rel (%p263) target = $region52
    $region51: #{trancnn_forward.4} parent=5 // pred_region
      %s267 = ssub.s32 %s14, 1
      %p268 = scmp.lt.s32.totalorder %s19, 1
      %s269 = scalar_select %p268, %s19, 1
      %s270 = smul.addr %s269, 11
      %s271 = smul.addr %s270, 8
      %s272 = scalar_lea.vmem %s0, %s271
      %p273 = pneg %p40
      %p274 = pneg %p37
      %p275 = pneg %p61
      %p276 = pneg %p58
      %p277 = pneg %p82
      %p278 = pneg %p79
      %p279 = pneg %p103
      %p280 = pneg %p100
      %p281 = pneg %p124
      %p282 = pneg %p121
      %p283 = pneg %p145
      %p284 = pneg %p142
      %p285 = pneg %p166
      %p286 = pneg %p163
      %p287 = pneg %p187
      %p288 = pneg %p184
      %p289 = pneg %p213
      %p290 = pneg %p210
      %p291 = scmp.lt.s32.totalorder %s19, 1
      %s292 = scalar_select %p291, %s19, 1
      %s293 = smul.addr %s292, 5
      %s294 = smul.addr %s293, 8
      %s295 = scalar_lea.vmem %s8, %s294
      %p296 = scmp.lt.s32.totalorder %s19, 1
      %s297 = scalar_select %p296, %s19, 1
      %s298 = smul.addr %s297, 11
      %s299 = smul.addr %s298, 8
      %s300 = scalar_lea.vmem %s0, %s299
      %p301 = scmp.lt.s32.totalorder %s19, 1
      %s302 = scalar_select %p301, %s19, 1
      %s303 = smul.addr %s302, 5
      %s304 = smul.addr %s303, 8
      %s305 = scalar_lea.vmem %s8, %s304
      %v306 = vld [vmem:[%s300] sm:$0xff]
      %v307 = vld [vmem:[%s300 + $0x8] sm:$0xff]
      %v308 = vld [vmem:[%s300 + $0x10] sm:$0xff]
      %v309 = vld [vmem:[%s300 + $0x18] sm:$0xff]
      %v310 = vld [vmem:[%s300 + $0x20] sm:$0xff]
      %v311 = vld [vmem:[%s300 + $0x28] sm:$0xff]
      %v312 = vld [vmem:[%s300 + $0x30] sm:$0xff]
      %v313 = vld [vmem:[%s300 + $0x38] sm:$0xff]
      %v314 = vld [vmem:[%s300 + $0x40] sm:$0xff]
      %v315 = vld [vmem:[%s300 + $0x48] sm:$0xff]
      %v316 = vld [vmem:[%s1] sm:$0xff]
      %v317 = vld [vmem:[%s1 + $0x8] sm:$0xff]
      %v318 = vld [vmem:[%s1 + $0x10] sm:$0xff]
      %v319 = vld [vmem:[%s1 + $0x18] sm:$0xff]
      %v320 = vld [vmem:[%s1 + $0x20] sm:$0xf]
      %v321 = vld [vmem:[%s300 + $0x1] sm:$0xff]
      %v322 = vld [vmem:[%s300 + $0x9] sm:$0xff]
      %v323 = vld [vmem:[%s300 + $0x11] sm:$0xff]
      %v324 = vld [vmem:[%s300 + $0x19] sm:$0xff]
      %v325 = vld [vmem:[%s300 + $0x21] sm:$0xff]
      %v326 = vld [vmem:[%s300 + $0x29] sm:$0xff]
      %v327 = vld [vmem:[%s300 + $0x31] sm:$0xff]
      %v328 = vld [vmem:[%s300 + $0x39] sm:$0xff]
      %v329 = vld [vmem:[%s300 + $0x41] sm:$0xff]
      %v330 = vld [vmem:[%s300 + $0x49] sm:$0xff]
      %s331 = scalar_lea.vmem %s1, 40
      %v332 = vld [vmem:[%s331] sm:$0xff]
      %v333 = vld [vmem:[%s331 + $0x8] sm:$0xff]
      %v334 = vld [vmem:[%s331 + $0x10] sm:$0xff]
      %v335 = vld [vmem:[%s331 + $0x18] sm:$0xff]
      %v336 = vld [vmem:[%s331 + $0x20] sm:$0xf]
      %vm337 = vcmask 293888
      %v339 = vsel %vm337, %v321, 0
      %v342 = vsel %vm337, %v322, 0
      %v345 = vsel %vm337, %v323, 0
      %v348 = vsel %vm337, %v324, 0
      %v351 = vsel %vm337, %v325, 0
      %v354 = vsel %vm337, %v326, 0
      %v357 = vsel %vm337, %v327, 0
      %v360 = vsel %vm337, %v328, 0
      %v363 = vsel %vm337, %v329, 0
      %v366 = vsel %vm337, %v330, 0
      %vm368 = vcmask 1043456
      %v370 = vsel %vm368, %v336, 0
      %372 = vmatpush.msra.mxu0 0.0
      %373 = vmatpush.msra.mxu0 0.0
      %374 = vmatpush.msra.mxu0 0.0
      %375 = vmatpush.msra.mxu0 0.0
      %376 = vmatpush.msra.mxu0 0.0
      %377 = vmatpush.msra.mxu0 0.0
      %378 = vmatpush.msra.mxu0 0.0
      %379 = vmatpush.msra.mxu0 0.0
      %380 = vmatpush.msra.mxu0 0.0
      %381 = vmatpush.msra.mxu0 0.0
      %382 = vmatpush.msra.mxu0 0.0
      %383 = vmatpush.msra.mxu0 %v370
      %384 = vmatpush.msra.mxu0 %v335
      %385 = vmatpush.msra.mxu0 %v334
      %386 = vmatpush.msra.mxu0 %v333
      %387 = vmatpush.msra.mxu0 %v332
      %388 = vmatmul.f32.gmra.mxu0 %v339
      %v389 = vpop.f32.mrf.mxu0
      %v390 = vadd.f32 0.0, %v389
      %391 = vmatmul.f32.gmra.mxu0 %v342
      %v392 = vpop.f32.mrf.mxu0
      %v393 = vadd.f32 0.0, %v392
      %394 = vmatmul.f32.gmra.mxu0 %v345
      %v395 = vpop.f32.mrf.mxu0
      %v396 = vadd.f32 0.0, %v395
      %397 = vmatmul.f32.gmra.mxu0 %v348
      %v398 = vpop.f32.mrf.mxu0
      %v399 = vadd.f32 0.0, %v398
      %400 = vmatmul.f32.gmra.mxu0 %v351
      %v401 = vpop.f32.mrf.mxu0
      %v402 = vadd.f32 0.0, %v401
      %403 = vmatmul.f32.gmra.mxu0 %v354
      %v404 = vpop.f32.mrf.mxu0
      %v405 = vadd.f32 0.0, %v404
      %406 = vmatmul.f32.gmra.mxu0 %v357
      %v407 = vpop.f32.mrf.mxu0
      %v408 = vadd.f32 0.0, %v407
      %409 = vmatmul.f32.gmra.mxu0 %v360
      %v410 = vpop.f32.mrf.mxu0
      %v411 = vadd.f32 0.0, %v410
      %412 = vmatmul.f32.gmra.mxu0 %v363
      %v413 = vpop.f32.mrf.mxu0
      %v414 = vadd.f32 0.0, %v413
      %415 = vmatmul.f32.gmra.mxu0 %v366
      %v416 = vpop.f32.mrf.mxu0
      %v417 = vadd.f32 0.0, %v416
      %418 = vdwg.mxu0
      %v420 = vsel %vm337, %v306, 0
      %v423 = vsel %vm337, %v307, 0
      %v426 = vsel %vm337, %v308, 0
      %v429 = vsel %vm337, %v309, 0
      %v432 = vsel %vm337, %v310, 0
      %v435 = vsel %vm337, %v311, 0
      %v438 = vsel %vm337, %v312, 0
      %v441 = vsel %vm337, %v313, 0
      %v444 = vsel %vm337, %v314, 0
      %v447 = vsel %vm337, %v315, 0
      %v450 = vsel %vm368, %v320, 0
      %452 = vmatpush.msra.mxu0 0.0
      %453 = vmatpush.msra.mxu0 0.0
      %454 = vmatpush.msra.mxu0 0.0
      %455 = vmatpush.msra.mxu0 0.0
      %456 = vmatpush.msra.mxu0 0.0
      %457 = vmatpush.msra.mxu0 0.0
      %458 = vmatpush.msra.mxu0 0.0
      %459 = vmatpush.msra.mxu0 0.0
      %460 = vmatpush.msra.mxu0 0.0
      %461 = vmatpush.msra.mxu0 0.0
      %462 = vmatpush.msra.mxu0 0.0
      %463 = vmatpush.msra.mxu0 %v450
      %464 = vmatpush.msra.mxu0 %v319
      %465 = vmatpush.msra.mxu0 %v318
      %466 = vmatpush.msra.mxu0 %v317
      %467 = vmatpush.msra.mxu0 %v316
      %468 = vmatmul.f32.gmra.mxu0 %v420
      %v469 = vpop.f32.mrf.mxu0
      %v470 = vadd.f32 %v390, %v469
      %471 = vmatmul.f32.gmra.mxu0 %v423
      %v472 = vpop.f32.mrf.mxu0
      %v473 = vadd.f32 %v393, %v472
      %474 = vmatmul.f32.gmra.mxu0 %v426
      %v475 = vpop.f32.mrf.mxu0
      %v476 = vadd.f32 %v396, %v475
      %477 = vmatmul.f32.gmra.mxu0 %v429
      %v478 = vpop.f32.mrf.mxu0
      %v479 = vadd.f32 %v399, %v478
      %480 = vmatmul.f32.gmra.mxu0 %v432
      %v481 = vpop.f32.mrf.mxu0
      %v482 = vadd.f32 %v402, %v481
      %483 = vmatmul.f32.gmra.mxu0 %v435
      %v484 = vpop.f32.mrf.mxu0
      %v485 = vadd.f32 %v405, %v484
      %486 = vmatmul.f32.gmra.mxu0 %v438
      %v487 = vpop.f32.mrf.mxu0
      %v488 = vadd.f32 %v408, %v487
      %489 = vmatmul.f32.gmra.mxu0 %v441
      %v490 = vpop.f32.mrf.mxu0
      %v491 = vadd.f32 %v411, %v490
      %492 = vmatmul.f32.gmra.mxu0 %v444
      %v493 = vpop.f32.mrf.mxu0
      %v494 = vadd.f32 %v414, %v493
      %495 = vmatmul.f32.gmra.mxu0 %v447
      %v496 = vpop.f32.mrf.mxu0
      %v497 = vadd.f32 %v417, %v496
      %498 = vdwg.mxu0
      %v499 = vld [vmem:[%s300 + $0x2] sm:$0xff]
      %v500 = vld [vmem:[%s300 + $0xa] sm:$0xff]
      %v501 = vld [vmem:[%s300 + $0x12] sm:$0xff]
      %v502 = vld [vmem:[%s300 + $0x1a] sm:$0xff]
      %v503 = vld [vmem:[%s300 + $0x22] sm:$0xff]
      %v504 = vld [vmem:[%s300 + $0x2a] sm:$0xff]
      %v505 = vld [vmem:[%s300 + $0x32] sm:$0xff]
      %v506 = vld [vmem:[%s300 + $0x3a] sm:$0xff]
      %v507 = vld [vmem:[%s300 + $0x42] sm:$0xff]
      %v508 = vld [vmem:[%s300 + $0x4a] sm:$0xff]
      %s509 = scalar_lea.vmem %s1, 80
      %v510 = vld [vmem:[%s509] sm:$0xff]
      %v511 = vld [vmem:[%s509 + $0x8] sm:$0xff]
      %v512 = vld [vmem:[%s509 + $0x10] sm:$0xff]
      %v513 = vld [vmem:[%s509 + $0x18] sm:$0xff]
      %v514 = vld [vmem:[%s509 + $0x20] sm:$0xf]
      %v516 = vsel %vm337, %v499, 0
      %v519 = vsel %vm337, %v500, 0
      %v522 = vsel %vm337, %v501, 0
      %v525 = vsel %vm337, %v502, 0
      %v528 = vsel %vm337, %v503, 0
      %v531 = vsel %vm337, %v504, 0
      %v534 = vsel %vm337, %v505, 0
      %v537 = vsel %vm337, %v506, 0
      %v540 = vsel %vm337, %v507, 0
      %v543 = vsel %vm337, %v508, 0
      %v546 = vsel %vm368, %v514, 0
      %548 = vmatpush.msra.mxu0 0.0
      %549 = vmatpush.msra.mxu0 0.0
      %550 = vmatpush.msra.mxu0 0.0
      %551 = vmatpush.msra.mxu0 0.0
      %552 = vmatpush.msra.mxu0 0.0
      %553 = vmatpush.msra.mxu0 0.0
      %554 = vmatpush.msra.mxu0 0.0
      %555 = vmatpush.msra.mxu0 0.0
      %556 = vmatpush.msra.mxu0 0.0
      %557 = vmatpush.msra.mxu0 0.0
      %558 = vmatpush.msra.mxu0 0.0
      %559 = vmatpush.msra.mxu0 %v546
      %560 = vmatpush.msra.mxu0 %v513
      %561 = vmatpush.msra.mxu0 %v512
      %562 = vmatpush.msra.mxu0 %v511
      %563 = vmatpush.msra.mxu0 %v510
      %564 = vmatmul.f32.gmra.mxu0 %v516
      %v565 = vpop.f32.mrf.mxu0
      %v566 = vadd.f32 0.0, %v565
      %567 = vmatmul.f32.gmra.mxu0 %v519
      %v568 = vpop.f32.mrf.mxu0
      %v569 = vadd.f32 0.0, %v568
      %570 = vmatmul.f32.gmra.mxu0 %v522
      %v571 = vpop.f32.mrf.mxu0
      %v572 = vadd.f32 0.0, %v571
      %573 = vmatmul.f32.gmra.mxu0 %v525
      %v574 = vpop.f32.mrf.mxu0
      %v575 = vadd.f32 0.0, %v574
      %576 = vmatmul.f32.gmra.mxu0 %v528
      %v577 = vpop.f32.mrf.mxu0
      %v578 = vadd.f32 0.0, %v577
      %579 = vmatmul.f32.gmra.mxu0 %v531
      %v580 = vpop.f32.mrf.mxu0
      %v581 = vadd.f32 0.0, %v580
      %582 = vmatmul.f32.gmra.mxu0 %v534
      %v583 = vpop.f32.mrf.mxu0
      %v584 = vadd.f32 0.0, %v583
      %585 = vmatmul.f32.gmra.mxu0 %v537
      %v586 = vpop.f32.mrf.mxu0
      %v587 = vadd.f32 0.0, %v586
      %588 = vmatmul.f32.gmra.mxu0 %v540
      %v589 = vpop.f32.mrf.mxu0
      %v590 = vadd.f32 0.0, %v589
      %591 = vmatmul.f32.gmra.mxu0 %v543
      %v592 = vpop.f32.mrf.mxu0
      %v593 = vadd.f32 0.0, %v592
      %594 = vdwg.mxu0
      %v595 = vadd.f32 %v470, %v566
      %v596 = vadd.f32 %v473, %v569
      %v597 = vadd.f32 %v476, %v572
      %v598 = vadd.f32 %v479, %v575
      %v599 = vadd.f32 %v482, %v578
      %v600 = vadd.f32 %v485, %v581
      %v601 = vadd.f32 %v488, %v584
      %v602 = vadd.f32 %v491, %v587
      %v603 = vadd.f32 %v494, %v590
      %v604 = vadd.f32 %v497, %v593
      %v605 = vld [vmem:[%s300 + $0x3] sm:$0xff]
      %v606 = vld [vmem:[%s300 + $0xb] sm:$0xff]
      %v607 = vld [vmem:[%s300 + $0x13] sm:$0xff]
      %v608 = vld [vmem:[%s300 + $0x1b] sm:$0xff]
      %v609 = vld [vmem:[%s300 + $0x23] sm:$0xff]
      %v610 = vld [vmem:[%s300 + $0x2b] sm:$0xff]
      %v611 = vld [vmem:[%s300 + $0x33] sm:$0xff]
      %v612 = vld [vmem:[%s300 + $0x3b] sm:$0xff]
      %v613 = vld [vmem:[%s300 + $0x43] sm:$0xff]
      %v614 = vld [vmem:[%s300 + $0x4b] sm:$0xff]
      %s615 = scalar_lea.vmem %s1, 120
      %v616 = vld [vmem:[%s615] sm:$0xff]
      %v617 = vld [vmem:[%s615 + $0x8] sm:$0xff]
      %v618 = vld [vmem:[%s615 + $0x10] sm:$0xff]
      %v619 = vld [vmem:[%s615 + $0x18] sm:$0xff]
      %v620 = vld [vmem:[%s615 + $0x20] sm:$0xf]
      %v622 = vsel %vm337, %v605, 0
      %v625 = vsel %vm337, %v606, 0
      %v628 = vsel %vm337, %v607, 0
      %v631 = vsel %vm337, %v608, 0
      %v634 = vsel %vm337, %v609, 0
      %v637 = vsel %vm337, %v610, 0
      %v640 = vsel %vm337, %v611, 0
      %v643 = vsel %vm337, %v612, 0
      %v646 = vsel %vm337, %v613, 0
      %v649 = vsel %vm337, %v614, 0
      %v652 = vsel %vm368, %v620, 0
      %654 = vmatpush.msra.mxu0 0.0
      %655 = vmatpush.msra.mxu0 0.0
      %656 = vmatpush.msra.mxu0 0.0
      %657 = vmatpush.msra.mxu0 0.0
      %658 = vmatpush.msra.mxu0 0.0
      %659 = vmatpush.msra.mxu0 0.0
      %660 = vmatpush.msra.mxu0 0.0
      %661 = vmatpush.msra.mxu0 0.0
      %662 = vmatpush.msra.mxu0 0.0
      %663 = vmatpush.msra.mxu0 0.0
      %664 = vmatpush.msra.mxu0 0.0
      %665 = vmatpush.msra.mxu0 %v652
      %666 = vmatpush.msra.mxu0 %v619
      %667 = vmatpush.msra.mxu0 %v618
      %668 = vmatpush.msra.mxu0 %v617
      %669 = vmatpush.msra.mxu0 %v616
      %670 = vmatmul.f32.gmra.mxu0 %v622
      %v671 = vpop.f32.mrf.mxu0
      %v672 = vadd.f32 0.0, %v671
      %673 = vmatmul.f32.gmra.mxu0 %v625
      %v674 = vpop.f32.mrf.mxu0
      %v675 = vadd.f32 0.0, %v674
      %676 = vmatmul.f32.gmra.mxu0 %v628
      %v677 = vpop.f32.mrf.mxu0
      %v678 = vadd.f32 0.0, %v677
      %679 = vmatmul.f32.gmra.mxu0 %v631
      %v680 = vpop.f32.mrf.mxu0
      %v681 = vadd.f32 0.0, %v680
      %682 = vmatmul.f32.gmra.mxu0 %v634
      %v683 = vpop.f32.mrf.mxu0
      %v684 = vadd.f32 0.0, %v683
      %685 = vmatmul.f32.gmra.mxu0 %v637
      %v686 = vpop.f32.mrf.mxu0
      %v687 = vadd.f32 0.0, %v686
      %688 = vmatmul.f32.gmra.mxu0 %v640
      %v689 = vpop.f32.mrf.mxu0
      %v690 = vadd.f32 0.0, %v689
      %691 = vmatmul.f32.gmra.mxu0 %v643
      %v692 = vpop.f32.mrf.mxu0
      %v693 = vadd.f32 0.0, %v692
      %694 = vmatmul.f32.gmra.mxu0 %v646
      %v695 = vpop.f32.mrf.mxu0
      %v696 = vadd.f32 0.0, %v695
      %697 = vmatmul.f32.gmra.mxu0 %v649
      %v698 = vpop.f32.mrf.mxu0
      %v699 = vadd.f32 0.0, %v698
      %700 = vdwg.mxu0
      %v701 = vadd.f32 %v595, %v672
      %v702 = vadd.f32 %v596, %v675
      %v703 = vadd.f32 %v597, %v678
      %v704 = vadd.f32 %v598, %v681
      %v705 = vadd.f32 %v599, %v684
      %v706 = vadd.f32 %v600, %v687
      %v707 = vadd.f32 %v601, %v690
      %v708 = vadd.f32 %v602, %v693
      %v709 = vadd.f32 %v603, %v696
      %v710 = vadd.f32 %v604, %v699
      %v711 = vld [vmem:[%s2] sm:$0x1]
      %v713 = vperm.slane %v711, 0
      %v715 = vadd.f32 %v701, %v713
      %v716 = vadd.f32 %v702, %v713
      %v717 = vadd.f32 %v703, %v713
      %v718 = vadd.f32 %v704, %v713
      %v719 = vadd.f32 %v705, %v713
      %v720 = vadd.f32 %v706, %v713
      %v721 = vadd.f32 %v707, %v713
      %v722 = vadd.f32 %v708, %v713
      %v723 = vadd.f32 %v709, %v713
      %v724 = vadd.f32 %v710, %v713
      %v725 = vmax.f32 %v715, 0.0
      %v726 = vmax.f32 %v716, 0.0
      %v727 = vmax.f32 %v717, 0.0
      %v728 = vmax.f32 %v718, 0.0
      %v729 = vmax.f32 %v719, 0.0
      %v730 = vmax.f32 %v720, 0.0
      %v731 = vmax.f32 %v721, 0.0
      %v732 = vmax.f32 %v722, 0.0
      %v733 = vmax.f32 %v723, 0.0
      %v734 = vmax.f32 %v724, 0.0
      %v735 = vld [vmem:[%s3] sm:$0xff]
      %v736 = vld [vmem:[%s3 + $0x8] sm:$0xff]
      %v737 = vld [vmem:[%s3 + $0x10] sm:$0xff]
      %v738 = vld [vmem:[%s3 + $0x18] sm:$0xff]
      %v739 = vld [vmem:[%s3 + $0x20] sm:$0xff]
      %vm740 = vcmask 654336
      %v742 = vsel %vm740, %v735, 0
      %v745 = vsel %vm740, %v736, 0
      %v748 = vsel %vm740, %v737, 0
      %v751 = vsel %vm740, %v738, 0
      %v754 = vsel %vm740, %v739, 0
      %756 = vmatpush.msra.mxu0 0.0
      %757 = vmatpush.msra.mxu0 0.0
      %758 = vmatpush.msra.mxu0 0.0
      %759 = vmatpush.msra.mxu0 0.0
      %760 = vmatpush.msra.mxu0 0.0
      %761 = vmatpush.msra.mxu0 0.0
      %762 = vmatpush.msra.mxu0 %v734
      %763 = vmatpush.msra.mxu0 %v733
      %764 = vmatpush.msra.mxu0 %v732
      %765 = vmatpush.msra.mxu0 %v731
      %766 = vmatpush.msra.mxu0 %v730
      %767 = vmatpush.msra.mxu0 %v729
      %768 = vmatpush.msra.mxu0 %v728
      %769 = vmatpush.msra.mxu0 %v727
      %770 = vmatpush.msra.mxu0 %v726
      %771 = vmatpush.msra.mxu0 %v725
      %772 = vmatmul.f32.gmra.mxu0 %v742
      %v773 = vpop.f32.mrf.mxu0
      %v774 = vadd.f32 0.0, %v773
      %775 = vmatmul.f32.gmra.mxu0 %v745
      %v776 = vpop.f32.mrf.mxu0
      %v777 = vadd.f32 0.0, %v776
      %778 = vmatmul.f32.gmra.mxu0 %v748
      %v779 = vpop.f32.mrf.mxu0
      %v780 = vadd.f32 0.0, %v779
      %781 = vmatmul.f32.gmra.mxu0 %v751
      %v782 = vpop.f32.mrf.mxu0
      %v783 = vadd.f32 0.0, %v782
      %784 = vmatmul.f32.gmra.mxu0 %v754
      %v785 = vpop.f32.mrf.mxu0
      %v786 = vadd.f32 0.0, %v785
      %787 = vdwg.mxu0
      %s788 = scalar_lea.vmem %s3, 40
      %v789 = vld [vmem:[%s788] sm:$0xff]
      %v790 = vld [vmem:[%s788 + $0x8] sm:$0xff]
      %v791 = vld [vmem:[%s788 + $0x10] sm:$0xff]
      %v792 = vld [vmem:[%s788 + $0x18] sm:$0xff]
      %v793 = vld [vmem:[%s788 + $0x20] sm:$0xff]
      %v795 = vsel %vm740, %v789, 0
      %v798 = vsel %vm740, %v790, 0
      %v801 = vsel %vm740, %v791, 0
      %v804 = vsel %vm740, %v792, 0
      %v807 = vsel %vm740, %v793, 0
      %809 = vmatpush.msra.mxu0 0.0
      %810 = vmatpush.msra.mxu0 0.0
      %811 = vmatpush.msra.mxu0 0.0
      %812 = vmatpush.msra.mxu0 0.0
      %813 = vmatpush.msra.mxu0 0.0
      %814 = vmatpush.msra.mxu0 0.0
      %815 = vmatpush.msra.mxu0 %v734
      %816 = vmatpush.msra.mxu0 %v733
      %817 = vmatpush.msra.mxu0 %v732
      %818 = vmatpush.msra.mxu0 %v731
      %819 = vmatpush.msra.mxu0 %v730
      %820 = vmatpush.msra.mxu0 %v729
      %821 = vmatpush.msra.mxu0 %v728
      %822 = vmatpush.msra.mxu0 %v727
      %823 = vmatpush.msra.mxu0 %v726
      %824 = vmatpush.msra.mxu0 %v725
      %825 = vmatmul.f32.gmra.mxu0 %v795
      %v826 = vpop.f32.mrf.mxu0
      %v827 = vadd.f32 0.0, %v826
      %828 = vmatmul.f32.gmra.mxu0 %v798
      %v829 = vpop.f32.mrf.mxu0
      %v830 = vadd.f32 0.0, %v829
      %831 = vmatmul.f32.gmra.mxu0 %v801
      %v832 = vpop.f32.mrf.mxu0
      %v833 = vadd.f32 0.0, %v832
      %834 = vmatmul.f32.gmra.mxu0 %v804
      %v835 = vpop.f32.mrf.mxu0
      %v836 = vadd.f32 0.0, %v835
      %837 = vmatmul.f32.gmra.mxu0 %v807
      %v838 = vpop.f32.mrf.mxu0
      %v839 = vadd.f32 0.0, %v838
      %840 = vdwg.mxu0
      %v841 = vmax.f32 %v774, %v827
      %v842 = vmax.f32 %v777, %v830
      %v843 = vmax.f32 %v780, %v833
      %v844 = vmax.f32 %v783, %v836
      %v845 = vmax.f32 %v786, %v839
      %v846 = vld [vmem:[%s4] sm:$0xff]
      %v847 = vld [vmem:[%s4 + $0x8] sm:$0xff]
      %v848 = vld [vmem:[%s4 + $0x10] sm:$0xff]
      %v849 = vld [vmem:[%s4 + $0x18] sm:$0xff]
      %v850 = vld [vmem:[%s4 + $0x20] sm:$0xff]
      %s851 = scalar_lea.vmem %s4, 40
      %v852 = vld [vmem:[%s851] sm:$0xff]
      %v853 = vld [vmem:[%s851 + $0x8] sm:$0xff]
      %v854 = vld [vmem:[%s851 + $0x10] sm:$0xff]
      %v855 = vld [vmem:[%s851 + $0x18] sm:$0xff]
      %v856 = vld [vmem:[%s851 + $0x20] sm:$0xff]
      %862 = vrot.lane.b32.xlu0 %v841, 96
      %v863 = vpop.permute.xlu0 %862
      %864 = vrot.lane.b32.xlu0 %v842, 96
      %v865 = vpop.permute.xlu0 %864
      %866 = vrot.lane.b32.xlu0 %v843, 96
      %v867 = vpop.permute.xlu0 %866
      %868 = vrot.lane.b32.xlu0 %v844, 96
      %v869 = vpop.permute.xlu0 %868
      %870 = vrot.lane.b32.xlu0 %v845, 96
      %v871 = vpop.permute.xlu0 %870
      %vm877 = vcmask 326656
      %v879 = vsel %vm877, %v852, 0
      %v882 = vsel %vm877, %v853, 0
      %v885 = vsel %vm877, %v854, 0
      %v888 = vsel %vm877, %v855, 0
      %v891 = vsel %vm877, %v856, 0
      %893 = vmatpush.msra.mxu0 0.0
      %894 = vmatpush.msra.mxu0 0.0
      %895 = vmatpush.msra.mxu0 0.0
      %896 = vmatpush.msra.mxu0 0.0
      %897 = vmatpush.msra.mxu0 0.0
      %898 = vmatpush.msra.mxu0 0.0
      %899 = vmatpush.msra.mxu0 0.0
      %900 = vmatpush.msra.mxu0 0.0
      %901 = vmatpush.msra.mxu0 0.0
      %902 = vmatpush.msra.mxu0 0.0
      %903 = vmatpush.msra.mxu0 0.0
      %904 = vmatpush.msra.mxu0 %v871
      %905 = vmatpush.msra.mxu0 %v869
      %906 = vmatpush.msra.mxu0 %v867
      %907 = vmatpush.msra.mxu0 %v865
      %908 = vmatpush.msra.mxu0 %v863
      %909 = vmatmul.f32.gmra.mxu0 %v879
      %v910 = vpop.f32.mrf.mxu0
      %v911 = vadd.f32 0.0, %v910
      %912 = vmatmul.f32.gmra.mxu0 %v882
      %v913 = vpop.f32.mrf.mxu0
      %v914 = vadd.f32 0.0, %v913
      %915 = vmatmul.f32.gmra.mxu0 %v885
      %v916 = vpop.f32.mrf.mxu0
      %v917 = vadd.f32 0.0, %v916
      %918 = vmatmul.f32.gmra.mxu0 %v888
      %v919 = vpop.f32.mrf.mxu0
      %v920 = vadd.f32 0.0, %v919
      %921 = vmatmul.f32.gmra.mxu0 %v891
      %v922 = vpop.f32.mrf.mxu0
      %v923 = vadd.f32 0.0, %v922
      %924 = vdwg.mxu0
      %v926 = vsel %vm877, %v846, 0
      %v929 = vsel %vm877, %v847, 0
      %v932 = vsel %vm877, %v848, 0
      %v935 = vsel %vm877, %v849, 0
      %v938 = vsel %vm877, %v850, 0
      %940 = vmatpush.msra.mxu0 0.0
      %941 = vmatpush.msra.mxu0 0.0
      %942 = vmatpush.msra.mxu0 0.0
      %943 = vmatpush.msra.mxu0 0.0
      %944 = vmatpush.msra.mxu0 0.0
      %945 = vmatpush.msra.mxu0 0.0
      %946 = vmatpush.msra.mxu0 0.0
      %947 = vmatpush.msra.mxu0 0.0
      %948 = vmatpush.msra.mxu0 0.0
      %949 = vmatpush.msra.mxu0 0.0
      %950 = vmatpush.msra.mxu0 0.0
      %951 = vmatpush.msra.mxu0 %v845
      %952 = vmatpush.msra.mxu0 %v844
      %953 = vmatpush.msra.mxu0 %v843
      %954 = vmatpush.msra.mxu0 %v842
      %955 = vmatpush.msra.mxu0 %v841
      %956 = vmatmul.f32.gmra.mxu0 %v926
      %v957 = vpop.f32.mrf.mxu0
      %v958 = vadd.f32 %v911, %v957
      %959 = vmatmul.f32.gmra.mxu0 %v929
      %v960 = vpop.f32.mrf.mxu0
      %v961 = vadd.f32 %v914, %v960
      %962 = vmatmul.f32.gmra.mxu0 %v932
      %v963 = vpop.f32.mrf.mxu0
      %v964 = vadd.f32 %v917, %v963
      %965 = vmatmul.f32.gmra.mxu0 %v935
      %v966 = vpop.f32.mrf.mxu0
      %v967 = vadd.f32 %v920, %v966
      %968 = vmatmul.f32.gmra.mxu0 %v938
      %v969 = vpop.f32.mrf.mxu0
      %v970 = vadd.f32 %v923, %v969
      %971 = vdwg.mxu0
      %s972 = scalar_lea.vmem %s4, 80
      %v973 = vld [vmem:[%s972] sm:$0xff]
      %v974 = vld [vmem:[%s972 + $0x8] sm:$0xff]
      %v975 = vld [vmem:[%s972 + $0x10] sm:$0xff]
      %v976 = vld [vmem:[%s972 + $0x18] sm:$0xff]
      %v977 = vld [vmem:[%s972 + $0x20] sm:$0xff]
      %978 = vrot.lane.b32.xlu0 %v841, 64
      %v979 = vpop.permute.xlu0 %978
      %980 = vrot.lane.b32.xlu0 %v842, 64
      %v981 = vpop.permute.xlu0 %980
      %982 = vrot.lane.b32.xlu0 %v843, 64
      %v983 = vpop.permute.xlu0 %982
      %984 = vrot.lane.b32.xlu0 %v844, 64
      %v985 = vpop.permute.xlu0 %984
      %986 = vrot.lane.b32.xlu0 %v845, 64
      %v987 = vpop.permute.xlu0 %986
      %v994 = vsel %vm877, %v973, 0
      %v997 = vsel %vm877, %v974, 0
      %v1000 = vsel %vm877, %v975, 0
      %v1003 = vsel %vm877, %v976, 0
      %v1006 = vsel %vm877, %v977, 0
      %1008 = vmatpush.msra.mxu0 0.0
      %1009 = vmatpush.msra.mxu0 0.0
      %1010 = vmatpush.msra.mxu0 0.0
      %1011 = vmatpush.msra.mxu0 0.0
      %1012 = vmatpush.msra.mxu0 0.0
      %1013 = vmatpush.msra.mxu0 0.0
      %1014 = vmatpush.msra.mxu0 0.0
      %1015 = vmatpush.msra.mxu0 0.0
      %1016 = vmatpush.msra.mxu0 0.0
      %1017 = vmatpush.msra.mxu0 0.0
      %1018 = vmatpush.msra.mxu0 0.0
      %1019 = vmatpush.msra.mxu0 %v987
      %1020 = vmatpush.msra.mxu0 %v985
      %1021 = vmatpush.msra.mxu0 %v983
      %1022 = vmatpush.msra.mxu0 %v981
      %1023 = vmatpush.msra.mxu0 %v979
      %1024 = vmatmul.f32.gmra.mxu0 %v994
      %v1025 = vpop.f32.mrf.mxu0
      %v1026 = vadd.f32 0.0, %v1025
      %1027 = vmatmul.f32.gmra.mxu0 %v997
      %v1028 = vpop.f32.mrf.mxu0
      %v1029 = vadd.f32 0.0, %v1028
      %1030 = vmatmul.f32.gmra.mxu0 %v1000
      %v1031 = vpop.f32.mrf.mxu0
      %v1032 = vadd.f32 0.0, %v1031
      %1033 = vmatmul.f32.gmra.mxu0 %v1003
      %v1034 = vpop.f32.mrf.mxu0
      %v1035 = vadd.f32 0.0, %v1034
      %1036 = vmatmul.f32.gmra.mxu0 %v1006
      %v1037 = vpop.f32.mrf.mxu0
      %v1038 = vadd.f32 0.0, %v1037
      %1039 = vdwg.mxu0
      %v1040 = vadd.f32 %v958, %v1026
      %v1041 = vadd.f32 %v961, %v1029
      %v1042 = vadd.f32 %v964, %v1032
      %v1043 = vadd.f32 %v967, %v1035
      %v1044 = vadd.f32 %v970, %v1038
      %s1045 = scalar_lea.vmem %s4, 120
      %v1046 = vld [vmem:[%s1045] sm:$0xff]
      %v1047 = vld [vmem:[%s1045 + $0x8] sm:$0xff]
      %v1048 = vld [vmem:[%s1045 + $0x10] sm:$0xff]
      %v1049 = vld [vmem:[%s1045 + $0x18] sm:$0xff]
      %v1050 = vld [vmem:[%s1045 + $0x20] sm:$0xff]
      %s1051 = scalar_lea.vmem %s4, 160
      %v1052 = vld [vmem:[%s1051] sm:$0xff]
      %v1053 = vld [vmem:[%s1051 + $0x8] sm:$0xff]
      %v1054 = vld [vmem:[%s1051 + $0x10] sm:$0xff]
      %v1055 = vld [vmem:[%s1051 + $0x18] sm:$0xff]
      %v1056 = vld [vmem:[%s1051 + $0x20] sm:$0xff]
      %v1058 = vsel %vm877, %v1052, 0
      %v1061 = vsel %vm877, %v1053, 0
      %v1064 = vsel %vm877, %v1054, 0
      %v1067 = vsel %vm877, %v1055, 0
      %v1070 = vsel %vm877, %v1056, 0
      %1072 = vmatpush.msra.mxu0 0.0
      %1073 = vmatpush.msra.mxu0 0.0
      %1074 = vmatpush.msra.mxu0 0.0
      %1075 = vmatpush.msra.mxu0 0.0
      %1076 = vmatpush.msra.mxu0 0.0
      %1077 = vmatpush.msra.mxu0 0.0
      %1078 = vmatpush.msra.mxu0 0.0
      %1079 = vmatpush.msra.mxu0 0.0
      %1080 = vmatpush.msra.mxu0 0.0
      %1081 = vmatpush.msra.mxu0 0.0
      %1082 = vmatpush.msra.mxu0 0.0
      %1083 = vmatpush.msra.mxu0 %v871
      %1084 = vmatpush.msra.mxu0 %v869
      %1085 = vmatpush.msra.mxu0 %v867
      %1086 = vmatpush.msra.mxu0 %v865
      %1087 = vmatpush.msra.mxu0 %v863
      %1088 = vmatmul.f32.gmra.mxu0 %v1058
      %v1089 = vpop.f32.mrf.mxu0
      %v1090 = vadd.f32 0.0, %v1089
      %1091 = vmatmul.f32.gmra.mxu0 %v1061
      %v1092 = vpop.f32.mrf.mxu0
      %v1093 = vadd.f32 0.0, %v1092
      %1094 = vmatmul.f32.gmra.mxu0 %v1064
      %v1095 = vpop.f32.mrf.mxu0
      %v1096 = vadd.f32 0.0, %v1095
      %1097 = vmatmul.f32.gmra.mxu0 %v1067
      %v1098 = vpop.f32.mrf.mxu0
      %v1099 = vadd.f32 0.0, %v1098
      %1100 = vmatmul.f32.gmra.mxu0 %v1070
      %v1101 = vpop.f32.mrf.mxu0
      %v1102 = vadd.f32 0.0, %v1101
      %1103 = vdwg.mxu0
      %v1105 = vsel %vm877, %v1046, 0
      %v1108 = vsel %vm877, %v1047, 0
      %v1111 = vsel %vm877, %v1048, 0
      %v1114 = vsel %vm877, %v1049, 0
      %v1117 = vsel %vm877, %v1050, 0
      %1119 = vmatpush.msra.mxu0 0.0
      %1120 = vmatpush.msra.mxu0 0.0
      %1121 = vmatpush.msra.mxu0 0.0
      %1122 = vmatpush.msra.mxu0 0.0
      %1123 = vmatpush.msra.mxu0 0.0
      %1124 = vmatpush.msra.mxu0 0.0
      %1125 = vmatpush.msra.mxu0 0.0
      %1126 = vmatpush.msra.mxu0 0.0
      %1127 = vmatpush.msra.mxu0 0.0
      %1128 = vmatpush.msra.mxu0 0.0
      %1129 = vmatpush.msra.mxu0 0.0
      %1130 = vmatpush.msra.mxu0 %v845
      %1131 = vmatpush.msra.mxu0 %v844
      %1132 = vmatpush.msra.mxu0 %v843
      %1133 = vmatpush.msra.mxu0 %v842
      %1134 = vmatpush.msra.mxu0 %v841
      %1135 = vmatmul.f32.gmra.mxu0 %v1105
      %v1136 = vpop.f32.mrf.mxu0
      %v1137 = vadd.f32 %v1090, %v1136
      %1138 = vmatmul.f32.gmra.mxu0 %v1108
      %v1139 = vpop.f32.mrf.mxu0
      %v1140 = vadd.f32 %v1093, %v1139
      %1141 = vmatmul.f32.gmra.mxu0 %v1111
      %v1142 = vpop.f32.mrf.mxu0
      %v1143 = vadd.f32 %v1096, %v1142
      %1144 = vmatmul.f32.gmra.mxu0 %v1114
      %v1145 = vpop.f32.mrf.mxu0
      %v1146 = vadd.f32 %v1099, %v1145
      %1147 = vmatmul.f32.gmra.mxu0 %v1117
      %v1148 = vpop.f32.mrf.mxu0
      %v1149 = vadd.f32 %v1102, %v1148
      %1150 = vdwg.mxu0
      %s1151 = scalar_lea.vmem %s4, 200
      %v1152 = vld [vmem:[%s1151] sm:$0xff]
      %v1153 = vld [vmem:[%s1151 + $0x8] sm:$0xff]
      %v1154 = vld [vmem:[%s1151 + $0x10] sm:$0xff]
      %v1155 = vld [vmem:[%s1151 + $0x18] sm:$0xff]
      %v1156 = vld [vmem:[%s1151 + $0x20] sm:$0xff]
      %v1158 = vsel %vm877, %v1152, 0
      %v1161 = vsel %vm877, %v1153, 0
      %v1164 = vsel %vm877, %v1154, 0
      %v1167 = vsel %vm877, %v1155, 0
      %v1170 = vsel %vm877, %v1156, 0
      %1172 = vmatpush.msra.mxu0 0.0
      %1173 = vmatpush.msra.mxu0 0.0
      %1174 = vmatpush.msra.mxu0 0.0
      %1175 = vmatpush.msra.mxu0 0.0
      %1176 = vmatpush.msra.mxu0 0.0
      %1177 = vmatpush.msra.mxu0 0.0
      %1178 = vmatpush.msra.mxu0 0.0
      %1179 = vmatpush.msra.mxu0 0.0
      %1180 = vmatpush.msra.mxu0 0.0
      %1181 = vmatpush.msra.mxu0 0.0
      %1182 = vmatpush.msra.mxu0 0.0
      %1183 = vmatpush.msra.mxu0 %v987
      %1184 = vmatpush.msra.mxu0 %v985
      %1185 = vmatpush.msra.mxu0 %v983
      %1186 = vmatpush.msra.mxu0 %v981
      %1187 = vmatpush.msra.mxu0 %v979
      %1188 = vmatmul.f32.gmra.mxu0 %v1158
      %v1189 = vpop.f32.mrf.mxu0
      %v1190 = vadd.f32 0.0, %v1189
      %1191 = vmatmul.f32.gmra.mxu0 %v1161
      %v1192 = vpop.f32.mrf.mxu0
      %v1193 = vadd.f32 0.0, %v1192
      %1194 = vmatmul.f32.gmra.mxu0 %v1164
      %v1195 = vpop.f32.mrf.mxu0
      %v1196 = vadd.f32 0.0, %v1195
      %1197 = vmatmul.f32.gmra.mxu0 %v1167
      %v1198 = vpop.f32.mrf.mxu0
      %v1199 = vadd.f32 0.0, %v1198
      %1200 = vmatmul.f32.gmra.mxu0 %v1170
      %v1201 = vpop.f32.mrf.mxu0
      %v1202 = vadd.f32 0.0, %v1201
      %1203 = vdwg.mxu0
      %v1204 = vadd.f32 %v1137, %v1190
      %v1205 = vadd.f32 %v1140, %v1193
      %v1206 = vadd.f32 %v1143, %v1196
      %v1207 = vadd.f32 %v1146, %v1199
      %v1208 = vadd.f32 %v1149, %v1202
      %s1209 = scalar_lea.vmem %s4, 240
      %v1210 = vld [vmem:[%s1209] sm:$0xff]
      %v1211 = vld [vmem:[%s1209 + $0x8] sm:$0xff]
      %v1212 = vld [vmem:[%s1209 + $0x10] sm:$0xff]
      %v1213 = vld [vmem:[%s1209 + $0x18] sm:$0xff]
      %v1214 = vld [vmem:[%s1209 + $0x20] sm:$0xff]
      %s1215 = scalar_lea.vmem %s4, 280
      %v1216 = vld [vmem:[%s1215] sm:$0xff]
      %v1217 = vld [vmem:[%s1215 + $0x8] sm:$0xff]
      %v1218 = vld [vmem:[%s1215 + $0x10] sm:$0xff]
      %v1219 = vld [vmem:[%s1215 + $0x18] sm:$0xff]
      %v1220 = vld [vmem:[%s1215 + $0x20] sm:$0xff]
      %v1222 = vsel %vm877, %v1216, 0
      %v1225 = vsel %vm877, %v1217, 0
      %v1228 = vsel %vm877, %v1218, 0
      %v1231 = vsel %vm877, %v1219, 0
      %v1234 = vsel %vm877, %v1220, 0
      %1236 = vmatpush.msra.mxu0 0.0
      %1237 = vmatpush.msra.mxu0 0.0
      %1238 = vmatpush.msra.mxu0 0.0
      %1239 = vmatpush.msra.mxu0 0.0
      %1240 = vmatpush.msra.mxu0 0.0
      %1241 = vmatpush.msra.mxu0 0.0
      %1242 = vmatpush.msra.mxu0 0.0
      %1243 = vmatpush.msra.mxu0 0.0
      %1244 = vmatpush.msra.mxu0 0.0
      %1245 = vmatpush.msra.mxu0 0.0
      %1246 = vmatpush.msra.mxu0 0.0
      %1247 = vmatpush.msra.mxu0 %v871
      %1248 = vmatpush.msra.mxu0 %v869
      %1249 = vmatpush.msra.mxu0 %v867
      %1250 = vmatpush.msra.mxu0 %v865
      %1251 = vmatpush.msra.mxu0 %v863
      %1252 = vmatmul.f32.gmra.mxu0 %v1222
      %v1253 = vpop.f32.mrf.mxu0
      %v1254 = vadd.f32 0.0, %v1253
      %1255 = vmatmul.f32.gmra.mxu0 %v1225
      %v1256 = vpop.f32.mrf.mxu0
      %v1257 = vadd.f32 0.0, %v1256
      %1258 = vmatmul.f32.gmra.mxu0 %v1228
      %v1259 = vpop.f32.mrf.mxu0
      %v1260 = vadd.f32 0.0, %v1259
      %1261 = vmatmul.f32.gmra.mxu0 %v1231
      %v1262 = vpop.f32.mrf.mxu0
      %v1263 = vadd.f32 0.0, %v1262
      %1264 = vmatmul.f32.gmra.mxu0 %v1234
      %v1265 = vpop.f32.mrf.mxu0
      %v1266 = vadd.f32 0.0, %v1265
      %1267 = vdwg.mxu0
      %v1269 = vsel %vm877, %v1210, 0
      %v1272 = vsel %vm877, %v1211, 0
      %v1275 = vsel %vm877, %v1212, 0
      %v1278 = vsel %vm877, %v1213, 0
      %v1281 = vsel %vm877, %v1214, 0
      %1283 = vmatpush.msra.mxu0 0.0
      %1284 = vmatpush.msra.mxu0 0.0
      %1285 = vmatpush.msra.mxu0 0.0
      %1286 = vmatpush.msra.mxu0 0.0
      %1287 = vmatpush.msra.mxu0 0.0
      %1288 = vmatpush.msra.mxu0 0.0
      %1289 = vmatpush.msra.mxu0 0.0
      %1290 = vmatpush.msra.mxu0 0.0
      %1291 = vmatpush.msra.mxu0 0.0
      %1292 = vmatpush.msra.mxu0 0.0
      %1293 = vmatpush.msra.mxu0 0.0
      %1294 = vmatpush.msra.mxu0 %v845
      %1295 = vmatpush.msra.mxu0 %v844
      %1296 = vmatpush.msra.mxu0 %v843
      %1297 = vmatpush.msra.mxu0 %v842
      %1298 = vmatpush.msra.mxu0 %v841
      %1299 = vmatmul.f32.gmra.mxu0 %v1269
      %v1300 = vpop.f32.mrf.mxu0
      %v1301 = vadd.f32 %v1254, %v1300
      %1302 = vmatmul.f32.gmra.mxu0 %v1272
      %v1303 = vpop.f32.mrf.mxu0
      %v1304 = vadd.f32 %v1257, %v1303
      %1305 = vmatmul.f32.gmra.mxu0 %v1275
      %v1306 = vpop.f32.mrf.mxu0
      %v1307 = vadd.f32 %v1260, %v1306
      %1308 = vmatmul.f32.gmra.mxu0 %v1278
      %v1309 = vpop.f32.mrf.mxu0
      %v1310 = vadd.f32 %v1263, %v1309
      %1311 = vmatmul.f32.gmra.mxu0 %v1281
      %v1312 = vpop.f32.mrf.mxu0
      %v1313 = vadd.f32 %v1266, %v1312
      %1314 = vdwg.mxu0
      %s1315 = scalar_lea.vmem %s4, 320
      %v1316 = vld [vmem:[%s1315] sm:$0xff]
      %v1317 = vld [vmem:[%s1315 + $0x8] sm:$0xff]
      %v1318 = vld [vmem:[%s1315 + $0x10] sm:$0xff]
      %v1319 = vld [vmem:[%s1315 + $0x18] sm:$0xff]
      %v1320 = vld [vmem:[%s1315 + $0x20] sm:$0xff]
      %v1322 = vsel %vm877, %v1316, 0
      %v1325 = vsel %vm877, %v1317, 0
      %v1328 = vsel %vm877, %v1318, 0
      %v1331 = vsel %vm877, %v1319, 0
      %v1334 = vsel %vm877, %v1320, 0
      %1336 = vmatpush.msra.mxu0 0.0
      %1337 = vmatpush.msra.mxu0 0.0
      %1338 = vmatpush.msra.mxu0 0.0
      %1339 = vmatpush.msra.mxu0 0.0
      %1340 = vmatpush.msra.mxu0 0.0
      %1341 = vmatpush.msra.mxu0 0.0
      %1342 = vmatpush.msra.mxu0 0.0
      %1343 = vmatpush.msra.mxu0 0.0
      %1344 = vmatpush.msra.mxu0 0.0
      %1345 = vmatpush.msra.mxu0 0.0
      %1346 = vmatpush.msra.mxu0 0.0
      %1347 = vmatpush.msra.mxu0 %v987
      %1348 = vmatpush.msra.mxu0 %v985
      %1349 = vmatpush.msra.mxu0 %v983
      %1350 = vmatpush.msra.mxu0 %v981
      %1351 = vmatpush.msra.mxu0 %v979
      %1352 = vmatmul.f32.gmra.mxu0 %v1322
      %v1353 = vpop.f32.mrf.mxu0
      %v1354 = vadd.f32 0.0, %v1353
      %1355 = vmatmul.f32.gmra.mxu0 %v1325
      %v1356 = vpop.f32.mrf.mxu0
      %v1357 = vadd.f32 0.0, %v1356
      %1358 = vmatmul.f32.gmra.mxu0 %v1328
      %v1359 = vpop.f32.mrf.mxu0
      %v1360 = vadd.f32 0.0, %v1359
      %1361 = vmatmul.f32.gmra.mxu0 %v1331
      %v1362 = vpop.f32.mrf.mxu0
      %v1363 = vadd.f32 0.0, %v1362
      %1364 = vmatmul.f32.gmra.mxu0 %v1334
      %v1365 = vpop.f32.mrf.mxu0
      %v1366 = vadd.f32 0.0, %v1365
      %1367 = vdwg.mxu0
      %v1368 = vadd.f32 %v1301, %v1354
      %v1369 = vadd.f32 %v1304, %v1357
      %v1370 = vadd.f32 %v1307, %v1360
      %v1371 = vadd.f32 %v1310, %v1363
      %v1372 = vadd.f32 %v1313, %v1366
      %v1373 = vmax.f32 %v1040, %v1204
      %v1374 = vmax.f32 %v1041, %v1205
      %v1375 = vmax.f32 %v1042, %v1206
      %v1376 = vmax.f32 %v1043, %v1207
      %v1377 = vmax.f32 %v1044, %v1208
      %v1378 = vmax.f32 %v1373, %v1368
      %v1379 = vmax.f32 %v1374, %v1369
      %v1380 = vmax.f32 %v1375, %v1370
      %v1381 = vmax.f32 %v1376, %v1371
      %v1382 = vmax.f32 %v1377, %v1372
      %v1383 = vld [vmem:[%s5] sm:$0xff]
      %v1384 = vld [vmem:[%s5 + $0x8] sm:$0xff]
      %v1385 = vld [vmem:[%s5 + $0x10] sm:$0xff]
      %v1386 = vld [vmem:[%s5 + $0x18] sm:$0xff]
      %v1387 = vld [vmem:[%s6] sm:$0x1]
      %v1389 = vperm.slane %v1387, 0
      %vm1391 = vcmask 261120
      %v1393 = vsel %vm1391, %v1378, 0
      %v1396 = vsel %vm1391, %v1379, 0
      %v1399 = vsel %vm1391, %v1380, 0
      %v1402 = vsel %vm1391, %v1381, 0
      %v1405 = vsel %vm1391, %v1382, 0
      %1407 = vmatpush.msra.mxu0 0.0
      %1408 = vmatpush.msra.mxu0 0.0
      %1409 = vmatpush.msra.mxu0 0.0
      %1410 = vmatpush.msra.mxu0 0.0
      %1411 = vmatpush.msra.mxu0 0.0
      %1412 = vmatpush.msra.mxu0 0.0
      %1413 = vmatpush.msra.mxu0 0.0
      %1414 = vmatpush.msra.mxu0 0.0
      %1415 = vmatpush.msra.mxu0 0.0
      %1416 = vmatpush.msra.mxu0 0.0
      %1417 = vmatpush.msra.mxu0 0.0
      %1418 = vmatpush.msra.mxu0 0.0
      %1419 = vmatpush.msra.mxu0 %v1386
      %1420 = vmatpush.msra.mxu0 %v1385
      %1421 = vmatpush.msra.mxu0 %v1384
      %1422 = vmatpush.msra.mxu0 %v1383
      %1423 = vmatmul.f32.gmra.mxu0 %v1393
      %v1424 = vpop.f32.mrf.mxu0
      %v1425 = vadd.f32 %v1389, %v1424
      %1426 = vmatmul.f32.gmra.mxu0 %v1396
      %v1427 = vpop.f32.mrf.mxu0
      %v1428 = vadd.f32 %v1389, %v1427
      %1429 = vmatmul.f32.gmra.mxu0 %v1399
      %v1430 = vpop.f32.mrf.mxu0
      %v1431 = vadd.f32 %v1389, %v1430
      %1432 = vmatmul.f32.gmra.mxu0 %v1402
      %v1433 = vpop.f32.mrf.mxu0
      %v1434 = vadd.f32 %v1389, %v1433
      %1435 = vmatmul.f32.gmra.mxu0 %v1405
      %v1436 = vpop.f32.mrf.mxu0
      %v1437 = vadd.f32 %v1389, %v1436
      %1438 = vdwg.mxu0
      %v1439 = vld [vmem:[%s7] sm:$0xff]
      %v1440 = vld [vmem:[%s7 + $0x8] sm:$0xff]
      %v1441 = vld [vmem:[%s7 + $0x10] sm:$0xff]
      %v1442 = vld [vmem:[%s7 + $0x18] sm:$0xff]
      %v1443 = vld [vmem:[%s7 + $0x20] sm:$0xff]
      %v1444 = vadd.f32 %v1425, %v1439
      %v1445 = vadd.f32 %v1428, %v1440
      %v1446 = vadd.f32 %v1431, %v1441
      %v1447 = vadd.f32 %v1434, %v1442
      %v1448 = vadd.f32 %v1437, %v1443
      %vm1449 = vcmask 523264
      %1450 = vst.msk [vmem:[%s305] sm:$0xff] %vm1449, %v1444
      %1451 = vst.msk [vmem:[%s305 + $0x8] sm:$0xff] %vm1449, %v1445
      %1452 = vst.msk [vmem:[%s305 + $0x10] sm:$0xff] %vm1449, %v1446
      %1453 = vst.msk [vmem:[%s305 + $0x18] sm:$0xff] %vm1449, %v1447
      %1454 = vst.msk [vmem:[%s305 + $0x20] sm:$0xff] %vm1449, %v1448
      %p1455 = scmp.lt.s32.totalorder %s19, 1
      %s1456 = scalar_select %p1455, %s19, 1
      %s1457 = smul.addr %s1456, 5
      %s1458 = smul.addr %s1457, 8
      %s1459 = scalar_lea.vmem %s8, %s1458
      // Predicated region
      $region53: #{trancnn_forward.4} parent=51 // pred_check
        %p1460 = pneg %p210
      $region54: #{trancnn_forward.4} parent=51 // pred_check_branch
        %1462 = sbr.rel (%p1460) target = $region56
      $region55: #{trancnn_forward.4} parent=51 // pred_region
        _
      $region56: #{trancnn_forward.4} parent=51 // pred_fallthru
        _
    $region52: #{trancnn_forward.4} parent=5 // pred_fallthru
      _
    %p1463 = scmp.le.s32.totalorder 2, %s14
    // Predicated region
    $region57: #{trancnn_forward.4} parent=5 // pred_check
      %p1464 = pneg %p1463
    $region58: #{trancnn_forward.4} parent=5 // pred_check_branch
      %1466 = sbr.rel (%p1464) target = $region60
    $region59: #{trancnn_forward.4} parent=5 // pred_region
      %s1467 = ssub.s32 %s14, 2
      // Predicated region
      $region61: #{trancnn_forward.4} parent=59 // pred_check
        %p1468 = pneg %p216
      $region62: #{trancnn_forward.4} parent=59 // pred_check_branch
        %1470 = sbr.rel (%p1468) target = $region64
      $region63: #{trancnn_forward.4} parent=59 // pred_region
        %p1471 = scmp.lt.s32.totalorder %s20, 1
        %s1472 = scalar_select %p1471, %s20, 1
        %s1473 = smul.addr %s1472, 5
        %s1474 = smul.addr %s1473, 8
        %s1475 = scalar_lea.vmem %s8, %s1474
      $region64: #{trancnn_forward.4} parent=59 // pred_fallthru
        _
    $region60: #{trancnn_forward.4} parent=5 // pred_fallthru
      _
  $region6: #{trancnn_forward.4} parent=0 // loop_footer
    %s18 = sadd.s32 1, %s14
  $region7: #{trancnn_forward.4} parent=0 // loop_footer_branch
    %13 = sbr.rel target = $region3
  $region8: #{trancnn_forward.4} parent=0 // loop_exit
    _

// kernel: trancnn_forward.7
$region0: #{trancnn_forward.7}
  #allocation0 [shape = 'u32[]', space=smem, size = 0x4, offset = 0x4, fixed_abs, tag = 'smem constant byte address 0x4 - core index']
  #allocation1 [shape = 'u32[72,128]{1,0:T(1,128)}', space=vmem, size = 0x9000, scoped, tag = 'internal scratch']
  #allocation2 [shape = 'f32[44,32]{1,0:T(8,128)}', space=vmem, size = 0x6000, scoped, tag = 'scratch operand']
  %s0 = inlined_call_operand.vmem [shape: f32[2,40,64], index: 0, kind: input, shape index: {}]
  %s1 = inlined_call_operand.vmem [shape: f32[64,32], index: 1, kind: input, shape index: {}]
  %s2 = inlined_call_operand.vmem [shape: f32[1,32], index: 2, kind: input, shape index: {}]
  %s3 = inlined_call_operand.vmem [shape: f32[3,3,32,32], index: 3, kind: input, shape index: {}]
  %s4 = inlined_call_operand.vmem [shape: f32[3,1,32], index: 4, kind: input, shape index: {}]
  %s5 = inlined_call_operand.vmem [shape: f32[5,8,42], index: 5, kind: input, shape index: {}]
  %s6 = inlined_call_operand.vmem [shape: f32[5,2,10], index: 6, kind: input, shape index: {}]
  %s7 = inlined_call_operand.vmem [shape: f32[2,1,2], index: 7, kind: input, shape index: {}]
  %s8 = inlined_call_operand.vmem [shape: f32[32,14], index: 8, kind: input, shape index: {}]
  %s9 = inlined_call_operand.vmem [shape: f32[1,14], index: 9, kind: input, shape index: {}]
  %s10 = inlined_call_operand.hbm [shape: f32[2,1,14], index: 10, kind: output, shape index: {}]
  %s11 = sld [smem:[#allocation0]]
  $region73: #{trancnn_forward.7} parent=0
    _
  %s13 = ssub.s32 1, %s11
  %s14 = scalar_select 0, %s13, %s11
  $region1: #{trancnn_forward.7} parent=0
    #allocation3 [shape = 'u8[1024]{0}', space=vmem, size = 0x400, scoped, tag = 'output window, operand 0']
    #allocation4 [shape = 's32[2]{0}', space=sflag, size = 0x8, scoped, tag = 'scoped memory for trancnn_forward.7']
    %15 = vsyncpa [#allocation4], 0
    %s16 = scalar_lea.sflag [#allocation4], 1
    %17 = vsyncpa %s16, 0
    loop: start=0, step=1, limit=4
    $region2: #{trancnn_forward.7} parent=1 // loop_pre_header
      _
    $region3: #{trancnn_forward.7} parent=1 // loop_header
      %s19 = sphi 0, %s23
      %p20 = scmp.ge.s32.totalorder %s19, 4
      %s29 = sphi 0, %s31
      %s32 = sphi 0, %s29
      %s33 = sphi 0, %s32
      %s49 = sphi 0, %s33
      %s53 = sphi 0, %s53
      %s55 = sphi 0, %s53
      %s56 = sphi 0, %s55
      %s70 = sphi 0, %s56
      %s74 = sphi 0, %s74
      %s76 = sphi 0, %s74
      %s77 = sphi 0, %s76
      %s91 = sphi 0, %s77
      %s95 = sphi 0, %s95
      %s97 = sphi 0, %s95
      %s98 = sphi 0, %s97
      %s112 = sphi 0, %s98
      %s116 = sphi 0, %s116
      %s118 = sphi 0, %s116
      %s119 = sphi 0, %s118
      %s133 = sphi 0, %s119
      %s137 = sphi 0, %s137
      %s139 = sphi 0, %s137
      %s140 = sphi 0, %s139
      %s154 = sphi 0, %s140
      %s158 = sphi 0, %s158
      %s160 = sphi 0, %s158
      %s161 = sphi 0, %s160
      %s175 = sphi 0, %s161
      %s179 = sphi 0, %s179
      %s181 = sphi 0, %s179
      %s182 = sphi 0, %s181
      %s196 = sphi 0, %s182
      %s200 = sphi 0, %s200
      %s202 = sphi 0, %s200
      %s203 = sphi 0, %s202
      %s217 = sphi 0, %s203
      %s221 = sphi 0, %s221
      %s223 = sphi 0, %s221
      %s224 = sphi 0, %s223
      %s238 = sphi 0, %s224
      %s244 = sphi 0, %s246
      %s247 = sphi 0, %s244
      %s248 = sphi 0, %s247
      %s264 = sphi 0, %s248
    $region4: #{trancnn_forward.7} parent=1 // loop_header_branch
      %22 = sbr.rel (%p20) target = $region8
    $region5: #{trancnn_forward.7} parent=1 // loop_body
      %s24 = ssub.s32 %s19, 1
      %s25 = ssub.s32 %s19, 2
      %s26 = sadd.s32 %s19, 1
      %s27 = ssub.s32 %s19, %s26
      %p28 = scmp.eq.s32.totalorder %s27, 0
      %s30 = sadd.s32 %s29, 1
      %s31 = scalar_select %p28, %s29, %s30
      %p34 = pneg %p28
      %p35 = scmp.eq.s32.totalorder %s19, 1
      %p36 = por %p34, %p35
      %p37 = scmp.ne.s32.totalorder %s29, %s32
      %p38 = scmp.eq.s32.totalorder %s19, 0
      %p39 = por %p37, %p38
      %p40 = scmp.ne.s32.totalorder %s29, %s32
      %p41 = scmp.eq.s32.totalorder %s24, 1
      %p42 = por %p40, %p41
      %p43 = scmp.ne.s32.totalorder %s32, %s33
      %p44 = scmp.eq.s32.totalorder %s24, 0
      %p45 = por %p43, %p44
      %p46 = scmp.ne.s32.totalorder %s32, %s33
      %p47 = scmp.eq.s32.totalorder %s25, 1
      %p48 = por %p46, %p47
      %p50 = scmp.ne.s32.totalorder %s33, %s49
      %p51 = scmp.eq.s32.totalorder %s25, 0
      %p52 = por %p50, %p51
      %s54 = sadd.s32 %s53, 1
      %p57 = scmp.eq.s32.totalorder %s19, 1
      %p58 = scmp.ne.s32.totalorder %s53, %s55
      %p59 = scmp.eq.s32.totalorder %s19, 0
      %p60 = por %p58, %p59
      %p61 = scmp.ne.s32.totalorder %s53, %s55
      %p62 = scmp.eq.s32.totalorder %s24, 1
      %p63 = por %p61, %p62
      %p64 = scmp.ne.s32.totalorder %s55, %s56
      %p65 = scmp.eq.s32.totalorder %s24, 0
      %p66 = por %p64, %p65
      %p67 = scmp.ne.s32.totalorder %s55, %s56
      %p68 = scmp.eq.s32.totalorder %s25, 1
      %p69 = por %p67, %p68
      %p71 = scmp.ne.s32.totalorder %s56, %s70
      %p72 = scmp.eq.s32.totalorder %s25, 0
      %p73 = por %p71, %p72
      %s75 = sadd.s32 %s74, 1
      %p78 = scmp.eq.s32.totalorder %s19, 1
      %p79 = scmp.ne.s32.totalorder %s74, %s76
      %p80 = scmp.eq.s32.totalorder %s19, 0
      %p81 = por %p79, %p80
      %p82 = scmp.ne.s32.totalorder %s74, %s76
      %p83 = scmp.eq.s32.totalorder %s24, 1
      %p84 = por %p82, %p83
      %p85 = scmp.ne.s32.totalorder %s76, %s77
      %p86 = scmp.eq.s32.totalorder %s24, 0
      %p87 = por %p85, %p86
      %p88 = scmp.ne.s32.totalorder %s76, %s77
      %p89 = scmp.eq.s32.totalorder %s25, 1
      %p90 = por %p88, %p89
      %p92 = scmp.ne.s32.totalorder %s77, %s91
      %p93 = scmp.eq.s32.totalorder %s25, 0
      %p94 = por %p92, %p93
      %s96 = sadd.s32 %s95, 1
      %p99 = scmp.eq.s32.totalorder %s19, 1
      %p100 = scmp.ne.s32.totalorder %s95, %s97
      %p101 = scmp.eq.s32.totalorder %s19, 0
      %p102 = por %p100, %p101
      %p103 = scmp.ne.s32.totalorder %s95, %s97
      %p104 = scmp.eq.s32.totalorder %s24, 1
      %p105 = por %p103, %p104
      %p106 = scmp.ne.s32.totalorder %s97, %s98
      %p107 = scmp.eq.s32.totalorder %s24, 0
      %p108 = por %p106, %p107
      %p109 = scmp.ne.s32.totalorder %s97, %s98
      %p110 = scmp.eq.s32.totalorder %s25, 1
      %p111 = por %p109, %p110
      %p113 = scmp.ne.s32.totalorder %s98, %s112
      %p114 = scmp.eq.s32.totalorder %s25, 0
      %p115 = por %p113, %p114
      %s117 = sadd.s32 %s116, 1
      %p120 = scmp.eq.s32.totalorder %s19, 1
      %p121 = scmp.ne.s32.totalorder %s116, %s118
      %p122 = scmp.eq.s32.totalorder %s19, 0
      %p123 = por %p121, %p122
      %p124 = scmp.ne.s32.totalorder %s116, %s118
      %p125 = scmp.eq.s32.totalorder %s24, 1
      %p126 = por %p124, %p125
      %p127 = scmp.ne.s32.totalorder %s118, %s119
      %p128 = scmp.eq.s32.totalorder %s24, 0
      %p129 = por %p127, %p128
      %p130 = scmp.ne.s32.totalorder %s118, %s119
      %p131 = scmp.eq.s32.totalorder %s25, 1
      %p132 = por %p130, %p131
      %p134 = scmp.ne.s32.totalorder %s119, %s133
      %p135 = scmp.eq.s32.totalorder %s25, 0
      %p136 = por %p134, %p135
      %s138 = sadd.s32 %s137, 1
      %p141 = scmp.eq.s32.totalorder %s19, 1
      %p142 = scmp.ne.s32.totalorder %s137, %s139
      %p143 = scmp.eq.s32.totalorder %s19, 0
      %p144 = por %p142, %p143
      %p145 = scmp.ne.s32.totalorder %s137, %s139
      %p146 = scmp.eq.s32.totalorder %s24, 1
      %p147 = por %p145, %p146
      %p148 = scmp.ne.s32.totalorder %s139, %s140
      %p149 = scmp.eq.s32.totalorder %s24, 0
      %p150 = por %p148, %p149
      %p151 = scmp.ne.s32.totalorder %s139, %s140
      %p152 = scmp.eq.s32.totalorder %s25, 1
      %p153 = por %p151, %p152
      %p155 = scmp.ne.s32.totalorder %s140, %s154
      %p156 = scmp.eq.s32.totalorder %s25, 0
      %p157 = por %p155, %p156
      %s159 = sadd.s32 %s158, 1
      %p162 = scmp.eq.s32.totalorder %s19, 1
      %p163 = scmp.ne.s32.totalorder %s158, %s160
      %p164 = scmp.eq.s32.totalorder %s19, 0
      %p165 = por %p163, %p164
      %p166 = scmp.ne.s32.totalorder %s158, %s160
      %p167 = scmp.eq.s32.totalorder %s24, 1
      %p168 = por %p166, %p167
      %p169 = scmp.ne.s32.totalorder %s160, %s161
      %p170 = scmp.eq.s32.totalorder %s24, 0
      %p171 = por %p169, %p170
      %p172 = scmp.ne.s32.totalorder %s160, %s161
      %p173 = scmp.eq.s32.totalorder %s25, 1
      %p174 = por %p172, %p173
      %p176 = scmp.ne.s32.totalorder %s161, %s175
      %p177 = scmp.eq.s32.totalorder %s25, 0
      %p178 = por %p176, %p177
      %s180 = sadd.s32 %s179, 1
      %p183 = scmp.eq.s32.totalorder %s19, 1
      %p184 = scmp.ne.s32.totalorder %s179, %s181
      %p185 = scmp.eq.s32.totalorder %s19, 0
      %p186 = por %p184, %p185
      %p187 = scmp.ne.s32.totalorder %s179, %s181
      %p188 = scmp.eq.s32.totalorder %s24, 1
      %p189 = por %p187, %p188
      %p190 = scmp.ne.s32.totalorder %s181, %s182
      %p191 = scmp.eq.s32.totalorder %s24, 0
      %p192 = por %p190, %p191
      %p193 = scmp.ne.s32.totalorder %s181, %s182
      %p194 = scmp.eq.s32.totalorder %s25, 1
      %p195 = por %p193, %p194
      %p197 = scmp.ne.s32.totalorder %s182, %s196
      %p198 = scmp.eq.s32.totalorder %s25, 0
      %p199 = por %p197, %p198
      %s201 = sadd.s32 %s200, 1
      %p204 = scmp.eq.s32.totalorder %s19, 1
      %p205 = scmp.ne.s32.totalorder %s200, %s202
      %p206 = scmp.eq.s32.totalorder %s19, 0
      %p207 = por %p205, %p206
      %p208 = scmp.ne.s32.totalorder %s200, %s202
      %p209 = scmp.eq.s32.totalorder %s24, 1
      %p210 = por %p208, %p209
      %p211 = scmp.ne.s32.totalorder %s202, %s203
      %p212 = scmp.eq.s32.totalorder %s24, 0
      %p213 = por %p211, %p212
      %p214 = scmp.ne.s32.totalorder %s202, %s203
      %p215 = scmp.eq.s32.totalorder %s25, 1
      %p216 = por %p214, %p215
      %p218 = scmp.ne.s32.totalorder %s203, %s217
      %p219 = scmp.eq.s32.totalorder %s25, 0
      %p220 = por %p218, %p219
      %s222 = sadd.s32 %s221, 1
      %p225 = scmp.eq.s32.totalorder %s19, 1
      %p226 = scmp.ne.s32.totalorder %s221, %s223
      %p227 = scmp.eq.s32.totalorder %s19, 0
      %p228 = por %p226, %p227
      %p229 = scmp.ne.s32.totalorder %s221, %s223
      %p230 = scmp.eq.s32.totalorder %s24, 1
      %p231 = por %p229, %p230
      %p232 = scmp.ne.s32.totalorder %s223, %s224
      %p233 = scmp.eq.s32.totalorder %s24, 0
      %p234 = por %p232, %p233
      %p235 = scmp.ne.s32.totalorder %s223, %s224
      %p236 = scmp.eq.s32.totalorder %s25, 1
      %p237 = por %p235, %p236
      %p239 = scmp.ne.s32.totalorder %s224, %s238
      %p240 = scmp.eq.s32.totalorder %s25, 0
      %p241 = por %p239, %p240
      %s242 = ssub.s32 %s19, %s26
      %p243 = scmp.eq.s32.totalorder %s242, 0
      %s245 = sadd.s32 %s244, 1
      %s246 = scalar_select %p243, %s244, %s245
      %p249 = pneg %p243
      %p250 = scmp.eq.s32.totalorder %s19, 1
      %p251 = por %p249, %p250
      %p252 = scmp.ne.s32.totalorder %s244, %s247
      %p253 = scmp.eq.s32.totalorder %s19, 0
      %p254 = por %p252, %p253
      %p255 = scmp.ne.s32.totalorder %s244, %s247
      %p256 = scmp.eq.s32.totalorder %s24, 1
      %p257 = por %p255, %p256
      %p258 = scmp.ne.s32.totalorder %s247, %s248
      %p259 = scmp.eq.s32.totalorder %s24, 0
      %p260 = por %p258, %p259
      %p261 = scmp.ne.s32.totalorder %s247, %s248
      %p262 = scmp.eq.s32.totalorder %s25, 1
      %p263 = por %p261, %p262
      %p265 = scmp.ne.s32.totalorder %s248, %s264
      %p266 = scmp.eq.s32.totalorder %s25, 0
      %p267 = por %p265, %p266
      %p268 = scmp.le.s32.totalorder 1, %s19
      %p269 = scmp.lt.s32.totalorder %s19, 3
      %p270 = pnand %p268, %p269
      %p271 = pneg %p270
      // Predicated region
      $region9: #{trancnn_forward.7} parent=5 // pred_check
        _
      $region10: #{trancnn_forward.7} parent=5 // pred_check_branch
        %273 = sbr.rel (%p270) target = $region12
      $region11: #{trancnn_forward.7} parent=5 // pred_region
        %s274 = ssub.s32 %s19, 1
        // Predicated region
        $region13: #{trancnn_forward.7} parent=11 // pred_check
          %p275 = pneg %p66
        $region14: #{trancnn_forward.7} parent=11 // pred_check_branch
          %277 = sbr.rel (%p275) target = $region16
        $region15: #{trancnn_forward.7} parent=11 // pred_region
          _
        $region16: #{trancnn_forward.7} parent=11 // pred_fallthru
          _
        // Predicated region
        $region17: #{trancnn_forward.7} parent=11 // pred_check
          %p278 = pneg %p87
        $region18: #{trancnn_forward.7} parent=11 // pred_check_branch
          %280 = sbr.rel (%p278) target = $region20
        $region19: #{trancnn_forward.7} parent=11 // pred_region
          _
        $region20: #{trancnn_forward.7} parent=11 // pred_fallthru
          _
        // Predicated region
        $region21: #{trancnn_forward.7} parent=11 // pred_check
          %p281 = pneg %p108
        $region22: #{trancnn_forward.7} parent=11 // pred_check_branch
          %283 = sbr.rel (%p281) target = $region24
        $region23: #{trancnn_forward.7} parent=11 // pred_region
          _
        $region24: #{trancnn_forward.7} parent=11 // pred_fallthru
          _
        // Predicated region
        $region25: #{trancnn_forward.7} parent=11 // pred_check
          %p284 = pneg %p129
        $region26: #{trancnn_forward.7} parent=11 // pred_check_branch
          %286 = sbr.rel (%p284) target = $region28
        $region27: #{trancnn_forward.7} parent=11 // pred_region
          _
        $region28: #{trancnn_forward.7} parent=11 // pred_fallthru
          _
        // Predicated region
        $region29: #{trancnn_forward.7} parent=11 // pred_check
          %p287 = pneg %p150
        $region30: #{trancnn_forward.7} parent=11 // pred_check_branch
          %289 = sbr.rel (%p287) target = $region32
        $region31: #{trancnn_forward.7} parent=11 // pred_region
          _
        $region32: #{trancnn_forward.7} parent=11 // pred_fallthru
          _
        // Predicated region
        $region33: #{trancnn_forward.7} parent=11 // pred_check
          %p290 = pneg %p171
        $region34: #{trancnn_forward.7} parent=11 // pred_check_branch
          %292 = sbr.rel (%p290) target = $region36
        $region35: #{trancnn_forward.7} parent=11 // pred_region
          _
        $region36: #{trancnn_forward.7} parent=11 // pred_fallthru
          _
        // Predicated region
        $region37: #{trancnn_forward.7} parent=11 // pred_check
          %p293 = pneg %p192
        $region38: #{trancnn_forward.7} parent=11 // pred_check_branch
          %295 = sbr.rel (%p293) target = $region40
        $region39: #{trancnn_forward.7} parent=11 // pred_region
          _
        $region40: #{trancnn_forward.7} parent=11 // pred_fallthru
          _
        // Predicated region
        $region41: #{trancnn_forward.7} parent=11 // pred_check
          %p296 = pneg %p213
        $region42: #{trancnn_forward.7} parent=11 // pred_check_branch
          %298 = sbr.rel (%p296) target = $region44
        $region43: #{trancnn_forward.7} parent=11 // pred_region
          _
        $region44: #{trancnn_forward.7} parent=11 // pred_fallthru
          _
        // Predicated region
        $region45: #{trancnn_forward.7} parent=11 // pred_check
          %p299 = pneg %p234
        $region46: #{trancnn_forward.7} parent=11 // pred_check_branch
          %301 = sbr.rel (%p299) target = $region48
        $region47: #{trancnn_forward.7} parent=11 // pred_region
          _
        $region48: #{trancnn_forward.7} parent=11 // pred_fallthru
          _
      $region12: #{trancnn_forward.7} parent=5 // pred_fallthru
        _
      %p302 = scmp.lt.s32.totalorder %s19, 2
      // Predicated region
      $region49: #{trancnn_forward.7} parent=5 // pred_check
        %p303 = pneg %p302
      $region50: #{trancnn_forward.7} parent=5 // pred_check_branch
        %305 = sbr.rel (%p303) target = $region52
      $region51: #{trancnn_forward.7} parent=5 // pred_region
        // Predicated region
        $region53: #{trancnn_forward.7} parent=51 // pred_check
          %p306 = pneg %p39
        $region54: #{trancnn_forward.7} parent=51 // pred_check_branch
          %308 = sbr.rel (%p306) target = $region56
        $region55: #{trancnn_forward.7} parent=51 // pred_region
          %p309 = scmp.lt.s32.totalorder %s19, 1
          %s310 = scalar_select %p309, %s19, 1
          %s311 = smul.addr %s310, 5
          %s312 = smul.addr %s311, 8
          %s313 = scalar_lea.vmem %s0, %s312
        $region56: #{trancnn_forward.7} parent=51 // pred_fallthru
          _
      $region52: #{trancnn_forward.7} parent=5 // pred_fallthru
        _
      %p314 = scmp.le.s32.totalorder 1, %s19
      %p315 = scmp.lt.s32.totalorder %s19, 3
      %p316 = pnand %p314, %p315
      %p317 = pneg %p316
      // Predicated region
      $region57: #{trancnn_forward.7} parent=5 // pred_check
        _
      $region58: #{trancnn_forward.7} parent=5 // pred_check_branch
        %319 = sbr.rel (%p316) target = $region60
      $region59: #{trancnn_forward.7} parent=5 // pred_region
        %s320 = ssub.s32 %s19, 1
        %p321 = scmp.lt.s32.totalorder %s24, 1
        %s322 = scalar_select %p321, %s24, 1
        %s323 = smul.addr %s322, 5
        %s324 = smul.addr %s323, 8
        %s325 = scalar_lea.vmem %s0, %s324
        %p326 = pneg %p45
        %p327 = pneg %p42
        %p328 = pneg %p66
        %p329 = pneg %p63
        %p330 = pneg %p87
        %p331 = pneg %p84
        %p332 = pneg %p108
        %p333 = pneg %p105
        %p334 = pneg %p129
        %p335 = pneg %p126
        %p336 = pneg %p150
        %p337 = pneg %p147
        %p338 = pneg %p171
        %p339 = pneg %p168
        %p340 = pneg %p192
        %p341 = pneg %p189
        %p342 = pneg %p213
        %p343 = pneg %p210
        %p344 = pneg %p234
        %p345 = pneg %p231
        %p346 = pneg %p260
        %p347 = pneg %p257
        %s348 = sand.u32 %s247, 1
        %s349 = scalar_lea.sflag [#allocation4], %s348
        %s350 = sand.u32 %s247, 1
        %s351 = scalar_lea.vmem [#allocation3], %s350
        %p352 = scmp.lt.s32.totalorder %s24, 1
        %s353 = scalar_select %p352, %s24, 1
        %s354 = smul.addr %s353, 5
        %s355 = smul.addr %s354, 8
        %s356 = scalar_lea.vmem %s0, %s355
        %v357 = vld [vmem:[%s356] sm:$0xff]
        %v358 = vld [vmem:[%s356 + $0x8] sm:$0xff]
        %v359 = vld [vmem:[%s356 + $0x10] sm:$0xff]
        %v360 = vld [vmem:[%s356 + $0x18] sm:$0xff]
        %v361 = vld [vmem:[%s356 + $0x20] sm:$0xff]
        %v362 = vld [vmem:[%s1] sm:$0xff]
        %v363 = vld [vmem:[%s1 + $0x8] sm:$0xff]
        %v364 = vld [vmem:[%s1 + $0x10] sm:$0xff]
        %v365 = vld [vmem:[%s1 + $0x18] sm:$0xff]
        %v366 = vld [vmem:[%s1 + $0x20] sm:$0xff]
        %v367 = vld [vmem:[%s1 + $0x28] sm:$0xff]
        %v368 = vld [vmem:[%s1 + $0x30] sm:$0xff]
        %v369 = vld [vmem:[%s1 + $0x38] sm:$0xff]
        %v370 = vld [vmem:[%s2] sm:$0x1]
        %v372 = vperm.slane %v370, 0
        %vm374 = vcmask 523264
        %v376 = vsel %vm374, %v357, 0
        %v379 = vsel %vm374, %v358, 0
        %v382 = vsel %vm374, %v359, 0
        %v385 = vsel %vm374, %v360, 0
        %v388 = vsel %vm374, %v361, 0
        %390 = vmatpush.msra.mxu0 0.0
        %391 = vmatpush.msra.mxu0 0.0
        %392 = vmatpush.msra.mxu0 0.0
        %393 = vmatpush.msra.mxu0 0.0
        %394 = vmatpush.msra.mxu0 0.0
        %395 = vmatpush.msra.mxu0 0.0
        %396 = vmatpush.msra.mxu0 0.0
        %397 = vmatpush.msra.mxu0 0.0
        %398 = vmatpush.msra.mxu0 %v369
        %399 = vmatpush.msra.mxu0 %v368
        %400 = vmatpush.msra.mxu0 %v367
        %401 = vmatpush.msra.mxu0 %v366
        %402 = vmatpush.msra.mxu0 %v365
        %403 = vmatpush.msra.mxu0 %v364
        %404 = vmatpush.msra.mxu0 %v363
        %405 = vmatpush.msra.mxu0 %v362
        %406 = vmatmul.f32.gmra.mxu0 %v376
        %v407 = vpop.f32.mrf.mxu0
        %v408 = vadd.f32 %v372, %v407
        %409 = vmatmul.f32.gmra.mxu0 %v379
        %v410 = vpop.f32.mrf.mxu0
        %v411 = vadd.f32 %v372, %v410
        %412 = vmatmul.f32.gmra.mxu0 %v382
        %v413 = vpop.f32.mrf.mxu0
        %v414 = vadd.f32 %v372, %v413
        %415 = vmatmul.f32.gmra.mxu0 %v385
        %v416 = vpop.f32.mrf.mxu0
        %v417 = vadd.f32 %v372, %v416
        %418 = vmatmul.f32.gmra.mxu0 %v388
        %v419 = vpop.f32.mrf.mxu0
        %v420 = vadd.f32 %v372, %v419
        %421 = vdwg.mxu0
        %vm422 = vcmask 261120
        %423 = vst.msk [vmem:[#allocation2] sm:$0xff] %vm422, 0.0
        %424 = vst.msk [vmem:[#allocation2 + $0x8] sm:$0xff] %vm422, 0.0
        %425 = vst.msk [vmem:[#allocation2 + $0x10] sm:$0xff] %vm422, 0.0
        %426 = vst.msk [vmem:[#allocation2 + $0x18] sm:$0xff] %vm422, 0.0
        %427 = vst.msk [vmem:[#allocation2 + $0x20] sm:$0xff] %vm422, 0.0
        %vm428 = vcmask 257024
        %429 = vst.msk [vmem:[#allocation2 + $0x28] sm:$0xf] %vm428, 0.0
        %430 = vst.msk [vmem:[#allocation2 + $0x2] sm:$0xff] %vm422, %v408
        %431 = vst.msk [vmem:[#allocation2 + $0xa] sm:$0xff] %vm422, %v411
        %432 = vst.msk [vmem:[#allocation2 + $0x12] sm:$0xff] %vm422, %v414
        %433 = vst.msk [vmem:[#allocation2 + $0x1a] sm:$0xff] %vm422, %v417
        %434 = vst.msk [vmem:[#allocation2 + $0x22] sm:$0xff] %vm422, %v420
        %v435 = vld [vmem:[#allocation2] sm:$0xff]
        %v436 = vld [vmem:[#allocation2 + $0x8] sm:$0xff]
        %v437 = vld [vmem:[#allocation2 + $0x10] sm:$0xff]
        %v438 = vld [vmem:[#allocation2 + $0x18] sm:$0xff]
        %v439 = vld [vmem:[#allocation2 + $0x20] sm:$0xff]
        %v440 = vld [vmem:[#allocation2 + $0x28] sm:$0x3]
        %v441 = vld [vmem:[%s3] sm:$0xff]
        %v442 = vld [vmem:[%s3 + $0x8] sm:$0xff]
        %v443 = vld [vmem:[%s3 + $0x10] sm:$0xff]
        %v444 = vld [vmem:[%s3 + $0x18] sm:$0xff]
        %v445 = vld [vmem:[#allocation2 + $0x1] sm:$0xff]
        %v446 = vld [vmem:[#allocation2 + $0x9] sm:$0xff]
        %v447 = vld [vmem:[#allocation2 + $0x11] sm:$0xff]
        %v448 = vld [vmem:[#allocation2 + $0x19] sm:$0xff]
        %v449 = vld [vmem:[#allocation2 + $0x21] sm:$0xff]
        %v450 = vld [vmem:[#allocation2 + $0x29] sm:$0x3]
        %s451 = scalar_lea.vmem %s3, 32
        %v452 = vld [vmem:[%s451] sm:$0xff]
        %v453 = vld [vmem:[%s451 + $0x8] sm:$0xff]
        %v454 = vld [vmem:[%s451 + $0x10] sm:$0xff]
        %v455 = vld [vmem:[%s451 + $0x18] sm:$0xff]
        %v457 = vsel %vm422, %v445, 0
        %v460 = vsel %vm422, %v446, 0
        %v463 = vsel %vm422, %v447, 0
        %v466 = vsel %vm422, %v448, 0
        %v469 = vsel %vm422, %v449, 0
        %v472 = vsel %vm422, %v450, 0
        %474 = vmatpush.msra.mxu0 0.0
        %475 = vmatpush.msra.mxu0 0.0
        %476 = vmatpush.msra.mxu0 0.0
        %477 = vmatpush.msra.mxu0 0.0
        %478 = vmatpush.msra.mxu0 0.0
        %479 = vmatpush.msra.mxu0 0.0
        %480 = vmatpush.msra.mxu0 0.0
        %481 = vmatpush.msra.mxu0 0.0
        %482 = vmatpush.msra.mxu0 0.0
        %483 = vmatpush.msra.mxu0 0.0
        %484 = vmatpush.msra.mxu0 0.0
        %485 = vmatpush.msra.mxu0 0.0
        %486 = vmatpush.msra.mxu0 %v455
        %487 = vmatpush.msra.mxu0 %v454
        %488 = vmatpush.msra.mxu0 %v453
        %489 = vmatpush.msra.mxu0 %v452
        %490 = vmatmul.f32.gmra.mxu0 %v457
        %v491 = vpop.f32.mrf.mxu0
        %v492 = vadd.f32 0.0, %v491
        %493 = vmatmul.f32.gmra.mxu0 %v460
        %v494 = vpop.f32.mrf.mxu0
        %v495 = vadd.f32 0.0, %v494
        %496 = vmatmul.f32.gmra.mxu0 %v463
        %v497 = vpop.f32.mrf.mxu0
        %v498 = vadd.f32 0.0, %v497
        %499 = vmatmul.f32.gmra.mxu0 %v466
        %v500 = vpop.f32.mrf.mxu0
        %v501 = vadd.f32 0.0, %v500
        %502 = vmatmul.f32.gmra.mxu0 %v469
        %v503 = vpop.f32.mrf.mxu0
        %v504 = vadd.f32 0.0, %v503
        %505 = vmatmul.f32.gmra.mxu0 %v472
        %v506 = vpop.f32.mrf.mxu0
        %v507 = vadd.f32 0.0, %v506
        %508 = vdwg.mxu0
        %v510 = vsel %vm422, %v435, 0
        %v513 = vsel %vm422, %v436, 0
        %v516 = vsel %vm422, %v437, 0
        %v519 = vsel %vm422, %v438, 0
        %v522 = vsel %vm422, %v439, 0
        %v525 = vsel %vm422, %v440, 0
        %527 = vmatpush.msra.mxu0 0.0
        %528 = vmatpush.msra.mxu0 0.0
        %529 = vmatpush.msra.mxu0 0.0
        %530 = vmatpush.msra.mxu0 0.0
        %531 = vmatpush.msra.mxu0 0.0
        %532 = vmatpush.msra.mxu0 0.0
        %533 = vmatpush.msra.mxu0 0.0
        %534 = vmatpush.msra.mxu0 0.0
        %535 = vmatpush.msra.mxu0 0.0
        %536 = vmatpush.msra.mxu0 0.0
        %537 = vmatpush.msra.mxu0 0.0
        %538 = vmatpush.msra.mxu0 0.0
        %539 = vmatpush.msra.mxu0 %v444
        %540 = vmatpush.msra.mxu0 %v443
        %541 = vmatpush.msra.mxu0 %v442
        %542 = vmatpush.msra.mxu0 %v441
        %543 = vmatmul.f32.gmra.mxu0 %v510
        %v544 = vpop.f32.mrf.mxu0
        %v545 = vadd.f32 %v492, %v544
        %546 = vmatmul.f32.gmra.mxu0 %v513
        %v547 = vpop.f32.mrf.mxu0
        %v548 = vadd.f32 %v495, %v547
        %549 = vmatmul.f32.gmra.mxu0 %v516
        %v550 = vpop.f32.mrf.mxu0
        %v551 = vadd.f32 %v498, %v550
        %552 = vmatmul.f32.gmra.mxu0 %v519
        %v553 = vpop.f32.mrf.mxu0
        %v554 = vadd.f32 %v501, %v553
        %555 = vmatmul.f32.gmra.mxu0 %v522
        %v556 = vpop.f32.mrf.mxu0
        %v557 = vadd.f32 %v504, %v556
        %558 = vmatmul.f32.gmra.mxu0 %v525
        %v559 = vpop.f32.mrf.mxu0
        %v560 = vadd.f32 %v507, %v559
        %561 = vdwg.mxu0
        %v562 = vld [vmem:[#allocation2 + $0x2] sm:$0xff]
        %v563 = vld [vmem:[#allocation2 + $0xa] sm:$0xff]
        %v564 = vld [vmem:[#allocation2 + $0x12] sm:$0xff]
        %v565 = vld [vmem:[#allocation2 + $0x1a] sm:$0xff]
        %v566 = vld [vmem:[#allocation2 + $0x22] sm:$0xff]
        %v567 = vld [vmem:[#allocation2 + $0x2a] sm:$0x3]
        %s568 = scalar_lea.vmem %s3, 64
        %v569 = vld [vmem:[%s568] sm:$0xff]
        %v570 = vld [vmem:[%s568 + $0x8] sm:$0xff]
        %v571 = vld [vmem:[%s568 + $0x10] sm:$0xff]
        %v572 = vld [vmem:[%s568 + $0x18] sm:$0xff]
        %v574 = vsel %vm422, %v562, 0
        %v577 = vsel %vm422, %v563, 0
        %v580 = vsel %vm422, %v564, 0
        %v583 = vsel %vm422, %v565, 0
        %v586 = vsel %vm422, %v566, 0
        %v589 = vsel %vm422, %v567, 0
        %591 = vmatpush.msra.mxu0 0.0
        %592 = vmatpush.msra.mxu0 0.0
        %593 = vmatpush.msra.mxu0 0.0
        %594 = vmatpush.msra.mxu0 0.0
        %595 = vmatpush.msra.mxu0 0.0
        %596 = vmatpush.msra.mxu0 0.0
        %597 = vmatpush.msra.mxu0 0.0
        %598 = vmatpush.msra.mxu0 0.0
        %599 = vmatpush.msra.mxu0 0.0
        %600 = vmatpush.msra.mxu0 0.0
        %601 = vmatpush.msra.mxu0 0.0
        %602 = vmatpush.msra.mxu0 0.0
        %603 = vmatpush.msra.mxu0 %v572
        %604 = vmatpush.msra.mxu0 %v571
        %605 = vmatpush.msra.mxu0 %v570
        %606 = vmatpush.msra.mxu0 %v569
        %607 = vmatmul.f32.gmra.mxu0 %v574
        %v608 = vpop.f32.mrf.mxu0
        %v609 = vadd.f32 0.0, %v608
        %610 = vmatmul.f32.gmra.mxu0 %v577
        %v611 = vpop.f32.mrf.mxu0
        %v612 = vadd.f32 0.0, %v611
        %613 = vmatmul.f32.gmra.mxu0 %v580
        %v614 = vpop.f32.mrf.mxu0
        %v615 = vadd.f32 0.0, %v614
        %616 = vmatmul.f32.gmra.mxu0 %v583
        %v617 = vpop.f32.mrf.mxu0
        %v618 = vadd.f32 0.0, %v617
        %619 = vmatmul.f32.gmra.mxu0 %v586
        %v620 = vpop.f32.mrf.mxu0
        %v621 = vadd.f32 0.0, %v620
        %622 = vmatmul.f32.gmra.mxu0 %v589
        %v623 = vpop.f32.mrf.mxu0
        %v624 = vadd.f32 0.0, %v623
        %625 = vdwg.mxu0
        %v626 = vadd.f32 %v545, %v609
        %v627 = vadd.f32 %v548, %v612
        %v628 = vadd.f32 %v551, %v615
        %v629 = vadd.f32 %v554, %v618
        %v630 = vadd.f32 %v557, %v621
        %v631 = vadd.f32 %v560, %v624
        %v632 = vld [vmem:[%s4] sm:$0x1]
        %v634 = vperm.slane %v632, 0
        %v636 = vadd.f32 %v626, %v634
        %v637 = vadd.f32 %v627, %v634
        %v638 = vadd.f32 %v628, %v634
        %v639 = vadd.f32 %v629, %v634
        %v640 = vadd.f32 %v630, %v634
        %v641 = vadd.f32 %v631, %v634
        %v642 = vmax.f32 %v636, 0.0
        %v643 = vmax.f32 %v637, 0.0
        %v644 = vmax.f32 %v638, 0.0
        %v645 = vmax.f32 %v639, 0.0
        %v646 = vmax.f32 %v640, 0.0
        %v647 = vmax.f32 %v641, 0.0
        %v648 = vld [vmem:[%s5] sm:$0xff]
        %vm649 = vcmask 343040
        %v651 = vsel %vm649, %v648, 0
        %vm653 = vcmask 1041408
        %v655 = vsel %vm653, %v647, 0
        %657 = vmatpush.msra.mxu0 0.0
        %658 = vmatpush.msra.mxu0 0.0
        %659 = vmatpush.msra.mxu0 0.0
        %660 = vmatpush.msra.mxu0 0.0
        %661 = vmatpush.msra.mxu0 0.0
        %662 = vmatpush.msra.mxu0 0.0
        %663 = vmatpush.msra.mxu0 0.0
        %664 = vmatpush.msra.mxu0 0.0
        %665 = vmatpush.msra.mxu0 0.0
        %666 = vmatpush.msra.mxu0 0.0
        %667 = vmatpush.msra.mxu0 %v655
        %668 = vmatpush.msra.mxu0 %v646
        %669 = vmatpush.msra.mxu0 %v645
        %670 = vmatpush.msra.mxu0 %v644
        %671 = vmatpush.msra.mxu0 %v643
        %672 = vmatpush.msra.mxu0 %v642
        %673 = vmatmul.f32.gmra.mxu0 %v651
        %v674 = vpop.f32.mrf.mxu0
        %v675 = vadd.f32 0.0, %v674
        %676 = vdwg.mxu0
        %s677 = scalar_lea.vmem %s5, 8
        %v678 = vld [vmem:[%s677] sm:$0xff]
        %v680 = vsel %vm649, %v678, 0
        %682 = vmatpush.msra.mxu0 0.0
        %683 = vmatpush.msra.mxu0 0.0
        %684 = vmatpush.msra.mxu0 0.0
        %685 = vmatpush.msra.mxu0 0.0
        %686 = vmatpush.msra.mxu0 0.0
        %687 = vmatpush.msra.mxu0 0.0
        %688 = vmatpush.msra.mxu0 0.0
        %689 = vmatpush.msra.mxu0 0.0
        %690 = vmatpush.msra.mxu0 0.0
        %691 = vmatpush.msra.mxu0 0.0
        %692 = vmatpush.msra.mxu0 %v655
        %693 = vmatpush.msra.mxu0 %v646
        %694 = vmatpush.msra.mxu0 %v645
        %695 = vmatpush.msra.mxu0 %v644
        %696 = vmatpush.msra.mxu0 %v643
        %697 = vmatpush.msra.mxu0 %v642
        %698 = vmatmul.f32.gmra.mxu0 %v680
        %v699 = vpop.f32.mrf.mxu0
        %v700 = vadd.f32 0.0, %v699
        %701 = vdwg.mxu0
        %v702 = vmax.f32 %v675, %v700
        %s703 = scalar_lea.vmem %s5, 16
        %v704 = vld [vmem:[%s703] sm:$0xff]
        %v706 = vsel %vm649, %v704, 0
        %708 = vmatpush.msra.mxu0 0.0
        %709 = vmatpush.msra.mxu0 0.0
        %710 = vmatpush.msra.mxu0 0.0
        %711 = vmatpush.msra.mxu0 0.0
        %712 = vmatpush.msra.mxu0 0.0
        %713 = vmatpush.msra.mxu0 0.0
        %714 = vmatpush.msra.mxu0 0.0
        %715 = vmatpush.msra.mxu0 0.0
        %716 = vmatpush.msra.mxu0 0.0
        %717 = vmatpush.msra.mxu0 0.0
        %718 = vmatpush.msra.mxu0 %v655
        %719 = vmatpush.msra.mxu0 %v646
        %720 = vmatpush.msra.mxu0 %v645
        %721 = vmatpush.msra.mxu0 %v644
        %722 = vmatpush.msra.mxu0 %v643
        %723 = vmatpush.msra.mxu0 %v642
        %724 = vmatmul.f32.gmra.mxu0 %v706
        %v725 = vpop.f32.mrf.mxu0
        %v726 = vadd.f32 0.0, %v725
        %727 = vdwg.mxu0
        %v728 = vmax.f32 %v702, %v726
        %s729 = scalar_lea.vmem %s5, 24
        %v730 = vld [vmem:[%s729] sm:$0xff]
        %v732 = vsel %vm649, %v730, 0
        %734 = vmatpush.msra.mxu0 0.0
        %735 = vmatpush.msra.mxu0 0.0
        %736 = vmatpush.msra.mxu0 0.0
        %737 = vmatpush.msra.mxu0 0.0
        %738 = vmatpush.msra.mxu0 0.0
        %739 = vmatpush.msra.mxu0 0.0
        %740 = vmatpush.msra.mxu0 0.0
        %741 = vmatpush.msra.mxu0 0.0
        %742 = vmatpush.msra.mxu0 0.0
        %743 = vmatpush.msra.mxu0 0.0
        %744 = vmatpush.msra.mxu0 %v655
        %745 = vmatpush.msra.mxu0 %v646
        %746 = vmatpush.msra.mxu0 %v645
        %747 = vmatpush.msra.mxu0 %v644
        %748 = vmatpush.msra.mxu0 %v643
        %749 = vmatpush.msra.mxu0 %v642
        %750 = vmatmul.f32.gmra.mxu0 %v732
        %v751 = vpop.f32.mrf.mxu0
        %v752 = vadd.f32 0.0, %v751
        %753 = vdwg.mxu0
        %v754 = vmax.f32 %v728, %v752
        %s755 = scalar_lea.vmem %s5, 32
        %v756 = vld [vmem:[%s755] sm:$0xff]
        %v758 = vsel %vm649, %v756, 0
        %760 = vmatpush.msra.mxu0 0.0
        %761 = vmatpush.msra.mxu0 0.0
        %762 = vmatpush.msra.mxu0 0.0
        %763 = vmatpush.msra.mxu0 0.0
        %764 = vmatpush.msra.mxu0 0.0
        %765 = vmatpush.msra.mxu0 0.0
        %766 = vmatpush.msra.mxu0 0.0
        %767 = vmatpush.msra.mxu0 0.0
        %768 = vmatpush.msra.mxu0 0.0
        %769 = vmatpush.msra.mxu0 0.0
        %770 = vmatpush.msra.mxu0 %v655
        %771 = vmatpush.msra.mxu0 %v646
        %772 = vmatpush.msra.mxu0 %v645
        %773 = vmatpush.msra.mxu0 %v644
        %774 = vmatpush.msra.mxu0 %v643
        %775 = vmatpush.msra.mxu0 %v642
        %776 = vmatmul.f32.gmra.mxu0 %v758
        %v777 = vpop.f32.mrf.mxu0
        %v778 = vadd.f32 0.0, %v777
        %779 = vdwg.mxu0
        %v780 = vmax.f32 %v754, %v778
        %781 = vst.msk [vmem:[#allocation2] sm:$0xff] %vm422, 0.0
        %782 = vst.msk [vmem:[#allocation2 + $0x8] sm:$0xf] %vm428, 0.0
        %783 = vst.msk [vmem:[#allocation2 + $0x2] sm:$0xff] %vm422, %v780
        %v784 = vld [vmem:[#allocation2] sm:$0xff]
        %v785 = vld [vmem:[#allocation2 + $0x8] sm:$0x3]
        %s786 = scalar_lea.vmem %s3, 96
        %v787 = vld [vmem:[%s786] sm:$0xff]
        %v788 = vld [vmem:[%s786 + $0x8] sm:$0xff]
        %v789 = vld [vmem:[%s786 + $0x10] sm:$0xff]
        %v790 = vld [vmem:[%s786 + $0x18] sm:$0xff]
        %v791 = vld [vmem:[#allocation2 + $0x1] sm:$0xff]
        %v792 = vld [vmem:[#allocation2 + $0x9] sm:$0x3]
        %s793 = scalar_lea.vmem %s3, 128
        %v794 = vld [vmem:[%s793] sm:$0xff]
        %v795 = vld [vmem:[%s793 + $0x8] sm:$0xff]
        %v796 = vld [vmem:[%s793 + $0x10] sm:$0xff]
        %v797 = vld [vmem:[%s793 + $0x18] sm:$0xff]
        %v799 = vsel %vm422, %v791, 0
        %v802 = vsel %vm422, %v792, 0
        %804 = vmatpush.msra.mxu0 0.0
        %805 = vmatpush.msra.mxu0 0.0
        %806 = vmatpush.msra.mxu0 0.0
        %807 = vmatpush.msra.mxu0 0.0
        %808 = vmatpush.msra.mxu0 0.0
        %809 = vmatpush.msra.mxu0 0.0
        %810 = vmatpush.msra.mxu0 0.0
        %811 = vmatpush.msra.mxu0 0.0
        %812 = vmatpush.msra.mxu0 0.0
        %813 = vmatpush.msra.mxu0 0.0
        %814 = vmatpush.msra.mxu0 0.0
        %815 = vmatpush.msra.mxu0 0.0
        %816 = vmatpush.msra.mxu0 %v797
        %817 = vmatpush.msra.mxu0 %v796
        %818 = vmatpush.msra.mxu0 %v795
        %819 = vmatpush.msra.mxu0 %v794
        %820 = vmatmul.f32.gmra.mxu0 %v799
        %v821 = vpop.f32.mrf.mxu0
        %v822 = vadd.f32 0.0, %v821
        %823 = vmatmul.f32.gmra.mxu0 %v802
        %v824 = vpop.f32.mrf.mxu0
        %v825 = vadd.f32 0.0, %v824
        %826 = vdwg.mxu0
        %v828 = vsel %vm422, %v784, 0
        %v831 = vsel %vm422, %v785, 0
        %833 = vmatpush.msra.mxu0 0.0
        %834 = vmatpush.msra.mxu0 0.0
        %835 = vmatpush.msra.mxu0 0.0
        %836 = vmatpush.msra.mxu0 0.0
        %837 = vmatpush.msra.mxu0 0.0
        %838 = vmatpush.msra.mxu0 0.0
        %839 = vmatpush.msra.mxu0 0.0
        %840 = vmatpush.msra.mxu0 0.0
        %841 = vmatpush.msra.mxu0 0.0
        %842 = vmatpush.msra.mxu0 0.0
        %843 = vmatpush.msra.mxu0 0.0
        %844 = vmatpush.msra.mxu0 0.0
        %845 = vmatpush.msra.mxu0 %v790
        %846 = vmatpush.msra.mxu0 %v789
        %847 = vmatpush.msra.mxu0 %v788
        %848 = vmatpush.msra.mxu0 %v787
        %849 = vmatmul.f32.gmra.mxu0 %v828
        %v850 = vpop.f32.mrf.mxu0
        %v851 = vadd.f32 %v822, %v850
        %852 = vmatmul.f32.gmra.mxu0 %v831
        %v853 = vpop.f32.mrf.mxu0
        %v854 = vadd.f32 %v825, %v853
        %855 = vdwg.mxu0
        %v856 = vld [vmem:[#allocation2 + $0x2] sm:$0xff]
        %v857 = vld [vmem:[#allocation2 + $0xa] sm:$0x3]
        %s858 = scalar_lea.vmem %s3, 160
        %v859 = vld [vmem:[%s858] sm:$0xff]
        %v860 = vld [vmem:[%s858 + $0x8] sm:$0xff]
        %v861 = vld [vmem:[%s858 + $0x10] sm:$0xff]
        %v862 = vld [vmem:[%s858 + $0x18] sm:$0xff]
        %v864 = vsel %vm422, %v856, 0
        %v867 = vsel %vm422, %v857, 0
        %869 = vmatpush.msra.mxu0 0.0
        %870 = vmatpush.msra.mxu0 0.0
        %871 = vmatpush.msra.mxu0 0.0
        %872 = vmatpush.msra.mxu0 0.0
        %873 = vmatpush.msra.mxu0 0.0
        %874 = vmatpush.msra.mxu0 0.0
        %875 = vmatpush.msra.mxu0 0.0
        %876 = vmatpush.msra.mxu0 0.0
        %877 = vmatpush.msra.mxu0 0.0
        %878 = vmatpush.msra.mxu0 0.0
        %879 = vmatpush.msra.mxu0 0.0
        %880 = vmatpush.msra.mxu0 0.0
        %881 = vmatpush.msra.mxu0 %v862
        %882 = vmatpush.msra.mxu0 %v861
        %883 = vmatpush.msra.mxu0 %v860
        %884 = vmatpush.msra.mxu0 %v859
        %885 = vmatmul.f32.gmra.mxu0 %v864
        %v886 = vpop.f32.mrf.mxu0
        %v887 = vadd.f32 0.0, %v886
        %888 = vmatmul.f32.gmra.mxu0 %v867
        %v889 = vpop.f32.mrf.mxu0
        %v890 = vadd.f32 0.0, %v889
        %891 = vdwg.mxu0
        %v892 = vadd.f32 %v851, %v887
        %v893 = vadd.f32 %v854, %v890
        %s894 = scalar_lea.vmem %s4, 1
        %v895 = vld [vmem:[%s894] sm:$0x1]
        %v897 = vperm.slane %v895, 0
        %v899 = vadd.f32 %v892, %v897
        %v900 = vadd.f32 %v893, %v897
        %v901 = vmax.f32 %v899, 0.0
        %v902 = vmax.f32 %v900, 0.0
        %v903 = vld [vmem:[%s6] sm:$0x3]
        %vm904 = vcmask 80896
        %v906 = vsel %vm904, %v903, 0
        %v909 = vsel %vm653, %v902, 0
        %911 = vmatpush.msra.mxu0 0.0
        %912 = vmatpush.msra.mxu0 0.0
        %913 = vmatpush.msra.mxu0 0.0
        %914 = vmatpush.msra.mxu0 0.0
        %915 = vmatpush.msra.mxu0 0.0
        %916 = vmatpush.msra.mxu0 0.0
        %917 = vmatpush.msra.mxu0 0.0
        %918 = vmatpush.msra.mxu0 0.0
        %919 = vmatpush.msra.mxu0 0.0
        %920 = vmatpush.msra.mxu0 0.0
        %921 = vmatpush.msra.mxu0 0.0
        %922 = vmatpush.msra.mxu0 0.0
        %923 = vmatpush.msra.mxu0 0.0
        %924 = vmatpush.msra.mxu0 0.0
        %925 = vmatpush.msra.mxu0 %v909
        %926 = vmatpush.msra.mxu0 %v901
        %927 = vmatmul.f32.gmra.mxu0 %v906
        %v928 = vpop.f32.mrf.mxu0
        %v929 = vadd.f32 0.0, %v928
        %930 = vdwg.mxu0
        %s931 = scalar_lea.vmem %s6, 2
        %v932 = vld [vmem:[%s931] sm:$0x3]
        %v934 = vsel %vm904, %v932, 0
        %936 = vmatpush.msra.mxu0 0.0
        %937 = vmatpush.msra.mxu0 0.0
        %938 = vmatpush.msra.mxu0 0.0
        %939 = vmatpush.msra.mxu0 0.0
        %940 = vmatpush.msra.mxu0 0.0
        %941 = vmatpush.msra.mxu0 0.0
        %942 = vmatpush.msra.mxu0 0.0
        %943 = vmatpush.msra.mxu0 0.0
        %944 = vmatpush.msra.mxu0 0.0
        %945 = vmatpush.msra.mxu0 0.0
        %946 = vmatpush.msra.mxu0 0.0
        %947 = vmatpush.msra.mxu0 0.0
        %948 = vmatpush.msra.mxu0 0.0
        %949 = vmatpush.msra.mxu0 0.0
        %950 = vmatpush.msra.mxu0 %v909
        %951 = vmatpush.msra.mxu0 %v901
        %952 = vmatmul.f32.gmra.mxu0 %v934
        %v953 = vpop.f32.mrf.mxu0
        %v954 = vadd.f32 0.0, %v953
        %955 = vdwg.mxu0
        %v956 = vmax.f32 %v929, %v954
        %s957 = scalar_lea.vmem %s6, 4
        %v958 = vld [vmem:[%s957] sm:$0x3]
        %v960 = vsel %vm904, %v958, 0
        %962 = vmatpush.msra.mxu0 0.0
        %963 = vmatpush.msra.mxu0 0.0
        %964 = vmatpush.msra.mxu0 0.0
        %965 = vmatpush.msra.mxu0 0.0
        %966 = vmatpush.msra.mxu0 0.0
        %967 = vmatpush.msra.mxu0 0.0
        %968 = vmatpush.msra.mxu0 0.0
        %969 = vmatpush.msra.mxu0 0.0
        %970 = vmatpush.msra.mxu0 0.0
        %971 = vmatpush.msra.mxu0 0.0
        %972 = vmatpush.msra.mxu0 0.0
        %973 = vmatpush.msra.mxu0 0.0
        %974 = vmatpush.msra.mxu0 0.0
        %975 = vmatpush.msra.mxu0 0.0
        %976 = vmatpush.msra.mxu0 %v909
        %977 = vmatpush.msra.mxu0 %v901
        %978 = vmatmul.f32.gmra.mxu0 %v960
        %v979 = vpop.f32.mrf.mxu0
        %v980 = vadd.f32 0.0, %v979
        %981 = vdwg.mxu0
        %v982 = vmax.f32 %v956, %v980
        %s983 = scalar_lea.vmem %s6, 6
        %v984 = vld [vmem:[%s983] sm:$0x3]
        %v986 = vsel %vm904, %v984, 0
        %988 = vmatpush.msra.mxu0 0.0
        %989 = vmatpush.msra.mxu0 0.0
        %990 = vmatpush.msra.mxu0 0.0
        %991 = vmatpush.msra.mxu0 0.0
        %992 = vmatpush.msra.mxu0 0.0
        %993 = vmatpush.msra.mxu0 0.0
        %994 = vmatpush.msra.mxu0 0.0
        %995 = vmatpush.msra.mxu0 0.0
        %996 = vmatpush.msra.mxu0 0.0
        %997 = vmatpush.msra.mxu0 0.0
        %998 = vmatpush.msra.mxu0 0.0
        %999 = vmatpush.msra.mxu0 0.0
        %1000 = vmatpush.msra.mxu0 0.0
        %1001 = vmatpush.msra.mxu0 0.0
        %1002 = vmatpush.msra.mxu0 %v909
        %1003 = vmatpush.msra.mxu0 %v901
        %1004 = vmatmul.f32.gmra.mxu0 %v986
        %v1005 = vpop.f32.mrf.mxu0
        %v1006 = vadd.f32 0.0, %v1005
        %1007 = vdwg.mxu0
        %v1008 = vmax.f32 %v982, %v1006
        %s1009 = scalar_lea.vmem %s6, 8
        %v1010 = vld [vmem:[%s1009] sm:$0x3]
        %v1012 = vsel %vm904, %v1010, 0
        %1014 = vmatpush.msra.mxu0 0.0
        %1015 = vmatpush.msra.mxu0 0.0
        %1016 = vmatpush.msra.mxu0 0.0
        %1017 = vmatpush.msra.mxu0 0.0
        %1018 = vmatpush.msra.mxu0 0.0
        %1019 = vmatpush.msra.mxu0 0.0
        %1020 = vmatpush.msra.mxu0 0.0
        %1021 = vmatpush.msra.mxu0 0.0
        %1022 = vmatpush.msra.mxu0 0.0
        %1023 = vmatpush.msra.mxu0 0.0
        %1024 = vmatpush.msra.mxu0 0.0
        %1025 = vmatpush.msra.mxu0 0.0
        %1026 = vmatpush.msra.mxu0 0.0
        %1027 = vmatpush.msra.mxu0 0.0
        %1028 = vmatpush.msra.mxu0 %v909
        %1029 = vmatpush.msra.mxu0 %v901
        %1030 = vmatmul.f32.gmra.mxu0 %v1012
        %v1031 = vpop.f32.mrf.mxu0
        %v1032 = vadd.f32 0.0, %v1031
        %1033 = vdwg.mxu0
        %v1034 = vmax.f32 %v1008, %v1032
        %1035 = vst.msk [vmem:[#allocation2] sm:$0xf] %vm428, 0.0
        %vm1036 = vcmask 254976
        %1037 = vst.msk [vmem:[#allocation2 + $0x1] sm:$0x3] %vm1036, %v1034
        %v1038 = vld [vmem:[#allocation2] sm:$0x3]
        %s1039 = scalar_lea.vmem %s3, 192
        %v1040 = vld [vmem:[%s1039] sm:$0xff]
        %v1041 = vld [vmem:[%s1039 + $0x8] sm:$0xff]
        %v1042 = vld [vmem:[%s1039 + $0x10] sm:$0xff]
        %v1043 = vld [vmem:[%s1039 + $0x18] sm:$0xff]
        %v1044 = vld [vmem:[#allocation2 + $0x1] sm:$0x3]
        %s1045 = scalar_lea.vmem %s3, 224
        %v1046 = vld [vmem:[%s1045] sm:$0xff]
        %v1047 = vld [vmem:[%s1045 + $0x8] sm:$0xff]
        %v1048 = vld [vmem:[%s1045 + $0x10] sm:$0xff]
        %v1049 = vld [vmem:[%s1045 + $0x18] sm:$0xff]
        %v1051 = vsel %vm422, %v1044, 0
        %1053 = vmatpush.msra.mxu0 0.0
        %1054 = vmatpush.msra.mxu0 0.0
        %1055 = vmatpush.msra.mxu0 0.0
        %1056 = vmatpush.msra.mxu0 0.0
        %1057 = vmatpush.msra.mxu0 0.0
        %1058 = vmatpush.msra.mxu0 0.0
        %1059 = vmatpush.msra.mxu0 0.0
        %1060 = vmatpush.msra.mxu0 0.0
        %1061 = vmatpush.msra.mxu0 0.0
        %1062 = vmatpush.msra.mxu0 0.0
        %1063 = vmatpush.msra.mxu0 0.0
        %1064 = vmatpush.msra.mxu0 0.0
        %1065 = vmatpush.msra.mxu0 %v1049
        %1066 = vmatpush.msra.mxu0 %v1048
        %1067 = vmatpush.msra.mxu0 %v1047
        %1068 = vmatpush.msra.mxu0 %v1046
        %1069 = vmatmul.f32.gmra.mxu0 %v1051
        %v1070 = vpop.f32.mrf.mxu0
        %v1071 = vadd.f32 0.0, %v1070
        %1072 = vdwg.mxu0
        %v1074 = vsel %vm422, %v1038, 0
        %1076 = vmatpush.msra.mxu0 0.0
        %1077 = vmatpush.msra.mxu0 0.0
        %1078 = vmatpush.msra.mxu0 0.0
        %1079 = vmatpush.msra.mxu0 0.0
        %1080 = vmatpush.msra.mxu0 0.0
        %1081 = vmatpush.msra.mxu0 0.0
        %1082 = vmatpush.msra.mxu0 0.0
        %1083 = vmatpush.msra.mxu0 0.0
        %1084 = vmatpush.msra.mxu0 0.0
        %1085 = vmatpush.msra.mxu0 0.0
        %1086 = vmatpush.msra.mxu0 0.0
        %1087 = vmatpush.msra.mxu0 0.0
        %1088 = vmatpush.msra.mxu0 %v1043
        %1089 = vmatpush.msra.mxu0 %v1042
        %1090 = vmatpush.msra.mxu0 %v1041
        %1091 = vmatpush.msra.mxu0 %v1040
        %1092 = vmatmul.f32.gmra.mxu0 %v1074
        %v1093 = vpop.f32.mrf.mxu0
        %v1094 = vadd.f32 %v1071, %v1093
        %1095 = vdwg.mxu0
        %v1096 = vld [vmem:[#allocation2 + $0x2] sm:$0x3]
        %s1097 = scalar_lea.vmem %s3, 256
        %v1098 = vld [vmem:[%s1097] sm:$0xff]
        %v1099 = vld [vmem:[%s1097 + $0x8] sm:$0xff]
        %v1100 = vld [vmem:[%s1097 + $0x10] sm:$0xff]
        %v1101 = vld [vmem:[%s1097 + $0x18] sm:$0xff]
        %v1103 = vsel %vm422, %v1096, 0
        %1105 = vmatpush.msra.mxu0 0.0
        %1106 = vmatpush.msra.mxu0 0.0
        %1107 = vmatpush.msra.mxu0 0.0
        %1108 = vmatpush.msra.mxu0 0.0
        %1109 = vmatpush.msra.mxu0 0.0
        %1110 = vmatpush.msra.mxu0 0.0
        %1111 = vmatpush.msra.mxu0 0.0
        %1112 = vmatpush.msra.mxu0 0.0
        %1113 = vmatpush.msra.mxu0 0.0
        %1114 = vmatpush.msra.mxu0 0.0
        %1115 = vmatpush.msra.mxu0 0.0
        %1116 = vmatpush.msra.mxu0 0.0
        %1117 = vmatpush.msra.mxu0 %v1101
        %1118 = vmatpush.msra.mxu0 %v1100
        %1119 = vmatpush.msra.mxu0 %v1099
        %1120 = vmatpush.msra.mxu0 %v1098
        %1121 = vmatmul.f32.gmra.mxu0 %v1103
        %v1122 = vpop.f32.mrf.mxu0
        %v1123 = vadd.f32 0.0, %v1122
        %1124 = vdwg.mxu0
        %v1125 = vadd.f32 %v1094, %v1123
        %s1126 = scalar_lea.vmem %s4, 2
        %v1127 = vld [vmem:[%s1126] sm:$0x1]
        %v1129 = vperm.slane %v1127, 0
        %v1131 = vadd.f32 %v1125, %v1129
        %v1132 = vmax.f32 %v1131, 0.0
        %v1133 = vsel %vm1036, %v1132, -inf
        %v1134 = vrot.slane %v1133, 4
        %v1135 = vmax.f32 %v1133, %v1134
        %v1136 = vrot.slane %v1135, 2
        %v1137 = vmax.f32 %v1135, %v1136
        %v1138 = vrot.slane %v1137, 1
        %v1139 = vmax.f32 %v1137, %v1138
        %v1140 = vadd.f32 %v1139, 0.0
        %v1141 = vld [vmem:[%s8] sm:$0xff]
        %v1142 = vld [vmem:[%s8 + $0x8] sm:$0xff]
        %v1143 = vld [vmem:[%s8 + $0x10] sm:$0xff]
        %v1144 = vld [vmem:[%s8 + $0x18] sm:$0xff]
        %v1145 = vld [vmem:[%s9] sm:$0x1]
        %v1147 = vsel %vm422, %v1140, 0
        %1149 = vmatpush.msra.mxu0 0.0
        %1150 = vmatpush.msra.mxu0 0.0
        %1151 = vmatpush.msra.mxu0 0.0
        %1152 = vmatpush.msra.mxu0 0.0
        %1153 = vmatpush.msra.mxu0 0.0
        %1154 = vmatpush.msra.mxu0 0.0
        %1155 = vmatpush.msra.mxu0 0.0
        %1156 = vmatpush.msra.mxu0 0.0
        %1157 = vmatpush.msra.mxu0 0.0
        %1158 = vmatpush.msra.mxu0 0.0
        %1159 = vmatpush.msra.mxu0 0.0
        %1160 = vmatpush.msra.mxu0 0.0
        %1161 = vmatpush.msra.mxu0 %v1144
        %1162 = vmatpush.msra.mxu0 %v1143
        %1163 = vmatpush.msra.mxu0 %v1142
        %1164 = vmatpush.msra.mxu0 %v1141
        %1165 = vmatmul.f32.gmra.mxu0 %v1147
        %v1166 = vpop.f32.mrf.mxu0
        %v1167 = vadd.f32 %v1145, %v1166
        %1168 = vdwg.mxu0
        %v1169 = vxor.u32 %v1167, 2147483648
        %v1170 = vmul.f32 %v1169, 1.442695
        %v1171 = vpow.pop %v1170
        %v1172 = vadd.f32 %v1171, 1.0
        %v1173 = vrcp.pop %v1172
        %v1174 = vmul.f32 %v1172, %v1173
        %v1175 = vsub.f32 1.0, %v1174
        %v1176 = vmul.f32 %v1173, %v1175
        %v1177 = vadd.f32 %v1173, %v1176
        %vm1178 = vweird.f32 %v1172
        %vm1179 = vweird.f32 %v1173
        %vm1180 = vmor %vm1178, %vm1179
        %v1181 = vsel %vm1180, %v1173, %v1177
        %v1182 = vand.u32 2147483647, %v1172
        %vm1183 = vcmp.eq.f32.partialorder %v1182, 8.507059e+37
        %v1184 = vand.u32 %v1172, 2147483648
        %v1185 = vor.u32 1.1754944e-38, %v1184
        %v1186 = vsel %vm1183, %v1185, %v1181
        %v1187 = vmul.f32 1.0, %v1186
        %vm1188 = vcmask 106496
        %1189 = vst.msk [vmem:[%s351] sm:$0x1] %vm1188, %v1187
        %s1190 = sand.u32 %s247, 1
        %s1191 = scalar_lea.sflag [#allocation4], %s1190
        %s1192 = sand.u32 %s247, 1
        %s1193 = scalar_lea.vmem [#allocation3], %s1192
        // Predicated region
        $region61: #{trancnn_forward.7} parent=59 // pred_check
          %p1194 = pneg %p257
        $region62: #{trancnn_forward.7} parent=59 // pred_check_branch
          %1196 = sbr.rel (%p1194) target = $region64
        $region63: #{trancnn_forward.7} parent=59 // pred_region
          %1198 = vsyncadd %s1191, 0
          %s1199 = scalar_lea.hbm %s10, %s24
          %s1201 = sshll.u32 %s1193, 4
          %s1202 = int_to_ptr.vmem [resolvable:$true] %s1201
          %s1203 = sshll.u32 %s1199, 4
          %s1204 = int_to_ptr.hbm [resolvable:$true] %s1203
          %1206 = dma.vmem_to_hbm [thread:$0]  %s1202, 16, %s1204, %s1191
        $region64: #{trancnn_forward.7} parent=59 // pred_fallthru
          _
      $region60: #{trancnn_forward.7} parent=5 // pred_fallthru
        _
      %p1207 = scmp.le.s32.totalorder 2, %s19
      // Predicated region
      $region65: #{trancnn_forward.7} parent=5 // pred_check
        %p1208 = pneg %p1207
      $region66: #{trancnn_forward.7} parent=5 // pred_check_branch
        %1210 = sbr.rel (%p1208) target = $region68
      $region67: #{trancnn_forward.7} parent=5 // pred_region
        %s1211 = ssub.s32 %s19, 2
        // Predicated region
        $region69: #{trancnn_forward.7} parent=67 // pred_check
          %p1212 = pneg %p263
        $region70: #{trancnn_forward.7} parent=67 // pred_check_branch
          %1214 = sbr.rel (%p1212) target = $region72
        $region71: #{trancnn_forward.7} parent=67 // pred_region
          %s1215 = sand.u32 %s248, 1
          %s1216 = scalar_lea.sflag [#allocation4], %s1215
          %s1217 = sand.u32 %s248, 1
          %s1218 = scalar_lea.vmem [#allocation3], %s1217
          %1220 = dma.done %s1216, 16
        $region72: #{trancnn_forward.7} parent=67 // pred_fallthru
          _
      $region68: #{trancnn_forward.7} parent=5 // pred_fallthru
        _
    $region6: #{trancnn_forward.7} parent=1 // loop_footer
      %s23 = sadd.s32 1, %s19
    $region7: #{trancnn_forward.7} parent=1 // loop_footer_branch
      %18 = sbr.rel target = $region3
    $region8: #{trancnn_forward.7} parent=1 // loop_exit
      _
    %1221 = vsyncpa [#allocation4], 1
    %s1222 = scalar_lea.sflag [#allocation4], 1
    %1223 = vsyncpa %s1222, 1

</llo_original>
